<compile_context>
chip_gen: v6e
topology: v6e:2x2x1
jax: 0.10.0
libtpu: 0.0.40
codegen_flags: <defaults>
</compile_context>

<pallas_src>
import jax
import jax.numpy as jnp
from jax.experimental import pallas as pl
from jax.experimental.pallas import tpu as pltpu


def rnn_kernel(gin1_ref,   # (T, B, 4H)  precomputed  x_t @ W_ih1 + b1
               whh1_ref,   # (H, 4H)
               w2_ref,     # (2H, 4H)    fused [W_ih2; W_hh2]
               b2_ref,     # (1, 4H)
               wfc_ref,    # (H, Npad)   fc weight, class dim padded to 128
               bfc_ref,    # (1, Npad)   fc bias, padded lanes = -1e30
               out_ref):   # (T, B, Npad)
    """All T timesteps in one invocation; h/c carried as loop values (kept in vregs/VMEM)."""
    T, B, _ = gin1_ref.shape
    H = whh1_ref.shape[0]

    whh1 = whh1_ref[...]
    w2 = w2_ref[...]
    b2 = b2_ref[...]
    wfc = wfc_ref[...]
    bfc = bfc_ref[...]

    def gates_to_hc(g, c):
        # PyTorch gate order [i, f, g, o]
        i = jax.nn.sigmoid(g[:, 0 * H:1 * H])
        f = jax.nn.sigmoid(g[:, 1 * H:2 * H])
        gg = jnp.tanh(g[:, 2 * H:3 * H])
        o = jax.nn.sigmoid(g[:, 3 * H:4 * H])
        c_new = f * c + i * gg
        h_new = o * jnp.tanh(c_new)
        return h_new, c_new

    def step(t, carry):
        h1, c1, h2, c2 = carry

        # Layer 1: input projection already precomputed; only the recurrent matmul here.
        g1 = gin1_ref[t] + jnp.dot(h1, whh1, preferred_element_type=jnp.float32)
        h1, c1 = gates_to_hc(g1, c1)
        # TODO(synk): inter-layer dropout (p=0.5) is only active in train mode; this is the eval forward.

        # Layer 2: fused [x|h] @ [W_ih; W_hh] (single MXU push per step).
        xh = jnp.concatenate([h1, h2], axis=-1)                       # (B, 2H)
        g2 = jnp.dot(xh, w2, preferred_element_type=jnp.float32) + b2
        h2, c2 = gates_to_hc(g2, c2)

        # fc_2 then Softmax over the class dim; padded lanes carry -1e30 bias -> exp == 0.
        logits = jnp.dot(h2, wfc, preferred_element_type=jnp.float32) + bfc
        m = jnp.max(logits, axis=-1, keepdims=True)
        e = jnp.exp(logits - m)
        # NOTE: pl.reciprocal(approx=True) would move the divide to the EUP but breaks the 1e-5 check.
        out_ref[t] = e / jnp.sum(e, axis=-1, keepdims=True)
        return (h1, c1, h2, c2)

    # hidden=None in the PyTorch forward -> zero initial (h, c) for both layers.
    z = jnp.zeros((B, H), jnp.float32)
    jax.lax.fori_loop(0, T, step, (z, z, z, z), unroll=True)


@jax.jit
def rnn_forward(x, params):
    """x: (T, B, D_in) float32. Returns (T*B, 11) float32."""
    T, B, D = x.shape
    H = params["whh1"].shape[0]
    n_cls = params["wfc"].shape[1]
    n_pad = max(128, pl.cdiv(n_cls, 128) * 128)

    # Hoist the layer-1 input projection out of the recurrence: one (T*B, D) @ (D, 4H) matmul (XLA/MXU).
    gin1 = (x.reshape(T * B, D) @ params["wih1"] + params["b1"]).reshape(T, B, 4 * H)

    # Fuse layer-2 input/hidden weights into one (2H, 4H) matrix.
    w2 = jnp.concatenate([params["wih2"], params["whh2"]], axis=0)

    # Pad class dim to 128 lanes (lane-dense stores). Padded bias = -1e30 so softmax ignores those lanes.
    wfc_pad = jnp.zeros((H, n_pad), jnp.float32).at[:, :n_cls].set(params["wfc"])
    bfc_pad = jnp.full((1, n_pad), -1e30, jnp.float32).at[:, :n_cls].set(params["bfc"])

    vmem = pl.BlockSpec(memory_space=pltpu.MemorySpace.VMEM)
    out = pl.pallas_call(
        rnn_kernel,
        out_shape=jax.ShapeDtypeStruct((T, B, n_pad), jnp.float32),
        in_specs=[vmem] * 6,
        out_specs=vmem,
    )(gin1, params["whh1"], w2, params["b2"], wfc_pad, bfc_pad)

    # torch.cat of T tensors of shape (B, 11) along dim 0 == reshape (T, B, 11) -> (T*B, 11)
    return out.reshape(T * B, n_pad)[:, :n_cls]


def make_params(key, input_size, hidden_size, n_classes=11):
    """Deterministic PyTorch-style init (uniform +/- 1/sqrt(H)); weights pre-transposed for x @ W."""
    H = hidden_size
    k = 1.0 / jnp.sqrt(jnp.float32(H))
    keys = jax.random.split(key, 10)

    def u(kk, shape):
        return jax.random.uniform(kk, shape, jnp.float32, -k, k)

    return {
        "wih1": u(keys[0], (input_size, 4 * H)),
        "whh1": u(keys[1], (H, 4 * H)),
        "b1":   u(keys[2], (1, 4 * H)) + u(keys[3], (1, 4 * H)),  # b_ih + b_hh
        "wih2": u(keys[4], (H, 4 * H)),
        "whh2": u(keys[5], (H, 4 * H)),
        "b2":   u(keys[6], (1, 4 * H)) + u(keys[7], (1, 4 * H)),
        "wfc":  u(keys[8], (H, n_classes)),
        "bfc":  u(keys[9], (1, n_classes)),
    }


def rnn_reference(x, params):
    """Pure-JAX reference of the same forward, for correctness checking."""
    T, B, D = x.shape
    H = params["whh1"].shape[0]

    def cell(x_t, h, c, wih, whh, b):
        gates = x_t @ wih + h @ whh + b
        i = jax.nn.sigmoid(gates[:, 0 * H:1 * H])
        f = jax.nn.sigmoid(gates[:, 1 * H:2 * H])
        g = jnp.tanh(gates[:, 2 * H:3 * H])
        o = jax.nn.sigmoid(gates[:, 3 * H:4 * H])
        c_new = f * c + i * g
        return o * jnp.tanh(c_new), c_new

    def step(carry, x_t):
        h1, c1, h2, c2 = carry
        h1, c1 = cell(x_t, h1, c1, params["wih1"], params["whh1"], params["b1"])
        h2, c2 = cell(h1, h2, c2, params["wih2"], params["whh2"], params["b2"])
        logits = h2 @ params["wfc"] + params["bfc"]
        return (h1, c1, h2, c2), jax.nn.softmax(logits, axis=1)

    z = jnp.zeros((B, H), jnp.float32)
    _, outs = jax.lax.scan(step, (z, z, z, z), x)
    return outs.reshape(T * B, -1)


if __name__ == "__main__":
    T, B, D_IN, H, N_CLS = 8, 2, 64, 128, 11

    key = jax.random.PRNGKey(0)
    kx, kp = jax.random.split(key)
    x = jax.random.normal(kx, (T, B, D_IN), jnp.float32)
    params = make_params(kp, D_IN, H, N_CLS)

    out = rnn_forward(x, params)
    out = jax.block_until_ready(out)

    ref = jax.block_until_ready(rnn_reference(x, params))
    assert out.shape == (T * B, N_CLS), out.shape
    assert jnp.allclose(out, ref, atol=1e-5, rtol=1e-5), "mismatch vs pure-JAX reference"
    assert jnp.allclose(jnp.sum(out, axis=1), 1.0, atol=1e-5), "softmax rows must sum to 1"

    print("KERNEL_OK")
</pallas_src>

<mosaic_0001>
module attributes {stable_mosaic.version = 11 : i64} {
  func.func @rnn_kernel(%arg0: memref<8x2x512xf32, #tpu.memory_space<vmem>>, %arg1: memref<128x512xf32, #tpu.memory_space<vmem>>, %arg2: memref<256x512xf32, #tpu.memory_space<vmem>>, %arg3: memref<1x512xf32, #tpu.memory_space<vmem>>, %arg4: memref<128x128xf32, #tpu.memory_space<vmem>>, %arg5: memref<1x128xf32, #tpu.memory_space<vmem>>, %arg6: memref<8x2x128xf32, #tpu.memory_space<vmem>>) attributes {dimension_semantics = [], scalar_prefetch = 0 : i64, scratch_operands = 0 : i64, tpu.core_type = #tpu.core_type<tc>} {
    %c0 = arith.constant 0 : index
    %c0_0 = arith.constant 0 : index
    %0 = vector.load %arg1[%c0, %c0_0] : memref<128x512xf32, #tpu.memory_space<vmem>>, vector<128x512xf32>
    %c0_1 = arith.constant 0 : index
    %c0_2 = arith.constant 0 : index
    %1 = vector.load %arg2[%c0_1, %c0_2] : memref<256x512xf32, #tpu.memory_space<vmem>>, vector<256x512xf32>
    %c0_3 = arith.constant 0 : index
    %c0_4 = arith.constant 0 : index
    %2 = vector.load %arg3[%c0_3, %c0_4] : memref<1x512xf32, #tpu.memory_space<vmem>>, vector<1x512xf32>
    %c0_5 = arith.constant 0 : index
    %c0_6 = arith.constant 0 : index
    %3 = vector.load %arg4[%c0_5, %c0_6] : memref<128x128xf32, #tpu.memory_space<vmem>>, vector<128x128xf32>
    %c0_7 = arith.constant 0 : index
    %c0_8 = arith.constant 0 : index
    %4 = vector.load %arg5[%c0_7, %c0_8] : memref<1x128xf32, #tpu.memory_space<vmem>>, vector<1x128xf32>
    %cst = arith.constant 0.000000e+00 : f32
    %5 = vector.broadcast %cst : f32 to vector<2x128xf32>
    %c0_i32 = arith.constant 0 : i32
    %6 = arith.index_cast %c0_i32 : i32 to index
    %c0_9 = arith.constant 0 : index
    %c0_10 = arith.constant 0 : index
    %7 = vector.load %arg0[%6, %c0_9, %c0_10] : memref<8x2x512xf32, #tpu.memory_space<vmem>>, vector<1x2x512xf32>
    %8 = vector.shape_cast %7 : vector<1x2x512xf32> to vector<2x512xf32>
    %cst_11 = arith.constant dense<0.000000e+00> : vector<2x512xf32>
    %9 = tpu.matmul %5, %0, %cst_11 {dimension_numbers = #tpu.dot_dimension_numbers<[1], [0], [0], [1], [0, 0, 1, 1], [], []>} : vector<2x128xf32>, vector<128x512xf32>, vector<2x512xf32> -> vector<2x512xf32>
    %10 = arith.addf %8, %9 : vector<2x512xf32>
    %11 = vector.extract_strided_slice %10 {offsets = [0, 0], sizes = [2, 128], strides = [1, 1]} : vector<2x512xf32> to vector<2x128xf32>
    %12 = arith.negf %11 : vector<2x128xf32>
    %13 = math.exp %12 : vector<2x128xf32>
    %cst_12 = arith.constant 1.000000e+00 : f32
    %14 = vector.broadcast %cst_12 : f32 to vector<2x128xf32>
    %15 = arith.addf %14, %13 : vector<2x128xf32>
    %16 = arith.divf %14, %15 : vector<2x128xf32>
    %17 = vector.extract_strided_slice %10 {offsets = [0, 128], sizes = [2, 128], strides = [1, 1]} : vector<2x512xf32> to vector<2x128xf32>
    %18 = arith.negf %17 : vector<2x128xf32>
    %19 = math.exp %18 : vector<2x128xf32>
    %cst_13 = arith.constant 1.000000e+00 : f32
    %20 = vector.broadcast %cst_13 : f32 to vector<2x128xf32>
    %21 = arith.addf %20, %19 : vector<2x128xf32>
    %22 = arith.divf %20, %21 : vector<2x128xf32>
    %23 = vector.extract_strided_slice %10 {offsets = [0, 256], sizes = [2, 128], strides = [1, 1]} : vector<2x512xf32> to vector<2x128xf32>
    %24 = math.tanh %23 : vector<2x128xf32>
    %25 = vector.extract_strided_slice %10 {offsets = [0, 384], sizes = [2, 128], strides = [1, 1]} : vector<2x512xf32> to vector<2x128xf32>
    %26 = arith.negf %25 : vector<2x128xf32>
    %27 = math.exp %26 : vector<2x128xf32>
    %cst_14 = arith.constant 1.000000e+00 : f32
    %28 = vector.broadcast %cst_14 : f32 to vector<2x128xf32>
    %29 = arith.addf %28, %27 : vector<2x128xf32>
    %30 = arith.divf %28, %29 : vector<2x128xf32>
    %31 = arith.mulf %22, %5 : vector<2x128xf32>
    %32 = arith.mulf %16, %24 : vector<2x128xf32>
    %33 = arith.addf %31, %32 : vector<2x128xf32>
    %34 = math.tanh %33 : vector<2x128xf32>
    %35 = arith.mulf %30, %34 : vector<2x128xf32>
    %36 = tpu.concatenate %35, %5 in 1 : vector<2x128xf32>, vector<2x128xf32> -> vector<2x256xf32>
    %cst_15 = arith.constant dense<0.000000e+00> : vector<2x512xf32>
    %37 = tpu.matmul %36, %1, %cst_15 {dimension_numbers = #tpu.dot_dimension_numbers<[1], [0], [0], [1], [0, 0, 1, 1], [], []>} : vector<2x256xf32>, vector<256x512xf32>, vector<2x512xf32> -> vector<2x512xf32>
    %38 = vector.broadcast %2 : vector<1x512xf32> to vector<2x512xf32>
    %39 = arith.addf %37, %38 : vector<2x512xf32>
    %40 = vector.extract_strided_slice %39 {offsets = [0, 0], sizes = [2, 128], strides = [1, 1]} : vector<2x512xf32> to vector<2x128xf32>
    %41 = arith.negf %40 : vector<2x128xf32>
    %42 = math.exp %41 : vector<2x128xf32>
    %cst_16 = arith.constant 1.000000e+00 : f32
    %43 = vector.broadcast %cst_16 : f32 to vector<2x128xf32>
    %44 = arith.addf %43, %42 : vector<2x128xf32>
    %45 = arith.divf %43, %44 : vector<2x128xf32>
    %46 = vector.extract_strided_slice %39 {offsets = [0, 128], sizes = [2, 128], strides = [1, 1]} : vector<2x512xf32> to vector<2x128xf32>
    %47 = arith.negf %46 : vector<2x128xf32>
    %48 = math.exp %47 : vector<2x128xf32>
    %cst_17 = arith.constant 1.000000e+00 : f32
    %49 = vector.broadcast %cst_17 : f32 to vector<2x128xf32>
    %50 = arith.addf %49, %48 : vector<2x128xf32>
    %51 = arith.divf %49, %50 : vector<2x128xf32>
    %52 = vector.extract_strided_slice %39 {offsets = [0, 256], sizes = [2, 128], strides = [1, 1]} : vector<2x512xf32> to vector<2x128xf32>
    %53 = math.tanh %52 : vector<2x128xf32>
    %54 = vector.extract_strided_slice %39 {offsets = [0, 384], sizes = [2, 128], strides = [1, 1]} : vector<2x512xf32> to vector<2x128xf32>
    %55 = arith.negf %54 : vector<2x128xf32>
    %56 = math.exp %55 : vector<2x128xf32>
    %cst_18 = arith.constant 1.000000e+00 : f32
    %57 = vector.broadcast %cst_18 : f32 to vector<2x128xf32>
    %58 = arith.addf %57, %56 : vector<2x128xf32>
    %59 = arith.divf %57, %58 : vector<2x128xf32>
    %60 = arith.mulf %51, %5 : vector<2x128xf32>
    %61 = arith.mulf %45, %53 : vector<2x128xf32>
    %62 = arith.addf %60, %61 : vector<2x128xf32>
    %63 = math.tanh %62 : vector<2x128xf32>
    %64 = arith.mulf %59, %63 : vector<2x128xf32>
    %cst_19 = arith.constant dense<0.000000e+00> : vector<2x128xf32>
    %65 = tpu.matmul %64, %3, %cst_19 {dimension_numbers = #tpu.dot_dimension_numbers<[1], [0], [0], [1], [0, 0, 1, 1], [], []>} : vector<2x128xf32>, vector<128x128xf32>, vector<2x128xf32> -> vector<2x128xf32>
    %66 = vector.broadcast %4 : vector<1x128xf32> to vector<2x128xf32>
    %67 = arith.addf %65, %66 : vector<2x128xf32>
    %cst_20 = arith.constant dense<0xFF800000> : vector<2xf32>
    %68 = vector.multi_reduction <maximumf>, %67, %cst_20 [1] : vector<2x128xf32> to vector<2xf32>
    %69 = vector.shape_cast %68 : vector<2xf32> to vector<2x1xf32>
    %70 = vector.broadcast %69 : vector<2x1xf32> to vector<2x128xf32>
    %71 = arith.subf %67, %70 : vector<2x128xf32>
    %72 = math.exp %71 : vector<2x128xf32>
    %cst_21 = arith.constant dense<0.000000e+00> : vector<2xf32>
    %73 = vector.multi_reduction <add>, %72, %cst_21 [1] : vector<2x128xf32> to vector<2xf32>
    %74 = vector.shape_cast %73 : vector<2xf32> to vector<2x1xf32>
    %75 = vector.broadcast %74 : vector<2x1xf32> to vector<2x128xf32>
    %76 = arith.divf %72, %75 : vector<2x128xf32>
    %77 = arith.index_cast %c0_i32 : i32 to index
    %c0_22 = arith.constant 0 : index
    %c0_23 = arith.constant 0 : index
    %78 = vector.load %arg6[%77, %c0_22, %c0_23] : memref<8x2x128xf32, #tpu.memory_space<vmem>>, vector<1x2x128xf32>
    %79 = vector.shape_cast %78 : vector<1x2x128xf32> to vector<2x128xf32>
    %80 = vector.shape_cast %76 : vector<2x128xf32> to vector<1x2x128xf32>
    tpu.vector_store %arg6[%77, %c0_22, %c0_23], %80 {strides = array<i32>} : memref<8x2x128xf32, #tpu.memory_space<vmem>>, vector<1x2x128xf32>,
    %c1_i32 = arith.constant 1 : i32
    %81 = arith.index_cast %c1_i32 : i32 to index
    %c0_24 = arith.constant 0 : index
    %c0_25 = arith.constant 0 : index
    %82 = vector.load %arg0[%81, %c0_24, %c0_25] : memref<8x2x512xf32, #tpu.memory_space<vmem>>, vector<1x2x512xf32>
    %83 = vector.shape_cast %82 : vector<1x2x512xf32> to vector<2x512xf32>
    %cst_26 = arith.constant dense<0.000000e+00> : vector<2x512xf32>
    %84 = tpu.matmul %35, %0, %cst_26 {dimension_numbers = #tpu.dot_dimension_numbers<[1], [0], [0], [1], [0, 0, 1, 1], [], []>} : vector<2x128xf32>, vector<128x512xf32>, vector<2x512xf32> -> vector<2x512xf32>
    %85 = arith.addf %83, %84 : vector<2x512xf32>
    %86 = vector.extract_strided_slice %85 {offsets = [0, 0], sizes = [2, 128], strides = [1, 1]} : vector<2x512xf32> to vector<2x128xf32>
    %87 = arith.negf %86 : vector<2x128xf32>
    %88 = math.exp %87 : vector<2x128xf32>
    %cst_27 = arith.constant 1.000000e+00 : f32
    %89 = vector.broadcast %cst_27 : f32 to vector<2x128xf32>
    %90 = arith.addf %89, %88 : vector<2x128xf32>
    %91 = arith.divf %89, %90 : vector<2x128xf32>
    %92 = vector.extract_strided_slice %85 {offsets = [0, 128], sizes = [2, 128], strides = [1, 1]} : vector<2x512xf32> to vector<2x128xf32>
    %93 = arith.negf %92 : vector<2x128xf32>
    %94 = math.exp %93 : vector<2x128xf32>
    %cst_28 = arith.constant 1.000000e+00 : f32
    %95 = vector.broadcast %cst_28 : f32 to vector<2x128xf32>
    %96 = arith.addf %95, %94 : vector<2x128xf32>
    %97 = arith.divf %95, %96 : vector<2x128xf32>
    %98 = vector.extract_strided_slice %85 {offsets = [0, 256], sizes = [2, 128], strides = [1, 1]} : vector<2x512xf32> to vector<2x128xf32>
    %99 = math.tanh %98 : vector<2x128xf32>
    %100 = vector.extract_strided_slice %85 {offsets = [0, 384], sizes = [2, 128], strides = [1, 1]} : vector<2x512xf32> to vector<2x128xf32>
    %101 = arith.negf %100 : vector<2x128xf32>
    %102 = math.exp %101 : vector<2x128xf32>
    %cst_29 = arith.constant 1.000000e+00 : f32
    %103 = vector.broadcast %cst_29 : f32 to vector<2x128xf32>
    %104 = arith.addf %103, %102 : vector<2x128xf32>
    %105 = arith.divf %103, %104 : vector<2x128xf32>
    %106 = arith.mulf %97, %33 : vector<2x128xf32>
    %107 = arith.mulf %91, %99 : vector<2x128xf32>
    %108 = arith.addf %106, %107 : vector<2x128xf32>
    %109 = math.tanh %108 : vector<2x128xf32>
    %110 = arith.mulf %105, %109 : vector<2x128xf32>
    %111 = tpu.concatenate %110, %64 in 1 : vector<2x128xf32>, vector<2x128xf32> -> vector<2x256xf32>
    %cst_30 = arith.constant dense<0.000000e+00> : vector<2x512xf32>
    %112 = tpu.matmul %111, %1, %cst_30 {dimension_numbers = #tpu.dot_dimension_numbers<[1], [0], [0], [1], [0, 0, 1, 1], [], []>} : vector<2x256xf32>, vector<256x512xf32>, vector<2x512xf32> -> vector<2x512xf32>
    %113 = vector.broadcast %2 : vector<1x512xf32> to vector<2x512xf32>
    %114 = arith.addf %112, %113 : vector<2x512xf32>
    %115 = vector.extract_strided_slice %114 {offsets = [0, 0], sizes = [2, 128], strides = [1, 1]} : vector<2x512xf32> to vector<2x128xf32>
    %116 = arith.negf %115 : vector<2x128xf32>
    %117 = math.exp %116 : vector<2x128xf32>
    %cst_31 = arith.constant 1.000000e+00 : f32
    %118 = vector.broadcast %cst_31 : f32 to vector<2x128xf32>
    %119 = arith.addf %118, %117 : vector<2x128xf32>
    %120 = arith.divf %118, %119 : vector<2x128xf32>
    %121 = vector.extract_strided_slice %114 {offsets = [0, 128], sizes = [2, 128], strides = [1, 1]} : vector<2x512xf32> to vector<2x128xf32>
    %122 = arith.negf %121 : vector<2x128xf32>
    %123 = math.exp %122 : vector<2x128xf32>
    %cst_32 = arith.constant 1.000000e+00 : f32
    %124 = vector.broadcast %cst_32 : f32 to vector<2x128xf32>
    %125 = arith.addf %124, %123 : vector<2x128xf32>
    %126 = arith.divf %124, %125 : vector<2x128xf32>
    %127 = vector.extract_strided_slice %114 {offsets = [0, 256], sizes = [2, 128], strides = [1, 1]} : vector<2x512xf32> to vector<2x128xf32>
    %128 = math.tanh %127 : vector<2x128xf32>
    %129 = vector.extract_strided_slice %114 {offsets = [0, 384], sizes = [2, 128], strides = [1, 1]} : vector<2x512xf32> to vector<2x128xf32>
    %130 = arith.negf %129 : vector<2x128xf32>
    %131 = math.exp %130 : vector<2x128xf32>
    %cst_33 = arith.constant 1.000000e+00 : f32
    %132 = vector.broadcast %cst_33 : f32 to vector<2x128xf32>
    %133 = arith.addf %132, %131 : vector<2x128xf32>
    %134 = arith.divf %132, %133 : vector<2x128xf32>
    %135 = arith.mulf %126, %62 : vector<2x128xf32>
    %136 = arith.mulf %120, %128 : vector<2x128xf32>
    %137 = arith.addf %135, %136 : vector<2x128xf32>
    %138 = math.tanh %137 : vector<2x128xf32>
    %139 = arith.mulf %134, %138 : vector<2x128xf32>
    %cst_34 = arith.constant dense<0.000000e+00> : vector<2x128xf32>
    %140 = tpu.matmul %139, %3, %cst_34 {dimension_numbers = #tpu.dot_dimension_numbers<[1], [0], [0], [1], [0, 0, 1, 1], [], []>} : vector<2x128xf32>, vector<128x128xf32>, vector<2x128xf32> -> vector<2x128xf32>
    %141 = vector.broadcast %4 : vector<1x128xf32> to vector<2x128xf32>
    %142 = arith.addf %140, %141 : vector<2x128xf32>
    %cst_35 = arith.constant dense<0xFF800000> : vector<2xf32>
    %143 = vector.multi_reduction <maximumf>, %142, %cst_35 [1] : vector<2x128xf32> to vector<2xf32>
    %144 = vector.shape_cast %143 : vector<2xf32> to vector<2x1xf32>
    %145 = vector.broadcast %144 : vector<2x1xf32> to vector<2x128xf32>
    %146 = arith.subf %142, %145 : vector<2x128xf32>
    %147 = math.exp %146 : vector<2x128xf32>
    %cst_36 = arith.constant dense<0.000000e+00> : vector<2xf32>
    %148 = vector.multi_reduction <add>, %147, %cst_36 [1] : vector<2x128xf32> to vector<2xf32>
    %149 = vector.shape_cast %148 : vector<2xf32> to vector<2x1xf32>
    %150 = vector.broadcast %149 : vector<2x1xf32> to vector<2x128xf32>
    %151 = arith.divf %147, %150 : vector<2x128xf32>
    %152 = arith.index_cast %c1_i32 : i32 to index
    %c0_37 = arith.constant 0 : index
    %c0_38 = arith.constant 0 : index
    %153 = vector.load %arg6[%152, %c0_37, %c0_38] : memref<8x2x128xf32, #tpu.memory_space<vmem>>, vector<1x2x128xf32>
    %154 = vector.shape_cast %153 : vector<1x2x128xf32> to vector<2x128xf32>
    %155 = vector.shape_cast %151 : vector<2x128xf32> to vector<1x2x128xf32>
    tpu.vector_store %arg6[%152, %c0_37, %c0_38], %155 {strides = array<i32>} : memref<8x2x128xf32, #tpu.memory_space<vmem>>, vector<1x2x128xf32>,
    %c2_i32 = arith.constant 2 : i32
    %156 = arith.index_cast %c2_i32 : i32 to index
    %c0_39 = arith.constant 0 : index
    %c0_40 = arith.constant 0 : index
    %157 = vector.load %arg0[%156, %c0_39, %c0_40] : memref<8x2x512xf32, #tpu.memory_space<vmem>>, vector<1x2x512xf32>
    %158 = vector.shape_cast %157 : vector<1x2x512xf32> to vector<2x512xf32>
    %cst_41 = arith.constant dense<0.000000e+00> : vector<2x512xf32>
    %159 = tpu.matmul %110, %0, %cst_41 {dimension_numbers = #tpu.dot_dimension_numbers<[1], [0], [0], [1], [0, 0, 1, 1], [], []>} : vector<2x128xf32>, vector<128x512xf32>, vector<2x512xf32> -> vector<2x512xf32>
    %160 = arith.addf %158, %159 : vector<2x512xf32>
    %161 = vector.extract_strided_slice %160 {offsets = [0, 0], sizes = [2, 128], strides = [1, 1]} : vector<2x512xf32> to vector<2x128xf32>
    %162 = arith.negf %161 : vector<2x128xf32>
    %163 = math.exp %162 : vector<2x128xf32>
    %cst_42 = arith.constant 1.000000e+00 : f32
    %164 = vector.broadcast %cst_42 : f32 to vector<2x128xf32>
    %165 = arith.addf %164, %163 : vector<2x128xf32>
    %166 = arith.divf %164, %165 : vector<2x128xf32>
    %167 = vector.extract_strided_slice %160 {offsets = [0, 128], sizes = [2, 128], strides = [1, 1]} : vector<2x512xf32> to vector<2x128xf32>
    %168 = arith.negf %167 : vector<2x128xf32>
    %169 = math.exp %168 : vector<2x128xf32>
    %cst_43 = arith.constant 1.000000e+00 : f32
    %170 = vector.broadcast %cst_43 : f32 to vector<2x128xf32>
    %171 = arith.addf %170, %169 : vector<2x128xf32>
    %172 = arith.divf %170, %171 : vector<2x128xf32>
    %173 = vector.extract_strided_slice %160 {offsets = [0, 256], sizes = [2, 128], strides = [1, 1]} : vector<2x512xf32> to vector<2x128xf32>
    %174 = math.tanh %173 : vector<2x128xf32>
    %175 = vector.extract_strided_slice %160 {offsets = [0, 384], sizes = [2, 128], strides = [1, 1]} : vector<2x512xf32> to vector<2x128xf32>
    %176 = arith.negf %175 : vector<2x128xf32>
    %177 = math.exp %176 : vector<2x128xf32>
    %cst_44 = arith.constant 1.000000e+00 : f32
    %178 = vector.broadcast %cst_44 : f32 to vector<2x128xf32>
    %179 = arith.addf %178, %177 : vector<2x128xf32>
    %180 = arith.divf %178, %179 : vector<2x128xf32>
    %181 = arith.mulf %172, %108 : vector<2x128xf32>
    %182 = arith.mulf %166, %174 : vector<2x128xf32>
    %183 = arith.addf %181, %182 : vector<2x128xf32>
    %184 = math.tanh %183 : vector<2x128xf32>
    %185 = arith.mulf %180, %184 : vector<2x128xf32>
    %186 = tpu.concatenate %185, %139 in 1 : vector<2x128xf32>, vector<2x128xf32> -> vector<2x256xf32>
    %cst_45 = arith.constant dense<0.000000e+00> : vector<2x512xf32>
    %187 = tpu.matmul %186, %1, %cst_45 {dimension_numbers = #tpu.dot_dimension_numbers<[1], [0], [0], [1], [0, 0, 1, 1], [], []>} : vector<2x256xf32>, vector<256x512xf32>, vector<2x512xf32> -> vector<2x512xf32>
    %188 = vector.broadcast %2 : vector<1x512xf32> to vector<2x512xf32>
    %189 = arith.addf %187, %188 : vector<2x512xf32>
    %190 = vector.extract_strided_slice %189 {offsets = [0, 0], sizes = [2, 128], strides = [1, 1]} : vector<2x512xf32> to vector<2x128xf32>
    %191 = arith.negf %190 : vector<2x128xf32>
    %192 = math.exp %191 : vector<2x128xf32>
    %cst_46 = arith.constant 1.000000e+00 : f32
    %193 = vector.broadcast %cst_46 : f32 to vector<2x128xf32>
    %194 = arith.addf %193, %192 : vector<2x128xf32>
    %195 = arith.divf %193, %194 : vector<2x128xf32>
    %196 = vector.extract_strided_slice %189 {offsets = [0, 128], sizes = [2, 128], strides = [1, 1]} : vector<2x512xf32> to vector<2x128xf32>
    %197 = arith.negf %196 : vector<2x128xf32>
    %198 = math.exp %197 : vector<2x128xf32>
    %cst_47 = arith.constant 1.000000e+00 : f32
    %199 = vector.broadcast %cst_47 : f32 to vector<2x128xf32>
    %200 = arith.addf %199, %198 : vector<2x128xf32>
    %201 = arith.divf %199, %200 : vector<2x128xf32>
    %202 = vector.extract_strided_slice %189 {offsets = [0, 256], sizes = [2, 128], strides = [1, 1]} : vector<2x512xf32> to vector<2x128xf32>
    %203 = math.tanh %202 : vector<2x128xf32>
    %204 = vector.extract_strided_slice %189 {offsets = [0, 384], sizes = [2, 128], strides = [1, 1]} : vector<2x512xf32> to vector<2x128xf32>
    %205 = arith.negf %204 : vector<2x128xf32>
    %206 = math.exp %205 : vector<2x128xf32>
    %cst_48 = arith.constant 1.000000e+00 : f32
    %207 = vector.broadcast %cst_48 : f32 to vector<2x128xf32>
    %208 = arith.addf %207, %206 : vector<2x128xf32>
    %209 = arith.divf %207, %208 : vector<2x128xf32>
    %210 = arith.mulf %201, %137 : vector<2x128xf32>
    %211 = arith.mulf %195, %203 : vector<2x128xf32>
    %212 = arith.addf %210, %211 : vector<2x128xf32>
    %213 = math.tanh %212 : vector<2x128xf32>
    %214 = arith.mulf %209, %213 : vector<2x128xf32>
    %cst_49 = arith.constant dense<0.000000e+00> : vector<2x128xf32>
    %215 = tpu.matmul %214, %3, %cst_49 {dimension_numbers = #tpu.dot_dimension_numbers<[1], [0], [0], [1], [0, 0, 1, 1], [], []>} : vector<2x128xf32>, vector<128x128xf32>, vector<2x128xf32> -> vector<2x128xf32>
    %216 = vector.broadcast %4 : vector<1x128xf32> to vector<2x128xf32>
    %217 = arith.addf %215, %216 : vector<2x128xf32>
    %cst_50 = arith.constant dense<0xFF800000> : vector<2xf32>
    %218 = vector.multi_reduction <maximumf>, %217, %cst_50 [1] : vector<2x128xf32> to vector<2xf32>
    %219 = vector.shape_cast %218 : vector<2xf32> to vector<2x1xf32>
    %220 = vector.broadcast %219 : vector<2x1xf32> to vector<2x128xf32>
    %221 = arith.subf %217, %220 : vector<2x128xf32>
    %222 = math.exp %221 : vector<2x128xf32>
    %cst_51 = arith.constant dense<0.000000e+00> : vector<2xf32>
    %223 = vector.multi_reduction <add>, %222, %cst_51 [1] : vector<2x128xf32> to vector<2xf32>
    %224 = vector.shape_cast %223 : vector<2xf32> to vector<2x1xf32>
    %225 = vector.broadcast %224 : vector<2x1xf32> to vector<2x128xf32>
    %226 = arith.divf %222, %225 : vector<2x128xf32>
    %227 = arith.index_cast %c2_i32 : i32 to index
    %c0_52 = arith.constant 0 : index
    %c0_53 = arith.constant 0 : index
    %228 = vector.load %arg6[%227, %c0_52, %c0_53] : memref<8x2x128xf32, #tpu.memory_space<vmem>>, vector<1x2x128xf32>
    %229 = vector.shape_cast %228 : vector<1x2x128xf32> to vector<2x128xf32>
    %230 = vector.shape_cast %226 : vector<2x128xf32> to vector<1x2x128xf32>
    tpu.vector_store %arg6[%227, %c0_52, %c0_53], %230 {strides = array<i32>} : memref<8x2x128xf32, #tpu.memory_space<vmem>>, vector<1x2x128xf32>,
    %c3_i32 = arith.constant 3 : i32
    %231 = arith.index_cast %c3_i32 : i32 to index
    %c0_54 = arith.constant 0 : index
    %c0_55 = arith.constant 0 : index
    %232 = vector.load %arg0[%231, %c0_54, %c0_55] : memref<8x2x512xf32, #tpu.memory_space<vmem>>, vector<1x2x512xf32>
    %233 = vector.shape_cast %232 : vector<1x2x512xf32> to vector<2x512xf32>
    %cst_56 = arith.constant dense<0.000000e+00> : vector<2x512xf32>
    %234 = tpu.matmul %185, %0, %cst_56 {dimension_numbers = #tpu.dot_dimension_numbers<[1], [0], [0], [1], [0, 0, 1, 1], [], []>} : vector<2x128xf32>, vector<128x512xf32>, vector<2x512xf32> -> vector<2x512xf32>
    %235 = arith.addf %233, %234 : vector<2x512xf32>
    %236 = vector.extract_strided_slice %235 {offsets = [0, 0], sizes = [2, 128], strides = [1, 1]} : vector<2x512xf32> to vector<2x128xf32>
    %237 = arith.negf %236 : vector<2x128xf32>
    %238 = math.exp %237 : vector<2x128xf32>
    %cst_57 = arith.constant 1.000000e+00 : f32
    %239 = vector.broadcast %cst_57 : f32 to vector<2x128xf32>
    %240 = arith.addf %239, %238 : vector<2x128xf32>
    %241 = arith.divf %239, %240 : vector<2x128xf32>
    %242 = vector.extract_strided_slice %235 {offsets = [0, 128], sizes = [2, 128], strides = [1, 1]} : vector<2x512xf32> to vector<2x128xf32>
    %243 = arith.negf %242 : vector<2x128xf32>
    %244 = math.exp %243 : vector<2x128xf32>
    %cst_58 = arith.constant 1.000000e+00 : f32
    %245 = vector.broadcast %cst_58 : f32 to vector<2x128xf32>
    %246 = arith.addf %245, %244 : vector<2x128xf32>
    %247 = arith.divf %245, %246 : vector<2x128xf32>
    %248 = vector.extract_strided_slice %235 {offsets = [0, 256], sizes = [2, 128], strides = [1, 1]} : vector<2x512xf32> to vector<2x128xf32>
    %249 = math.tanh %248 : vector<2x128xf32>
    %250 = vector.extract_strided_slice %235 {offsets = [0, 384], sizes = [2, 128], strides = [1, 1]} : vector<2x512xf32> to vector<2x128xf32>
    %251 = arith.negf %250 : vector<2x128xf32>
    %252 = math.exp %251 : vector<2x128xf32>
    %cst_59 = arith.constant 1.000000e+00 : f32
    %253 = vector.broadcast %cst_59 : f32 to vector<2x128xf32>
    %254 = arith.addf %253, %252 : vector<2x128xf32>
    %255 = arith.divf %253, %254 : vector<2x128xf32>
    %256 = arith.mulf %247, %183 : vector<2x128xf32>
    %257 = arith.mulf %241, %249 : vector<2x128xf32>
    %258 = arith.addf %256, %257 : vector<2x128xf32>
    %259 = math.tanh %258 : vector<2x128xf32>
    %260 = arith.mulf %255, %259 : vector<2x128xf32>
    %261 = tpu.concatenate %260, %214 in 1 : vector<2x128xf32>, vector<2x128xf32> -> vector<2x256xf32>
    %cst_60 = arith.constant dense<0.000000e+00> : vector<2x512xf32>
    %262 = tpu.matmul %261, %1, %cst_60 {dimension_numbers = #tpu.dot_dimension_numbers<[1], [0], [0], [1], [0, 0, 1, 1], [], []>} : vector<2x256xf32>, vector<256x512xf32>, vector<2x512xf32> -> vector<2x512xf32>
    %263 = vector.broadcast %2 : vector<1x512xf32> to vector<2x512xf32>
    %264 = arith.addf %262, %263 : vector<2x512xf32>
    %265 = vector.extract_strided_slice %264 {offsets = [0, 0], sizes = [2, 128], strides = [1, 1]} : vector<2x512xf32> to vector<2x128xf32>
    %266 = arith.negf %265 : vector<2x128xf32>
    %267 = math.exp %266 : vector<2x128xf32>
    %cst_61 = arith.constant 1.000000e+00 : f32
    %268 = vector.broadcast %cst_61 : f32 to vector<2x128xf32>
    %269 = arith.addf %268, %267 : vector<2x128xf32>
    %270 = arith.divf %268, %269 : vector<2x128xf32>
    %271 = vector.extract_strided_slice %264 {offsets = [0, 128], sizes = [2, 128], strides = [1, 1]} : vector<2x512xf32> to vector<2x128xf32>
    %272 = arith.negf %271 : vector<2x128xf32>
    %273 = math.exp %272 : vector<2x128xf32>
    %cst_62 = arith.constant 1.000000e+00 : f32
    %274 = vector.broadcast %cst_62 : f32 to vector<2x128xf32>
    %275 = arith.addf %274, %273 : vector<2x128xf32>
    %276 = arith.divf %274, %275 : vector<2x128xf32>
    %277 = vector.extract_strided_slice %264 {offsets = [0, 256], sizes = [2, 128], strides = [1, 1]} : vector<2x512xf32> to vector<2x128xf32>
    %278 = math.tanh %277 : vector<2x128xf32>
    %279 = vector.extract_strided_slice %264 {offsets = [0, 384], sizes = [2, 128], strides = [1, 1]} : vector<2x512xf32> to vector<2x128xf32>
    %280 = arith.negf %279 : vector<2x128xf32>
    %281 = math.exp %280 : vector<2x128xf32>
    %cst_63 = arith.constant 1.000000e+00 : f32
    %282 = vector.broadcast %cst_63 : f32 to vector<2x128xf32>
    %283 = arith.addf %282, %281 : vector<2x128xf32>
    %284 = arith.divf %282, %283 : vector<2x128xf32>
    %285 = arith.mulf %276, %212 : vector<2x128xf32>
    %286 = arith.mulf %270, %278 : vector<2x128xf32>
    %287 = arith.addf %285, %286 : vector<2x128xf32>
    %288 = math.tanh %287 : vector<2x128xf32>
    %289 = arith.mulf %284, %288 : vector<2x128xf32>
    %cst_64 = arith.constant dense<0.000000e+00> : vector<2x128xf32>
    %290 = tpu.matmul %289, %3, %cst_64 {dimension_numbers = #tpu.dot_dimension_numbers<[1], [0], [0], [1], [0, 0, 1, 1], [], []>} : vector<2x128xf32>, vector<128x128xf32>, vector<2x128xf32> -> vector<2x128xf32>
    %291 = vector.broadcast %4 : vector<1x128xf32> to vector<2x128xf32>
    %292 = arith.addf %290, %291 : vector<2x128xf32>
    %cst_65 = arith.constant dense<0xFF800000> : vector<2xf32>
    %293 = vector.multi_reduction <maximumf>, %292, %cst_65 [1] : vector<2x128xf32> to vector<2xf32>
    %294 = vector.shape_cast %293 : vector<2xf32> to vector<2x1xf32>
    %295 = vector.broadcast %294 : vector<2x1xf32> to vector<2x128xf32>
    %296 = arith.subf %292, %295 : vector<2x128xf32>
    %297 = math.exp %296 : vector<2x128xf32>
    %cst_66 = arith.constant dense<0.000000e+00> : vector<2xf32>
    %298 = vector.multi_reduction <add>, %297, %cst_66 [1] : vector<2x128xf32> to vector<2xf32>
    %299 = vector.shape_cast %298 : vector<2xf32> to vector<2x1xf32>
    %300 = vector.broadcast %299 : vector<2x1xf32> to vector<2x128xf32>
    %301 = arith.divf %297, %300 : vector<2x128xf32>
    %302 = arith.index_cast %c3_i32 : i32 to index
    %c0_67 = arith.constant 0 : index
    %c0_68 = arith.constant 0 : index
    %303 = vector.load %arg6[%302, %c0_67, %c0_68] : memref<8x2x128xf32, #tpu.memory_space<vmem>>, vector<1x2x128xf32>
    %304 = vector.shape_cast %303 : vector<1x2x128xf32> to vector<2x128xf32>
    %305 = vector.shape_cast %301 : vector<2x128xf32> to vector<1x2x128xf32>
    tpu.vector_store %arg6[%302, %c0_67, %c0_68], %305 {strides = array<i32>} : memref<8x2x128xf32, #tpu.memory_space<vmem>>, vector<1x2x128xf32>,
    %c4_i32 = arith.constant 4 : i32
    %306 = arith.index_cast %c4_i32 : i32 to index
    %c0_69 = arith.constant 0 : index
    %c0_70 = arith.constant 0 : index
    %307 = vector.load %arg0[%306, %c0_69, %c0_70] : memref<8x2x512xf32, #tpu.memory_space<vmem>>, vector<1x2x512xf32>
    %308 = vector.shape_cast %307 : vector<1x2x512xf32> to vector<2x512xf32>
    %cst_71 = arith.constant dense<0.000000e+00> : vector<2x512xf32>
    %309 = tpu.matmul %260, %0, %cst_71 {dimension_numbers = #tpu.dot_dimension_numbers<[1], [0], [0], [1], [0, 0, 1, 1], [], []>} : vector<2x128xf32>, vector<128x512xf32>, vector<2x512xf32> -> vector<2x512xf32>
    %310 = arith.addf %308, %309 : vector<2x512xf32>
    %311 = vector.extract_strided_slice %310 {offsets = [0, 0], sizes = [2, 128], strides = [1, 1]} : vector<2x512xf32> to vector<2x128xf32>
    %312 = arith.negf %311 : vector<2x128xf32>
    %313 = math.exp %312 : vector<2x128xf32>
    %cst_72 = arith.constant 1.000000e+00 : f32
    %314 = vector.broadcast %cst_72 : f32 to vector<2x128xf32>
    %315 = arith.addf %314, %313 : vector<2x128xf32>
    %316 = arith.divf %314, %315 : vector<2x128xf32>
    %317 = vector.extract_strided_slice %310 {offsets = [0, 128], sizes = [2, 128], strides = [1, 1]} : vector<2x512xf32> to vector<2x128xf32>
    %318 = arith.negf %317 : vector<2x128xf32>
    %319 = math.exp %318 : vector<2x128xf32>
    %cst_73 = arith.constant 1.000000e+00 : f32
    %320 = vector.broadcast %cst_73 : f32 to vector<2x128xf32>
    %321 = arith.addf %320, %319 : vector<2x128xf32>
    %322 = arith.divf %320, %321 : vector<2x128xf32>
    %323 = vector.extract_strided_slice %310 {offsets = [0, 256], sizes = [2, 128], strides = [1, 1]} : vector<2x512xf32> to vector<2x128xf32>
    %324 = math.tanh %323 : vector<2x128xf32>
    %325 = vector.extract_strided_slice %310 {offsets = [0, 384], sizes = [2, 128], strides = [1, 1]} : vector<2x512xf32> to vector<2x128xf32>
    %326 = arith.negf %325 : vector<2x128xf32>
    %327 = math.exp %326 : vector<2x128xf32>
    %cst_74 = arith.constant 1.000000e+00 : f32
    %328 = vector.broadcast %cst_74 : f32 to vector<2x128xf32>
    %329 = arith.addf %328, %327 : vector<2x128xf32>
    %330 = arith.divf %328, %329 : vector<2x128xf32>
    %331 = arith.mulf %322, %258 : vector<2x128xf32>
    %332 = arith.mulf %316, %324 : vector<2x128xf32>
    %333 = arith.addf %331, %332 : vector<2x128xf32>
    %334 = math.tanh %333 : vector<2x128xf32>
    %335 = arith.mulf %330, %334 : vector<2x128xf32>
    %336 = tpu.concatenate %335, %289 in 1 : vector<2x128xf32>, vector<2x128xf32> -> vector<2x256xf32>
    %cst_75 = arith.constant dense<0.000000e+00> : vector<2x512xf32>
    %337 = tpu.matmul %336, %1, %cst_75 {dimension_numbers = #tpu.dot_dimension_numbers<[1], [0], [0], [1], [0, 0, 1, 1], [], []>} : vector<2x256xf32>, vector<256x512xf32>, vector<2x512xf32> -> vector<2x512xf32>
    %338 = vector.broadcast %2 : vector<1x512xf32> to vector<2x512xf32>
    %339 = arith.addf %337, %338 : vector<2x512xf32>
    %340 = vector.extract_strided_slice %339 {offsets = [0, 0], sizes = [2, 128], strides = [1, 1]} : vector<2x512xf32> to vector<2x128xf32>
    %341 = arith.negf %340 : vector<2x128xf32>
    %342 = math.exp %341 : vector<2x128xf32>
    %cst_76 = arith.constant 1.000000e+00 : f32
    %343 = vector.broadcast %cst_76 : f32 to vector<2x128xf32>
    %344 = arith.addf %343, %342 : vector<2x128xf32>
    %345 = arith.divf %343, %344 : vector<2x128xf32>
    %346 = vector.extract_strided_slice %339 {offsets = [0, 128], sizes = [2, 128], strides = [1, 1]} : vector<2x512xf32> to vector<2x128xf32>
    %347 = arith.negf %346 : vector<2x128xf32>
    %348 = math.exp %347 : vector<2x128xf32>
    %cst_77 = arith.constant 1.000000e+00 : f32
    %349 = vector.broadcast %cst_77 : f32 to vector<2x128xf32>
    %350 = arith.addf %349, %348 : vector<2x128xf32>
    %351 = arith.divf %349, %350 : vector<2x128xf32>
    %352 = vector.extract_strided_slice %339 {offsets = [0, 256], sizes = [2, 128], strides = [1, 1]} : vector<2x512xf32> to vector<2x128xf32>
    %353 = math.tanh %352 : vector<2x128xf32>
    %354 = vector.extract_strided_slice %339 {offsets = [0, 384], sizes = [2, 128], strides = [1, 1]} : vector<2x512xf32> to vector<2x128xf32>
    %355 = arith.negf %354 : vector<2x128xf32>
    %356 = math.exp %355 : vector<2x128xf32>
    %cst_78 = arith.constant 1.000000e+00 : f32
    %357 = vector.broadcast %cst_78 : f32 to vector<2x128xf32>
    %358 = arith.addf %357, %356 : vector<2x128xf32>
    %359 = arith.divf %357, %358 : vector<2x128xf32>
    %360 = arith.mulf %351, %287 : vector<2x128xf32>
    %361 = arith.mulf %345, %353 : vector<2x128xf32>
    %362 = arith.addf %360, %361 : vector<2x128xf32>
    %363 = math.tanh %362 : vector<2x128xf32>
    %364 = arith.mulf %359, %363 : vector<2x128xf32>
    %cst_79 = arith.constant dense<0.000000e+00> : vector<2x128xf32>
    %365 = tpu.matmul %364, %3, %cst_79 {dimension_numbers = #tpu.dot_dimension_numbers<[1], [0], [0], [1], [0, 0, 1, 1], [], []>} : vector<2x128xf32>, vector<128x128xf32>, vector<2x128xf32> -> vector<2x128xf32>
    %366 = vector.broadcast %4 : vector<1x128xf32> to vector<2x128xf32>
    %367 = arith.addf %365, %366 : vector<2x128xf32>
    %cst_80 = arith.constant dense<0xFF800000> : vector<2xf32>
    %368 = vector.multi_reduction <maximumf>, %367, %cst_80 [1] : vector<2x128xf32> to vector<2xf32>
    %369 = vector.shape_cast %368 : vector<2xf32> to vector<2x1xf32>
    %370 = vector.broadcast %369 : vector<2x1xf32> to vector<2x128xf32>
    %371 = arith.subf %367, %370 : vector<2x128xf32>
    %372 = math.exp %371 : vector<2x128xf32>
    %cst_81 = arith.constant dense<0.000000e+00> : vector<2xf32>
    %373 = vector.multi_reduction <add>, %372, %cst_81 [1] : vector<2x128xf32> to vector<2xf32>
    %374 = vector.shape_cast %373 : vector<2xf32> to vector<2x1xf32>
    %375 = vector.broadcast %374 : vector<2x1xf32> to vector<2x128xf32>
    %376 = arith.divf %372, %375 : vector<2x128xf32>
    %377 = arith.index_cast %c4_i32 : i32 to index
    %c0_82 = arith.constant 0 : index
    %c0_83 = arith.constant 0 : index
    %378 = vector.load %arg6[%377, %c0_82, %c0_83] : memref<8x2x128xf32, #tpu.memory_space<vmem>>, vector<1x2x128xf32>
    %379 = vector.shape_cast %378 : vector<1x2x128xf32> to vector<2x128xf32>
    %380 = vector.shape_cast %376 : vector<2x128xf32> to vector<1x2x128xf32>
    tpu.vector_store %arg6[%377, %c0_82, %c0_83], %380 {strides = array<i32>} : memref<8x2x128xf32, #tpu.memory_space<vmem>>, vector<1x2x128xf32>,
    %c5_i32 = arith.constant 5 : i32
    %381 = arith.index_cast %c5_i32 : i32 to index
    %c0_84 = arith.constant 0 : index
    %c0_85 = arith.constant 0 : index
    %382 = vector.load %arg0[%381, %c0_84, %c0_85] : memref<8x2x512xf32, #tpu.memory_space<vmem>>, vector<1x2x512xf32>
    %383 = vector.shape_cast %382 : vector<1x2x512xf32> to vector<2x512xf32>
    %cst_86 = arith.constant dense<0.000000e+00> : vector<2x512xf32>
    %384 = tpu.matmul %335, %0, %cst_86 {dimension_numbers = #tpu.dot_dimension_numbers<[1], [0], [0], [1], [0, 0, 1, 1], [], []>} : vector<2x128xf32>, vector<128x512xf32>, vector<2x512xf32> -> vector<2x512xf32>
    %385 = arith.addf %383, %384 : vector<2x512xf32>
    %386 = vector.extract_strided_slice %385 {offsets = [0, 0], sizes = [2, 128], strides = [1, 1]} : vector<2x512xf32> to vector<2x128xf32>
    %387 = arith.negf %386 : vector<2x128xf32>
    %388 = math.exp %387 : vector<2x128xf32>
    %cst_87 = arith.constant 1.000000e+00 : f32
    %389 = vector.broadcast %cst_87 : f32 to vector<2x128xf32>
    %390 = arith.addf %389, %388 : vector<2x128xf32>
    %391 = arith.divf %389, %390 : vector<2x128xf32>
    %392 = vector.extract_strided_slice %385 {offsets = [0, 128], sizes = [2, 128], strides = [1, 1]} : vector<2x512xf32> to vector<2x128xf32>
    %393 = arith.negf %392 : vector<2x128xf32>
    %394 = math.exp %393 : vector<2x128xf32>
    %cst_88 = arith.constant 1.000000e+00 : f32
    %395 = vector.broadcast %cst_88 : f32 to vector<2x128xf32>
    %396 = arith.addf %395, %394 : vector<2x128xf32>
    %397 = arith.divf %395, %396 : vector<2x128xf32>
    %398 = vector.extract_strided_slice %385 {offsets = [0, 256], sizes = [2, 128], strides = [1, 1]} : vector<2x512xf32> to vector<2x128xf32>
    %399 = math.tanh %398 : vector<2x128xf32>
    %400 = vector.extract_strided_slice %385 {offsets = [0, 384], sizes = [2, 128], strides = [1, 1]} : vector<2x512xf32> to vector<2x128xf32>
    %401 = arith.negf %400 : vector<2x128xf32>
    %402 = math.exp %401 : vector<2x128xf32>
    %cst_89 = arith.constant 1.000000e+00 : f32
    %403 = vector.broadcast %cst_89 : f32 to vector<2x128xf32>
    %404 = arith.addf %403, %402 : vector<2x128xf32>
    %405 = arith.divf %403, %404 : vector<2x128xf32>
    %406 = arith.mulf %397, %333 : vector<2x128xf32>
    %407 = arith.mulf %391, %399 : vector<2x128xf32>
    %408 = arith.addf %406, %407 : vector<2x128xf32>
    %409 = math.tanh %408 : vector<2x128xf32>
    %410 = arith.mulf %405, %409 : vector<2x128xf32>
    %411 = tpu.concatenate %410, %364 in 1 : vector<2x128xf32>, vector<2x128xf32> -> vector<2x256xf32>
    %cst_90 = arith.constant dense<0.000000e+00> : vector<2x512xf32>
    %412 = tpu.matmul %411, %1, %cst_90 {dimension_numbers = #tpu.dot_dimension_numbers<[1], [0], [0], [1], [0, 0, 1, 1], [], []>} : vector<2x256xf32>, vector<256x512xf32>, vector<2x512xf32> -> vector<2x512xf32>
    %413 = vector.broadcast %2 : vector<1x512xf32> to vector<2x512xf32>
    %414 = arith.addf %412, %413 : vector<2x512xf32>
    %415 = vector.extract_strided_slice %414 {offsets = [0, 0], sizes = [2, 128], strides = [1, 1]} : vector<2x512xf32> to vector<2x128xf32>
    %416 = arith.negf %415 : vector<2x128xf32>
    %417 = math.exp %416 : vector<2x128xf32>
    %cst_91 = arith.constant 1.000000e+00 : f32
    %418 = vector.broadcast %cst_91 : f32 to vector<2x128xf32>
    %419 = arith.addf %418, %417 : vector<2x128xf32>
    %420 = arith.divf %418, %419 : vector<2x128xf32>
    %421 = vector.extract_strided_slice %414 {offsets = [0, 128], sizes = [2, 128], strides = [1, 1]} : vector<2x512xf32> to vector<2x128xf32>
    %422 = arith.negf %421 : vector<2x128xf32>
    %423 = math.exp %422 : vector<2x128xf32>
    %cst_92 = arith.constant 1.000000e+00 : f32
    %424 = vector.broadcast %cst_92 : f32 to vector<2x128xf32>
    %425 = arith.addf %424, %423 : vector<2x128xf32>
    %426 = arith.divf %424, %425 : vector<2x128xf32>
    %427 = vector.extract_strided_slice %414 {offsets = [0, 256], sizes = [2, 128], strides = [1, 1]} : vector<2x512xf32> to vector<2x128xf32>
    %428 = math.tanh %427 : vector<2x128xf32>
    %429 = vector.extract_strided_slice %414 {offsets = [0, 384], sizes = [2, 128], strides = [1, 1]} : vector<2x512xf32> to vector<2x128xf32>
    %430 = arith.negf %429 : vector<2x128xf32>
    %431 = math.exp %430 : vector<2x128xf32>
    %cst_93 = arith.constant 1.000000e+00 : f32
    %432 = vector.broadcast %cst_93 : f32 to vector<2x128xf32>
    %433 = arith.addf %432, %431 : vector<2x128xf32>
    %434 = arith.divf %432, %433 : vector<2x128xf32>
    %435 = arith.mulf %426, %362 : vector<2x128xf32>
    %436 = arith.mulf %420, %428 : vector<2x128xf32>
    %437 = arith.addf %435, %436 : vector<2x128xf32>
    %438 = math.tanh %437 : vector<2x128xf32>
    %439 = arith.mulf %434, %438 : vector<2x128xf32>
    %cst_94 = arith.constant dense<0.000000e+00> : vector<2x128xf32>
    %440 = tpu.matmul %439, %3, %cst_94 {dimension_numbers = #tpu.dot_dimension_numbers<[1], [0], [0], [1], [0, 0, 1, 1], [], []>} : vector<2x128xf32>, vector<128x128xf32>, vector<2x128xf32> -> vector<2x128xf32>
    %441 = vector.broadcast %4 : vector<1x128xf32> to vector<2x128xf32>
    %442 = arith.addf %440, %441 : vector<2x128xf32>
    %cst_95 = arith.constant dense<0xFF800000> : vector<2xf32>
    %443 = vector.multi_reduction <maximumf>, %442, %cst_95 [1] : vector<2x128xf32> to vector<2xf32>
    %444 = vector.shape_cast %443 : vector<2xf32> to vector<2x1xf32>
    %445 = vector.broadcast %444 : vector<2x1xf32> to vector<2x128xf32>
    %446 = arith.subf %442, %445 : vector<2x128xf32>
    %447 = math.exp %446 : vector<2x128xf32>
    %cst_96 = arith.constant dense<0.000000e+00> : vector<2xf32>
    %448 = vector.multi_reduction <add>, %447, %cst_96 [1] : vector<2x128xf32> to vector<2xf32>
    %449 = vector.shape_cast %448 : vector<2xf32> to vector<2x1xf32>
    %450 = vector.broadcast %449 : vector<2x1xf32> to vector<2x128xf32>
    %451 = arith.divf %447, %450 : vector<2x128xf32>
    %452 = arith.index_cast %c5_i32 : i32 to index
    %c0_97 = arith.constant 0 : index
    %c0_98 = arith.constant 0 : index
    %453 = vector.load %arg6[%452, %c0_97, %c0_98] : memref<8x2x128xf32, #tpu.memory_space<vmem>>, vector<1x2x128xf32>
    %454 = vector.shape_cast %453 : vector<1x2x128xf32> to vector<2x128xf32>
    %455 = vector.shape_cast %451 : vector<2x128xf32> to vector<1x2x128xf32>
    tpu.vector_store %arg6[%452, %c0_97, %c0_98], %455 {strides = array<i32>} : memref<8x2x128xf32, #tpu.memory_space<vmem>>, vector<1x2x128xf32>,
    %c6_i32 = arith.constant 6 : i32
    %456 = arith.index_cast %c6_i32 : i32 to index
    %c0_99 = arith.constant 0 : index
    %c0_100 = arith.constant 0 : index
    %457 = vector.load %arg0[%456, %c0_99, %c0_100] : memref<8x2x512xf32, #tpu.memory_space<vmem>>, vector<1x2x512xf32>
    %458 = vector.shape_cast %457 : vector<1x2x512xf32> to vector<2x512xf32>
    %cst_101 = arith.constant dense<0.000000e+00> : vector<2x512xf32>
    %459 = tpu.matmul %410, %0, %cst_101 {dimension_numbers = #tpu.dot_dimension_numbers<[1], [0], [0], [1], [0, 0, 1, 1], [], []>} : vector<2x128xf32>, vector<128x512xf32>, vector<2x512xf32> -> vector<2x512xf32>
    %460 = arith.addf %458, %459 : vector<2x512xf32>
    %461 = vector.extract_strided_slice %460 {offsets = [0, 0], sizes = [2, 128], strides = [1, 1]} : vector<2x512xf32> to vector<2x128xf32>
    %462 = arith.negf %461 : vector<2x128xf32>
    %463 = math.exp %462 : vector<2x128xf32>
    %cst_102 = arith.constant 1.000000e+00 : f32
    %464 = vector.broadcast %cst_102 : f32 to vector<2x128xf32>
    %465 = arith.addf %464, %463 : vector<2x128xf32>
    %466 = arith.divf %464, %465 : vector<2x128xf32>
    %467 = vector.extract_strided_slice %460 {offsets = [0, 128], sizes = [2, 128], strides = [1, 1]} : vector<2x512xf32> to vector<2x128xf32>
    %468 = arith.negf %467 : vector<2x128xf32>
    %469 = math.exp %468 : vector<2x128xf32>
    %cst_103 = arith.constant 1.000000e+00 : f32
    %470 = vector.broadcast %cst_103 : f32 to vector<2x128xf32>
    %471 = arith.addf %470, %469 : vector<2x128xf32>
    %472 = arith.divf %470, %471 : vector<2x128xf32>
    %473 = vector.extract_strided_slice %460 {offsets = [0, 256], sizes = [2, 128], strides = [1, 1]} : vector<2x512xf32> to vector<2x128xf32>
    %474 = math.tanh %473 : vector<2x128xf32>
    %475 = vector.extract_strided_slice %460 {offsets = [0, 384], sizes = [2, 128], strides = [1, 1]} : vector<2x512xf32> to vector<2x128xf32>
    %476 = arith.negf %475 : vector<2x128xf32>
    %477 = math.exp %476 : vector<2x128xf32>
    %cst_104 = arith.constant 1.000000e+00 : f32
    %478 = vector.broadcast %cst_104 : f32 to vector<2x128xf32>
    %479 = arith.addf %478, %477 : vector<2x128xf32>
    %480 = arith.divf %478, %479 : vector<2x128xf32>
    %481 = arith.mulf %472, %408 : vector<2x128xf32>
    %482 = arith.mulf %466, %474 : vector<2x128xf32>
    %483 = arith.addf %481, %482 : vector<2x128xf32>
    %484 = math.tanh %483 : vector<2x128xf32>
    %485 = arith.mulf %480, %484 : vector<2x128xf32>
    %486 = tpu.concatenate %485, %439 in 1 : vector<2x128xf32>, vector<2x128xf32> -> vector<2x256xf32>
    %cst_105 = arith.constant dense<0.000000e+00> : vector<2x512xf32>
    %487 = tpu.matmul %486, %1, %cst_105 {dimension_numbers = #tpu.dot_dimension_numbers<[1], [0], [0], [1], [0, 0, 1, 1], [], []>} : vector<2x256xf32>, vector<256x512xf32>, vector<2x512xf32> -> vector<2x512xf32>
    %488 = vector.broadcast %2 : vector<1x512xf32> to vector<2x512xf32>
    %489 = arith.addf %487, %488 : vector<2x512xf32>
    %490 = vector.extract_strided_slice %489 {offsets = [0, 0], sizes = [2, 128], strides = [1, 1]} : vector<2x512xf32> to vector<2x128xf32>
    %491 = arith.negf %490 : vector<2x128xf32>
    %492 = math.exp %491 : vector<2x128xf32>
    %cst_106 = arith.constant 1.000000e+00 : f32
    %493 = vector.broadcast %cst_106 : f32 to vector<2x128xf32>
    %494 = arith.addf %493, %492 : vector<2x128xf32>
    %495 = arith.divf %493, %494 : vector<2x128xf32>
    %496 = vector.extract_strided_slice %489 {offsets = [0, 128], sizes = [2, 128], strides = [1, 1]} : vector<2x512xf32> to vector<2x128xf32>
    %497 = arith.negf %496 : vector<2x128xf32>
    %498 = math.exp %497 : vector<2x128xf32>
    %cst_107 = arith.constant 1.000000e+00 : f32
    %499 = vector.broadcast %cst_107 : f32 to vector<2x128xf32>
    %500 = arith.addf %499, %498 : vector<2x128xf32>
    %501 = arith.divf %499, %500 : vector<2x128xf32>
    %502 = vector.extract_strided_slice %489 {offsets = [0, 256], sizes = [2, 128], strides = [1, 1]} : vector<2x512xf32> to vector<2x128xf32>
    %503 = math.tanh %502 : vector<2x128xf32>
    %504 = vector.extract_strided_slice %489 {offsets = [0, 384], sizes = [2, 128], strides = [1, 1]} : vector<2x512xf32> to vector<2x128xf32>
    %505 = arith.negf %504 : vector<2x128xf32>
    %506 = math.exp %505 : vector<2x128xf32>
    %cst_108 = arith.constant 1.000000e+00 : f32
    %507 = vector.broadcast %cst_108 : f32 to vector<2x128xf32>
    %508 = arith.addf %507, %506 : vector<2x128xf32>
    %509 = arith.divf %507, %508 : vector<2x128xf32>
    %510 = arith.mulf %501, %437 : vector<2x128xf32>
    %511 = arith.mulf %495, %503 : vector<2x128xf32>
    %512 = arith.addf %510, %511 : vector<2x128xf32>
    %513 = math.tanh %512 : vector<2x128xf32>
    %514 = arith.mulf %509, %513 : vector<2x128xf32>
    %cst_109 = arith.constant dense<0.000000e+00> : vector<2x128xf32>
    %515 = tpu.matmul %514, %3, %cst_109 {dimension_numbers = #tpu.dot_dimension_numbers<[1], [0], [0], [1], [0, 0, 1, 1], [], []>} : vector<2x128xf32>, vector<128x128xf32>, vector<2x128xf32> -> vector<2x128xf32>
    %516 = vector.broadcast %4 : vector<1x128xf32> to vector<2x128xf32>
    %517 = arith.addf %515, %516 : vector<2x128xf32>
    %cst_110 = arith.constant dense<0xFF800000> : vector<2xf32>
    %518 = vector.multi_reduction <maximumf>, %517, %cst_110 [1] : vector<2x128xf32> to vector<2xf32>
    %519 = vector.shape_cast %518 : vector<2xf32> to vector<2x1xf32>
    %520 = vector.broadcast %519 : vector<2x1xf32> to vector<2x128xf32>
    %521 = arith.subf %517, %520 : vector<2x128xf32>
    %522 = math.exp %521 : vector<2x128xf32>
    %cst_111 = arith.constant dense<0.000000e+00> : vector<2xf32>
    %523 = vector.multi_reduction <add>, %522, %cst_111 [1] : vector<2x128xf32> to vector<2xf32>
    %524 = vector.shape_cast %523 : vector<2xf32> to vector<2x1xf32>
    %525 = vector.broadcast %524 : vector<2x1xf32> to vector<2x128xf32>
    %526 = arith.divf %522, %525 : vector<2x128xf32>
    %527 = arith.index_cast %c6_i32 : i32 to index
    %c0_112 = arith.constant 0 : index
    %c0_113 = arith.constant 0 : index
    %528 = vector.load %arg6[%527, %c0_112, %c0_113] : memref<8x2x128xf32, #tpu.memory_space<vmem>>, vector<1x2x128xf32>
    %529 = vector.shape_cast %528 : vector<1x2x128xf32> to vector<2x128xf32>
    %530 = vector.shape_cast %526 : vector<2x128xf32> to vector<1x2x128xf32>
    tpu.vector_store %arg6[%527, %c0_112, %c0_113], %530 {strides = array<i32>} : memref<8x2x128xf32, #tpu.memory_space<vmem>>, vector<1x2x128xf32>,
    %c7_i32 = arith.constant 7 : i32
    %531 = arith.index_cast %c7_i32 : i32 to index
    %c0_114 = arith.constant 0 : index
    %c0_115 = arith.constant 0 : index
    %532 = vector.load %arg0[%531, %c0_114, %c0_115] : memref<8x2x512xf32, #tpu.memory_space<vmem>>, vector<1x2x512xf32>
    %533 = vector.shape_cast %532 : vector<1x2x512xf32> to vector<2x512xf32>
    %cst_116 = arith.constant dense<0.000000e+00> : vector<2x512xf32>
    %534 = tpu.matmul %485, %0, %cst_116 {dimension_numbers = #tpu.dot_dimension_numbers<[1], [0], [0], [1], [0, 0, 1, 1], [], []>} : vector<2x128xf32>, vector<128x512xf32>, vector<2x512xf32> -> vector<2x512xf32>
    %535 = arith.addf %533, %534 : vector<2x512xf32>
    %536 = vector.extract_strided_slice %535 {offsets = [0, 0], sizes = [2, 128], strides = [1, 1]} : vector<2x512xf32> to vector<2x128xf32>
    %537 = arith.negf %536 : vector<2x128xf32>
    %538 = math.exp %537 : vector<2x128xf32>
    %cst_117 = arith.constant 1.000000e+00 : f32
    %539 = vector.broadcast %cst_117 : f32 to vector<2x128xf32>
    %540 = arith.addf %539, %538 : vector<2x128xf32>
    %541 = arith.divf %539, %540 : vector<2x128xf32>
    %542 = vector.extract_strided_slice %535 {offsets = [0, 128], sizes = [2, 128], strides = [1, 1]} : vector<2x512xf32> to vector<2x128xf32>
    %543 = arith.negf %542 : vector<2x128xf32>
    %544 = math.exp %543 : vector<2x128xf32>
    %cst_118 = arith.constant 1.000000e+00 : f32
    %545 = vector.broadcast %cst_118 : f32 to vector<2x128xf32>
    %546 = arith.addf %545, %544 : vector<2x128xf32>
    %547 = arith.divf %545, %546 : vector<2x128xf32>
    %548 = vector.extract_strided_slice %535 {offsets = [0, 256], sizes = [2, 128], strides = [1, 1]} : vector<2x512xf32> to vector<2x128xf32>
    %549 = math.tanh %548 : vector<2x128xf32>
    %550 = vector.extract_strided_slice %535 {offsets = [0, 384], sizes = [2, 128], strides = [1, 1]} : vector<2x512xf32> to vector<2x128xf32>
    %551 = arith.negf %550 : vector<2x128xf32>
    %552 = math.exp %551 : vector<2x128xf32>
    %cst_119 = arith.constant 1.000000e+00 : f32
    %553 = vector.broadcast %cst_119 : f32 to vector<2x128xf32>
    %554 = arith.addf %553, %552 : vector<2x128xf32>
    %555 = arith.divf %553, %554 : vector<2x128xf32>
    %556 = arith.mulf %547, %483 : vector<2x128xf32>
    %557 = arith.mulf %541, %549 : vector<2x128xf32>
    %558 = arith.addf %556, %557 : vector<2x128xf32>
    %559 = math.tanh %558 : vector<2x128xf32>
    %560 = arith.mulf %555, %559 : vector<2x128xf32>
    %561 = tpu.concatenate %560, %514 in 1 : vector<2x128xf32>, vector<2x128xf32> -> vector<2x256xf32>
    %cst_120 = arith.constant dense<0.000000e+00> : vector<2x512xf32>
    %562 = tpu.matmul %561, %1, %cst_120 {dimension_numbers = #tpu.dot_dimension_numbers<[1], [0], [0], [1], [0, 0, 1, 1], [], []>} : vector<2x256xf32>, vector<256x512xf32>, vector<2x512xf32> -> vector<2x512xf32>
    %563 = vector.broadcast %2 : vector<1x512xf32> to vector<2x512xf32>
    %564 = arith.addf %562, %563 : vector<2x512xf32>
    %565 = vector.extract_strided_slice %564 {offsets = [0, 0], sizes = [2, 128], strides = [1, 1]} : vector<2x512xf32> to vector<2x128xf32>
    %566 = arith.negf %565 : vector<2x128xf32>
    %567 = math.exp %566 : vector<2x128xf32>
    %cst_121 = arith.constant 1.000000e+00 : f32
    %568 = vector.broadcast %cst_121 : f32 to vector<2x128xf32>
    %569 = arith.addf %568, %567 : vector<2x128xf32>
    %570 = arith.divf %568, %569 : vector<2x128xf32>
    %571 = vector.extract_strided_slice %564 {offsets = [0, 128], sizes = [2, 128], strides = [1, 1]} : vector<2x512xf32> to vector<2x128xf32>
    %572 = arith.negf %571 : vector<2x128xf32>
    %573 = math.exp %572 : vector<2x128xf32>
    %cst_122 = arith.constant 1.000000e+00 : f32
    %574 = vector.broadcast %cst_122 : f32 to vector<2x128xf32>
    %575 = arith.addf %574, %573 : vector<2x128xf32>
    %576 = arith.divf %574, %575 : vector<2x128xf32>
    %577 = vector.extract_strided_slice %564 {offsets = [0, 256], sizes = [2, 128], strides = [1, 1]} : vector<2x512xf32> to vector<2x128xf32>
    %578 = math.tanh %577 : vector<2x128xf32>
    %579 = vector.extract_strided_slice %564 {offsets = [0, 384], sizes = [2, 128], strides = [1, 1]} : vector<2x512xf32> to vector<2x128xf32>
    %580 = arith.negf %579 : vector<2x128xf32>
    %581 = math.exp %580 : vector<2x128xf32>
    %cst_123 = arith.constant 1.000000e+00 : f32
    %582 = vector.broadcast %cst_123 : f32 to vector<2x128xf32>
    %583 = arith.addf %582, %581 : vector<2x128xf32>
    %584 = arith.divf %582, %583 : vector<2x128xf32>
    %585 = arith.mulf %576, %512 : vector<2x128xf32>
    %586 = arith.mulf %570, %578 : vector<2x128xf32>
    %587 = arith.addf %585, %586 : vector<2x128xf32>
    %588 = math.tanh %587 : vector<2x128xf32>
    %589 = arith.mulf %584, %588 : vector<2x128xf32>
    %cst_124 = arith.constant dense<0.000000e+00> : vector<2x128xf32>
    %590 = tpu.matmul %589, %3, %cst_124 {dimension_numbers = #tpu.dot_dimension_numbers<[1], [0], [0], [1], [0, 0, 1, 1], [], []>} : vector<2x128xf32>, vector<128x128xf32>, vector<2x128xf32> -> vector<2x128xf32>
    %591 = vector.broadcast %4 : vector<1x128xf32> to vector<2x128xf32>
    %592 = arith.addf %590, %591 : vector<2x128xf32>
    %cst_125 = arith.constant dense<0xFF800000> : vector<2xf32>
    %593 = vector.multi_reduction <maximumf>, %592, %cst_125 [1] : vector<2x128xf32> to vector<2xf32>
    %594 = vector.shape_cast %593 : vector<2xf32> to vector<2x1xf32>
    %595 = vector.broadcast %594 : vector<2x1xf32> to vector<2x128xf32>
    %596 = arith.subf %592, %595 : vector<2x128xf32>
    %597 = math.exp %596 : vector<2x128xf32>
    %cst_126 = arith.constant dense<0.000000e+00> : vector<2xf32>
    %598 = vector.multi_reduction <add>, %597, %cst_126 [1] : vector<2x128xf32> to vector<2xf32>
    %599 = vector.shape_cast %598 : vector<2xf32> to vector<2x1xf32>
    %600 = vector.broadcast %599 : vector<2x1xf32> to vector<2x128xf32>
    %601 = arith.divf %597, %600 : vector<2x128xf32>
    %602 = arith.index_cast %c7_i32 : i32 to index
    %c0_127 = arith.constant 0 : index
    %c0_128 = arith.constant 0 : index
    %603 = vector.load %arg6[%602, %c0_127, %c0_128] : memref<8x2x128xf32, #tpu.memory_space<vmem>>, vector<1x2x128xf32>
    %604 = vector.shape_cast %603 : vector<1x2x128xf32> to vector<2x128xf32>
    %605 = vector.shape_cast %601 : vector<2x128xf32> to vector<1x2x128xf32>
    tpu.vector_store %arg6[%602, %c0_127, %c0_128], %605 {strides = array<i32>} : memref<8x2x128xf32, #tpu.memory_space<vmem>>, vector<1x2x128xf32>,
    %c8_i32 = arith.constant 8 : i32
    return
  }
}

</mosaic_0001>

<llo_original>
// kernel: rnn_forward.1
$region0: #{rnn_forward.1}
  #allocation0 [shape = 'u32[]', space=smem, size = 0x4, offset = 0x4, fixed_abs, tag = 'smem constant byte address 0x4 - core index']
  #allocation1 [shape = 'u32[144,128]{1,0:T(1,128)}', space=vmem, size = 0x12000, scoped, tag = 'internal scratch']
  %s0 = inlined_call_operand.vmem [shape: f32[8,2,512], index: 0, kind: input, shape index: {}]
  %s1 = inlined_call_operand.vmem [shape: f32[128,512], index: 1, kind: input, shape index: {}]
  %s2 = inlined_call_operand.vmem [shape: f32[256,512], index: 2, kind: input, shape index: {}]
  %s3 = inlined_call_operand.vmem [shape: f32[1,512], index: 3, kind: input, shape index: {}]
  %s4 = inlined_call_operand.vmem [shape: f32[128,128], index: 4, kind: input, shape index: {}]
  %s5 = inlined_call_operand.vmem [shape: f32[1,128], index: 5, kind: input, shape index: {}]
  %s6 = inlined_call_operand.hbm [shape: f32[8,2,128], index: 6, kind: output, shape index: {}]
  %s7 = sld [smem:[#allocation0]]
  $region34: #{rnn_forward.1} parent=0
    _
  %s9 = ssub.s32 1, %s7
  %s10 = scalar_select 0, %s9, %s7
  $region1: #{rnn_forward.1} parent=0
    #allocation2 [shape = 'u8[8192]{0}', space=vmem, size = 0x2000, scoped, tag = 'output window, operand 0, single buffered']
    #allocation3 [shape = 's32[1]{0}', space=sflag, size = 0x4, scoped, tag = 'scoped memory for rnn_forward.1']
    %11 = vsyncpa [#allocation3], 0
    // Predicated region
    $region2: #{rnn_forward.1} parent=1 // pred_check
      _
    $region3: #{rnn_forward.1} parent=1 // pred_check_branch
      %13 = sbr.rel (0) target = $region5
    $region4: #{rnn_forward.1} parent=1 // pred_region
      _
    $region5: #{rnn_forward.1} parent=1 // pred_fallthru
      _
    // Predicated region
    $region6: #{rnn_forward.1} parent=1 // pred_check
      _
    $region7: #{rnn_forward.1} parent=1 // pred_check_branch
      %15 = sbr.rel (0) target = $region9
    $region8: #{rnn_forward.1} parent=1 // pred_region
      _
    $region9: #{rnn_forward.1} parent=1 // pred_fallthru
      _
    // Predicated region
    $region10: #{rnn_forward.1} parent=1 // pred_check
      _
    $region11: #{rnn_forward.1} parent=1 // pred_check_branch
      %17 = sbr.rel (0) target = $region13
    $region12: #{rnn_forward.1} parent=1 // pred_region
      _
    $region13: #{rnn_forward.1} parent=1 // pred_fallthru
      _
    // Predicated region
    $region14: #{rnn_forward.1} parent=1 // pred_check
      _
    $region15: #{rnn_forward.1} parent=1 // pred_check_branch
      %19 = sbr.rel (0) target = $region17
    $region16: #{rnn_forward.1} parent=1 // pred_region
      _
    $region17: #{rnn_forward.1} parent=1 // pred_fallthru
      _
    // Predicated region
    $region18: #{rnn_forward.1} parent=1 // pred_check
      _
    $region19: #{rnn_forward.1} parent=1 // pred_check_branch
      %21 = sbr.rel (0) target = $region21
    $region20: #{rnn_forward.1} parent=1 // pred_region
      _
    $region21: #{rnn_forward.1} parent=1 // pred_fallthru
      _
    // Predicated region
    $region22: #{rnn_forward.1} parent=1 // pred_check
      _
    $region23: #{rnn_forward.1} parent=1 // pred_check_branch
      %23 = sbr.rel (0) target = $region25
    $region24: #{rnn_forward.1} parent=1 // pred_region
      _
    $region25: #{rnn_forward.1} parent=1 // pred_fallthru
      _
    %v24 = vld [vmem:[%s1] sm:$0xff]
    %v25 = vld [vmem:[%s1 + $0x8] sm:$0xff]
    %v26 = vld [vmem:[%s1 + $0x10] sm:$0xff]
    %v27 = vld [vmem:[%s1 + $0x18] sm:$0xff]
    %v28 = vld [vmem:[%s1 + $0x20] sm:$0xff]
    %v29 = vld [vmem:[%s1 + $0x28] sm:$0xff]
    %v30 = vld [vmem:[%s1 + $0x30] sm:$0xff]
    %v31 = vld [vmem:[%s1 + $0x38] sm:$0xff]
    %v32 = vld [vmem:[%s1 + $0x40] sm:$0xff]
    %v33 = vld [vmem:[%s1 + $0x48] sm:$0xff]
    %v34 = vld [vmem:[%s1 + $0x50] sm:$0xff]
    %v35 = vld [vmem:[%s1 + $0x58] sm:$0xff]
    %v36 = vld [vmem:[%s1 + $0x60] sm:$0xff]
    %v37 = vld [vmem:[%s1 + $0x68] sm:$0xff]
    %v38 = vld [vmem:[%s1 + $0x70] sm:$0xff]
    %v39 = vld [vmem:[%s1 + $0x78] sm:$0xff]
    %v40 = vld [vmem:[%s1 + $0x80] sm:$0xff]
    %v41 = vld [vmem:[%s1 + $0x88] sm:$0xff]
    %v42 = vld [vmem:[%s1 + $0x90] sm:$0xff]
    %v43 = vld [vmem:[%s1 + $0x98] sm:$0xff]
    %v44 = vld [vmem:[%s1 + $0xa0] sm:$0xff]
    %v45 = vld [vmem:[%s1 + $0xa8] sm:$0xff]
    %v46 = vld [vmem:[%s1 + $0xb0] sm:$0xff]
    %v47 = vld [vmem:[%s1 + $0xb8] sm:$0xff]
    %v48 = vld [vmem:[%s1 + $0xc0] sm:$0xff]
    %v49 = vld [vmem:[%s1 + $0xc8] sm:$0xff]
    %v50 = vld [vmem:[%s1 + $0xd0] sm:$0xff]
    %v51 = vld [vmem:[%s1 + $0xd8] sm:$0xff]
    %v52 = vld [vmem:[%s1 + $0xe0] sm:$0xff]
    %v53 = vld [vmem:[%s1 + $0xe8] sm:$0xff]
    %v54 = vld [vmem:[%s1 + $0xf0] sm:$0xff]
    %v55 = vld [vmem:[%s1 + $0xf8] sm:$0xff]
    %v56 = vld [vmem:[%s1 + $0x100] sm:$0xff]
    %v57 = vld [vmem:[%s1 + $0x108] sm:$0xff]
    %v58 = vld [vmem:[%s1 + $0x110] sm:$0xff]
    %v59 = vld [vmem:[%s1 + $0x118] sm:$0xff]
    %v60 = vld [vmem:[%s1 + $0x120] sm:$0xff]
    %v61 = vld [vmem:[%s1 + $0x128] sm:$0xff]
    %v62 = vld [vmem:[%s1 + $0x130] sm:$0xff]
    %v63 = vld [vmem:[%s1 + $0x138] sm:$0xff]
    %v64 = vld [vmem:[%s1 + $0x140] sm:$0xff]
    %v65 = vld [vmem:[%s1 + $0x148] sm:$0xff]
    %v66 = vld [vmem:[%s1 + $0x150] sm:$0xff]
    %v67 = vld [vmem:[%s1 + $0x158] sm:$0xff]
    %v68 = vld [vmem:[%s1 + $0x160] sm:$0xff]
    %v69 = vld [vmem:[%s1 + $0x168] sm:$0xff]
    %v70 = vld [vmem:[%s1 + $0x170] sm:$0xff]
    %v71 = vld [vmem:[%s1 + $0x178] sm:$0xff]
    %v72 = vld [vmem:[%s1 + $0x180] sm:$0xff]
    %v73 = vld [vmem:[%s1 + $0x188] sm:$0xff]
    %v74 = vld [vmem:[%s1 + $0x190] sm:$0xff]
    %v75 = vld [vmem:[%s1 + $0x198] sm:$0xff]
    %v76 = vld [vmem:[%s1 + $0x1a0] sm:$0xff]
    %v77 = vld [vmem:[%s1 + $0x1a8] sm:$0xff]
    %v78 = vld [vmem:[%s1 + $0x1b0] sm:$0xff]
    %v79 = vld [vmem:[%s1 + $0x1b8] sm:$0xff]
    %v80 = vld [vmem:[%s1 + $0x1c0] sm:$0xff]
    %v81 = vld [vmem:[%s1 + $0x1c8] sm:$0xff]
    %v82 = vld [vmem:[%s1 + $0x1d0] sm:$0xff]
    %v83 = vld [vmem:[%s1 + $0x1d8] sm:$0xff]
    %v84 = vld [vmem:[%s1 + $0x1e0] sm:$0xff]
    %v85 = vld [vmem:[%s1 + $0x1e8] sm:$0xff]
    %v86 = vld [vmem:[%s1 + $0x1f0] sm:$0xff]
    %v87 = vld [vmem:[%s1 + $0x1f8] sm:$0xff]
    %v88 = vld [vmem:[%s2] sm:$0xff]
    %v89 = vld [vmem:[%s2 + $0x8] sm:$0xff]
    %v90 = vld [vmem:[%s2 + $0x10] sm:$0xff]
    %v91 = vld [vmem:[%s2 + $0x18] sm:$0xff]
    %v92 = vld [vmem:[%s2 + $0x20] sm:$0xff]
    %v93 = vld [vmem:[%s2 + $0x28] sm:$0xff]
    %v94 = vld [vmem:[%s2 + $0x30] sm:$0xff]
    %v95 = vld [vmem:[%s2 + $0x38] sm:$0xff]
    %v96 = vld [vmem:[%s2 + $0x40] sm:$0xff]
    %v97 = vld [vmem:[%s2 + $0x48] sm:$0xff]
    %v98 = vld [vmem:[%s2 + $0x50] sm:$0xff]
    %v99 = vld [vmem:[%s2 + $0x58] sm:$0xff]
    %v100 = vld [vmem:[%s2 + $0x60] sm:$0xff]
    %v101 = vld [vmem:[%s2 + $0x68] sm:$0xff]
    %v102 = vld [vmem:[%s2 + $0x70] sm:$0xff]
    %v103 = vld [vmem:[%s2 + $0x78] sm:$0xff]
    %v104 = vld [vmem:[%s2 + $0x80] sm:$0xff]
    %v105 = vld [vmem:[%s2 + $0x88] sm:$0xff]
    %v106 = vld [vmem:[%s2 + $0x90] sm:$0xff]
    %v107 = vld [vmem:[%s2 + $0x98] sm:$0xff]
    %v108 = vld [vmem:[%s2 + $0xa0] sm:$0xff]
    %v109 = vld [vmem:[%s2 + $0xa8] sm:$0xff]
    %v110 = vld [vmem:[%s2 + $0xb0] sm:$0xff]
    %v111 = vld [vmem:[%s2 + $0xb8] sm:$0xff]
    %v112 = vld [vmem:[%s2 + $0xc0] sm:$0xff]
    %v113 = vld [vmem:[%s2 + $0xc8] sm:$0xff]
    %v114 = vld [vmem:[%s2 + $0xd0] sm:$0xff]
    %v115 = vld [vmem:[%s2 + $0xd8] sm:$0xff]
    %v116 = vld [vmem:[%s2 + $0xe0] sm:$0xff]
    %v117 = vld [vmem:[%s2 + $0xe8] sm:$0xff]
    %v118 = vld [vmem:[%s2 + $0xf0] sm:$0xff]
    %v119 = vld [vmem:[%s2 + $0xf8] sm:$0xff]
    %v120 = vld [vmem:[%s2 + $0x100] sm:$0xff]
    %v121 = vld [vmem:[%s2 + $0x108] sm:$0xff]
    %v122 = vld [vmem:[%s2 + $0x110] sm:$0xff]
    %v123 = vld [vmem:[%s2 + $0x118] sm:$0xff]
    %v124 = vld [vmem:[%s2 + $0x120] sm:$0xff]
    %v125 = vld [vmem:[%s2 + $0x128] sm:$0xff]
    %v126 = vld [vmem:[%s2 + $0x130] sm:$0xff]
    %v127 = vld [vmem:[%s2 + $0x138] sm:$0xff]
    %v128 = vld [vmem:[%s2 + $0x140] sm:$0xff]
    %v129 = vld [vmem:[%s2 + $0x148] sm:$0xff]
    %v130 = vld [vmem:[%s2 + $0x150] sm:$0xff]
    %v131 = vld [vmem:[%s2 + $0x158] sm:$0xff]
    %v132 = vld [vmem:[%s2 + $0x160] sm:$0xff]
    %v133 = vld [vmem:[%s2 + $0x168] sm:$0xff]
    %v134 = vld [vmem:[%s2 + $0x170] sm:$0xff]
    %v135 = vld [vmem:[%s2 + $0x178] sm:$0xff]
    %v136 = vld [vmem:[%s2 + $0x180] sm:$0xff]
    %v137 = vld [vmem:[%s2 + $0x188] sm:$0xff]
    %v138 = vld [vmem:[%s2 + $0x190] sm:$0xff]
    %v139 = vld [vmem:[%s2 + $0x198] sm:$0xff]
    %v140 = vld [vmem:[%s2 + $0x1a0] sm:$0xff]
    %v141 = vld [vmem:[%s2 + $0x1a8] sm:$0xff]
    %v142 = vld [vmem:[%s2 + $0x1b0] sm:$0xff]
    %v143 = vld [vmem:[%s2 + $0x1b8] sm:$0xff]
    %v144 = vld [vmem:[%s2 + $0x1c0] sm:$0xff]
    %v145 = vld [vmem:[%s2 + $0x1c8] sm:$0xff]
    %v146 = vld [vmem:[%s2 + $0x1d0] sm:$0xff]
    %v147 = vld [vmem:[%s2 + $0x1d8] sm:$0xff]
    %v148 = vld [vmem:[%s2 + $0x1e0] sm:$0xff]
    %v149 = vld [vmem:[%s2 + $0x1e8] sm:$0xff]
    %v150 = vld [vmem:[%s2 + $0x1f0] sm:$0xff]
    %v151 = vld [vmem:[%s2 + $0x1f8] sm:$0xff]
    %v152 = vld [vmem:[%s2 + $0x200] sm:$0xff]
    %v153 = vld [vmem:[%s2 + $0x208] sm:$0xff]
    %v154 = vld [vmem:[%s2 + $0x210] sm:$0xff]
    %v155 = vld [vmem:[%s2 + $0x218] sm:$0xff]
    %v156 = vld [vmem:[%s2 + $0x220] sm:$0xff]
    %v157 = vld [vmem:[%s2 + $0x228] sm:$0xff]
    %v158 = vld [vmem:[%s2 + $0x230] sm:$0xff]
    %v159 = vld [vmem:[%s2 + $0x238] sm:$0xff]
    %v160 = vld [vmem:[%s2 + $0x240] sm:$0xff]
    %v161 = vld [vmem:[%s2 + $0x248] sm:$0xff]
    %v162 = vld [vmem:[%s2 + $0x250] sm:$0xff]
    %v163 = vld [vmem:[%s2 + $0x258] sm:$0xff]
    %v164 = vld [vmem:[%s2 + $0x260] sm:$0xff]
    %v165 = vld [vmem:[%s2 + $0x268] sm:$0xff]
    %v166 = vld [vmem:[%s2 + $0x270] sm:$0xff]
    %v167 = vld [vmem:[%s2 + $0x278] sm:$0xff]
    %v168 = vld [vmem:[%s2 + $0x280] sm:$0xff]
    %v169 = vld [vmem:[%s2 + $0x288] sm:$0xff]
    %v170 = vld [vmem:[%s2 + $0x290] sm:$0xff]
    %v171 = vld [vmem:[%s2 + $0x298] sm:$0xff]
    %v172 = vld [vmem:[%s2 + $0x2a0] sm:$0xff]
    %v173 = vld [vmem:[%s2 + $0x2a8] sm:$0xff]
    %v174 = vld [vmem:[%s2 + $0x2b0] sm:$0xff]
    %v175 = vld [vmem:[%s2 + $0x2b8] sm:$0xff]
    %v176 = vld [vmem:[%s2 + $0x2c0] sm:$0xff]
    %v177 = vld [vmem:[%s2 + $0x2c8] sm:$0xff]
    %v178 = vld [vmem:[%s2 + $0x2d0] sm:$0xff]
    %v179 = vld [vmem:[%s2 + $0x2d8] sm:$0xff]
    %v180 = vld [vmem:[%s2 + $0x2e0] sm:$0xff]
    %v181 = vld [vmem:[%s2 + $0x2e8] sm:$0xff]
    %v182 = vld [vmem:[%s2 + $0x2f0] sm:$0xff]
    %v183 = vld [vmem:[%s2 + $0x2f8] sm:$0xff]
    %v184 = vld [vmem:[%s2 + $0x300] sm:$0xff]
    %v185 = vld [vmem:[%s2 + $0x308] sm:$0xff]
    %v186 = vld [vmem:[%s2 + $0x310] sm:$0xff]
    %v187 = vld [vmem:[%s2 + $0x318] sm:$0xff]
    %v188 = vld [vmem:[%s2 + $0x320] sm:$0xff]
    %v189 = vld [vmem:[%s2 + $0x328] sm:$0xff]
    %v190 = vld [vmem:[%s2 + $0x330] sm:$0xff]
    %v191 = vld [vmem:[%s2 + $0x338] sm:$0xff]
    %v192 = vld [vmem:[%s2 + $0x340] sm:$0xff]
    %v193 = vld [vmem:[%s2 + $0x348] sm:$0xff]
    %v194 = vld [vmem:[%s2 + $0x350] sm:$0xff]
    %v195 = vld [vmem:[%s2 + $0x358] sm:$0xff]
    %v196 = vld [vmem:[%s2 + $0x360] sm:$0xff]
    %v197 = vld [vmem:[%s2 + $0x368] sm:$0xff]
    %v198 = vld [vmem:[%s2 + $0x370] sm:$0xff]
    %v199 = vld [vmem:[%s2 + $0x378] sm:$0xff]
    %v200 = vld [vmem:[%s2 + $0x380] sm:$0xff]
    %v201 = vld [vmem:[%s2 + $0x388] sm:$0xff]
    %v202 = vld [vmem:[%s2 + $0x390] sm:$0xff]
    %v203 = vld [vmem:[%s2 + $0x398] sm:$0xff]
    %v204 = vld [vmem:[%s2 + $0x3a0] sm:$0xff]
    %v205 = vld [vmem:[%s2 + $0x3a8] sm:$0xff]
    %v206 = vld [vmem:[%s2 + $0x3b0] sm:$0xff]
    %v207 = vld [vmem:[%s2 + $0x3b8] sm:$0xff]
    %v208 = vld [vmem:[%s2 + $0x3c0] sm:$0xff]
    %v209 = vld [vmem:[%s2 + $0x3c8] sm:$0xff]
    %v210 = vld [vmem:[%s2 + $0x3d0] sm:$0xff]
    %v211 = vld [vmem:[%s2 + $0x3d8] sm:$0xff]
    %v212 = vld [vmem:[%s2 + $0x3e0] sm:$0xff]
    %v213 = vld [vmem:[%s2 + $0x3e8] sm:$0xff]
    %v214 = vld [vmem:[%s2 + $0x3f0] sm:$0xff]
    %v215 = vld [vmem:[%s2 + $0x3f8] sm:$0xff]
    %v216 = vld [vmem:[%s3] sm:$0xf]
    %v217 = vld [vmem:[%s4] sm:$0xff]
    %v218 = vld [vmem:[%s4 + $0x8] sm:$0xff]
    %v219 = vld [vmem:[%s4 + $0x10] sm:$0xff]
    %v220 = vld [vmem:[%s4 + $0x18] sm:$0xff]
    %v221 = vld [vmem:[%s4 + $0x20] sm:$0xff]
    %v222 = vld [vmem:[%s4 + $0x28] sm:$0xff]
    %v223 = vld [vmem:[%s4 + $0x30] sm:$0xff]
    %v224 = vld [vmem:[%s4 + $0x38] sm:$0xff]
    %v225 = vld [vmem:[%s4 + $0x40] sm:$0xff]
    %v226 = vld [vmem:[%s4 + $0x48] sm:$0xff]
    %v227 = vld [vmem:[%s4 + $0x50] sm:$0xff]
    %v228 = vld [vmem:[%s4 + $0x58] sm:$0xff]
    %v229 = vld [vmem:[%s4 + $0x60] sm:$0xff]
    %v230 = vld [vmem:[%s4 + $0x68] sm:$0xff]
    %v231 = vld [vmem:[%s4 + $0x70] sm:$0xff]
    %v232 = vld [vmem:[%s4 + $0x78] sm:$0xff]
    %v233 = vld [vmem:[%s5] sm:$0x1]
    %v234 = vld [vmem:[%s0] sm:$0xff]
    %235 = vmatprep.subr.mxu0 %v85
    %236 = vmatpush1.msra.mxu0 %v84
    %237 = vmatprep.subr.mxu0 %v81
    %238 = vmatpush1.msra.mxu0 %v80
    %239 = vmatprep.subr.mxu0 %v77
    %240 = vmatpush1.msra.mxu0 %v76
    %241 = vmatprep.subr.mxu0 %v73
    %242 = vmatpush1.msra.mxu0 %v72
    %243 = vmatprep.subr.mxu0 %v69
    %244 = vmatpush1.msra.mxu0 %v68
    %245 = vmatprep.subr.mxu0 %v65
    %246 = vmatpush1.msra.mxu0 %v64
    %247 = vmatprep.subr.mxu0 %v61
    %248 = vmatpush1.msra.mxu0 %v60
    %249 = vmatprep.subr.mxu0 %v57
    %250 = vmatpush1.msra.mxu0 %v56
    %251 = vmatprep.subr.mxu0 %v53
    %252 = vmatpush1.msra.mxu0 %v52
    %253 = vmatprep.subr.mxu0 %v49
    %254 = vmatpush1.msra.mxu0 %v48
    %255 = vmatprep.subr.mxu0 %v45
    %256 = vmatpush1.msra.mxu0 %v44
    %257 = vmatprep.subr.mxu0 %v41
    %258 = vmatpush1.msra.mxu0 %v40
    %259 = vmatprep.subr.mxu0 %v37
    %260 = vmatpush1.msra.mxu0 %v36
    %261 = vmatprep.subr.mxu0 %v33
    %262 = vmatpush1.msra.mxu0 %v32
    %263 = vmatprep.subr.mxu0 %v29
    %264 = vmatpush1.msra.mxu0 %v28
    %265 = vmatprep.subr.mxu0 %v25
    %266 = vmatpush1.msra.mxu0 %v24
    %267 = vmatprep.subr.mxu0 0.0
    %268 = vmatpush2.msra.mxu0 0.0
    %269 = vmatprep.subr.mxu0 0.0
    %270 = vmatpush2.msra.mxu0 0.0
    %271 = vmatprep.subr.mxu0 0.0
    %272 = vmatpush2.msra.mxu0 0.0
    %273 = vmatprep.subr.mxu0 0.0
    %274 = vmatpush2.msra.mxu0 0.0
    %275 = vmatprep.subr.mxu0 0.0
    %276 = vmatpush2.msra.mxu0 0.0
    %277 = vmatprep.subr.mxu0 0.0
    %278 = vmatpush2.msra.mxu0 0.0
    %279 = vmatprep.subr.mxu0 0.0
    %280 = vmatpush2.msra.mxu0 0.0
    %281 = vmatprep.subr.mxu0 0.0
    %282 = vmatpush2.msra.mxu0 0.0
    %283 = vmatprep.subr.mxu0 0.0
    %284 = vmatpush2.msra.mxu0 0.0
    %285 = vmatprep.subr.mxu0 0.0
    %286 = vmatpush2.msra.mxu0 0.0
    %287 = vmatprep.subr.mxu0 0.0
    %288 = vmatpush2.msra.mxu0 0.0
    %289 = vmatprep.subr.mxu0 0.0
    %290 = vmatpush2.msra.mxu0 0.0
    %291 = vmatprep.subr.mxu0 0.0
    %292 = vmatpush2.msra.mxu0 0.0
    %293 = vmatprep.subr.mxu0 0.0
    %294 = vmatpush2.msra.mxu0 0.0
    %295 = vmatprep.subr.mxu0 0.0
    %296 = vmatpush2.msra.mxu0 0.0
    %297 = vmatprep.subr.mxu0 0.0
    %298 = vmatpush2.msra.mxu0 0.0
    %299 = vmatprep.mubr.f32.mxu0 0.0
    %300 = vmatmul.mubr.f32.gmra.mxu0 0.0
    %v301 = vpop.f32.mrf.mxu0
    %v302 = vadd.f32 0.0, %v301
    %v303 = vpop.f32.mrf.mxu0
    %v304 = vadd.f32 0.0, %v303
    %305 = vdwg.mxu0
    %306 = vmatprep.subr.mxu0 %v87
    %307 = vmatpush1.msra.mxu0 %v86
    %308 = vmatprep.subr.mxu0 %v83
    %309 = vmatpush1.msra.mxu0 %v82
    %310 = vmatprep.subr.mxu0 %v79
    %311 = vmatpush1.msra.mxu0 %v78
    %312 = vmatprep.subr.mxu0 %v75
    %313 = vmatpush1.msra.mxu0 %v74
    %314 = vmatprep.subr.mxu0 %v71
    %315 = vmatpush1.msra.mxu0 %v70
    %316 = vmatprep.subr.mxu0 %v67
    %317 = vmatpush1.msra.mxu0 %v66
    %318 = vmatprep.subr.mxu0 %v63
    %319 = vmatpush1.msra.mxu0 %v62
    %320 = vmatprep.subr.mxu0 %v59
    %321 = vmatpush1.msra.mxu0 %v58
    %322 = vmatprep.subr.mxu0 %v55
    %323 = vmatpush1.msra.mxu0 %v54
    %324 = vmatprep.subr.mxu0 %v51
    %325 = vmatpush1.msra.mxu0 %v50
    %326 = vmatprep.subr.mxu0 %v47
    %327 = vmatpush1.msra.mxu0 %v46
    %328 = vmatprep.subr.mxu0 %v43
    %329 = vmatpush1.msra.mxu0 %v42
    %330 = vmatprep.subr.mxu0 %v39
    %331 = vmatpush1.msra.mxu0 %v38
    %332 = vmatprep.subr.mxu0 %v35
    %333 = vmatpush1.msra.mxu0 %v34
    %334 = vmatprep.subr.mxu0 %v31
    %335 = vmatpush1.msra.mxu0 %v30
    %336 = vmatprep.subr.mxu0 %v27
    %337 = vmatpush1.msra.mxu0 %v26
    %338 = vmatprep.subr.mxu0 0.0
    %339 = vmatpush2.msra.mxu0 0.0
    %340 = vmatprep.subr.mxu0 0.0
    %341 = vmatpush2.msra.mxu0 0.0
    %342 = vmatprep.subr.mxu0 0.0
    %343 = vmatpush2.msra.mxu0 0.0
    %344 = vmatprep.subr.mxu0 0.0
    %345 = vmatpush2.msra.mxu0 0.0
    %346 = vmatprep.subr.mxu0 0.0
    %347 = vmatpush2.msra.mxu0 0.0
    %348 = vmatprep.subr.mxu0 0.0
    %349 = vmatpush2.msra.mxu0 0.0
    %350 = vmatprep.subr.mxu0 0.0
    %351 = vmatpush2.msra.mxu0 0.0
    %352 = vmatprep.subr.mxu0 0.0
    %353 = vmatpush2.msra.mxu0 0.0
    %354 = vmatprep.subr.mxu0 0.0
    %355 = vmatpush2.msra.mxu0 0.0
    %356 = vmatprep.subr.mxu0 0.0
    %357 = vmatpush2.msra.mxu0 0.0
    %358 = vmatprep.subr.mxu0 0.0
    %359 = vmatpush2.msra.mxu0 0.0
    %360 = vmatprep.subr.mxu0 0.0
    %361 = vmatpush2.msra.mxu0 0.0
    %362 = vmatprep.subr.mxu0 0.0
    %363 = vmatpush2.msra.mxu0 0.0
    %364 = vmatprep.subr.mxu0 0.0
    %365 = vmatpush2.msra.mxu0 0.0
    %366 = vmatprep.subr.mxu0 0.0
    %367 = vmatpush2.msra.mxu0 0.0
    %368 = vmatprep.subr.mxu0 0.0
    %369 = vmatpush2.msra.mxu0 0.0
    %370 = vmatprep.mubr.f32.mxu0 0.0
    %371 = vmatmul.mubr.f32.gmra.mxu0 0.0
    %v372 = vpop.f32.mrf.mxu0
    %v373 = vadd.f32 0.0, %v372
    %v374 = vpop.f32.mrf.mxu0
    %v375 = vadd.f32 0.0, %v374
    %376 = vdwg.mxu0
    %v381 = vcombine.low %v302, %v304
    %v382 = vcombine.low %v373, %v375
    %v384 = vunpack.c.l.s4 1983009808
    %v385 = vunpack.c.0.s8 %v384
    %v386 = vlaneseq
    %v387 = vshrl.u32 %v386, 7
    %v388 = vsub.s32 %v385, %v387
    %v389 = vrot.slane %v381, %v388
    %v391 = vunpack.c.l.s4 1983009808
    %v392 = vunpack.c.0.s8 %v391
    %v393 = vlaneseq
    %v394 = vshrl.u32 %v393, 7
    %v395 = vsub.s32 %v392, %v394
    %v396 = vrot.slane %v382, %v395
    %v397 = vcombine.low %v389, %v396
    %v399 = vadd.f32 %v234, %v397
    %v400 = vxor.u32 %v399, 2147483648
    %v401 = vmul.f32 %v400, 1.442695
    %v402 = vpow.pop %v401
    %v403 = vadd.f32 %v402, 1.0
    %v404 = vrcp.pop %v403
    %v405 = vmul.f32 1.0, %v404
    %v407 = vrot.slane %v399, 2
    %v409 = vxor.u32 %v407, 2147483648
    %v410 = vmul.f32 %v409, 1.442695
    %v411 = vpow.pop %v410
    %v412 = vadd.f32 %v411, 1.0
    %v413 = vrcp.pop %v412
    %v414 = vmul.f32 1.0, %v413
    %v415 = vrot.slane %v399, 4
    %v417 = vtanh.pop %v415
    %v418 = vrot.slane %v399, 6
    %v420 = vxor.u32 %v418, 2147483648
    %v421 = vmul.f32 %v420, 1.442695
    %v422 = vpow.pop %v421
    %v423 = vadd.f32 %v422, 1.0
    %v424 = vrcp.pop %v423
    %v425 = vmul.f32 1.0, %v424
    %v426 = vmul.f32 %v414, 0.0
    %v427 = vmul.f32 %v405, %v417
    %v428 = vadd.f32 %v426, %v427
    %v429 = vtanh.pop %v428
    %v430 = vmul.f32 %v425, %v429
    %v432 = vlaneseq
    %v433 = vshrl.u32 %v432, 7
    %v434 = vsub.s32 0, %v433
    %v435 = vrot.slane %v216, %v434
    %v436 = vlaneseq
    %v437 = vshrl.u32 %v436, 7
    %v438 = vsub.s32 1, %v437
    %v439 = vrot.slane %v216, %v438
    %v440 = vlaneseq
    %v441 = vshrl.u32 %v440, 7
    %v442 = vsub.s32 2, %v441
    %v443 = vrot.slane %v216, %v442
    %v444 = vlaneseq
    %v445 = vshrl.u32 %v444, 7
    %v446 = vsub.s32 3, %v445
    %v447 = vrot.slane %v216, %v446
    %452 = vmatprep.subr.mxu0 %v149
    %453 = vmatpush1.msra.mxu0 %v148
    %454 = vmatprep.subr.mxu0 %v145
    %455 = vmatpush1.msra.mxu0 %v144
    %456 = vmatprep.subr.mxu0 %v141
    %457 = vmatpush1.msra.mxu0 %v140
    %458 = vmatprep.subr.mxu0 %v137
    %459 = vmatpush1.msra.mxu0 %v136
    %460 = vmatprep.subr.mxu0 %v133
    %461 = vmatpush1.msra.mxu0 %v132
    %462 = vmatprep.subr.mxu0 %v129
    %463 = vmatpush1.msra.mxu0 %v128
    %464 = vmatprep.subr.mxu0 %v125
    %465 = vmatpush1.msra.mxu0 %v124
    %466 = vmatprep.subr.mxu0 %v121
    %467 = vmatpush1.msra.mxu0 %v120
    %468 = vmatprep.subr.mxu0 %v117
    %469 = vmatpush1.msra.mxu0 %v116
    %470 = vmatprep.subr.mxu0 %v113
    %471 = vmatpush1.msra.mxu0 %v112
    %472 = vmatprep.subr.mxu0 %v109
    %473 = vmatpush1.msra.mxu0 %v108
    %474 = vmatprep.subr.mxu0 %v105
    %475 = vmatpush1.msra.mxu0 %v104
    %476 = vmatprep.subr.mxu0 %v101
    %477 = vmatpush1.msra.mxu0 %v100
    %478 = vmatprep.subr.mxu0 %v97
    %479 = vmatpush1.msra.mxu0 %v96
    %480 = vmatprep.subr.mxu0 %v93
    %481 = vmatpush1.msra.mxu0 %v92
    %482 = vmatprep.subr.mxu0 %v89
    %483 = vmatpush1.msra.mxu0 %v88
    %484 = vmatprep.subr.mxu0 %v213
    %485 = vmatpush2.msra.mxu0 %v212
    %486 = vmatprep.subr.mxu0 %v209
    %487 = vmatpush2.msra.mxu0 %v208
    %488 = vmatprep.subr.mxu0 %v205
    %489 = vmatpush2.msra.mxu0 %v204
    %490 = vmatprep.subr.mxu0 %v201
    %491 = vmatpush2.msra.mxu0 %v200
    %492 = vmatprep.subr.mxu0 %v197
    %493 = vmatpush2.msra.mxu0 %v196
    %494 = vmatprep.subr.mxu0 %v193
    %495 = vmatpush2.msra.mxu0 %v192
    %496 = vmatprep.subr.mxu0 %v189
    %497 = vmatpush2.msra.mxu0 %v188
    %498 = vmatprep.subr.mxu0 %v185
    %499 = vmatpush2.msra.mxu0 %v184
    %500 = vmatprep.subr.mxu0 %v181
    %501 = vmatpush2.msra.mxu0 %v180
    %502 = vmatprep.subr.mxu0 %v177
    %503 = vmatpush2.msra.mxu0 %v176
    %504 = vmatprep.subr.mxu0 %v173
    %505 = vmatpush2.msra.mxu0 %v172
    %506 = vmatprep.subr.mxu0 %v169
    %507 = vmatpush2.msra.mxu0 %v168
    %508 = vmatprep.subr.mxu0 %v165
    %509 = vmatpush2.msra.mxu0 %v164
    %510 = vmatprep.subr.mxu0 %v161
    %511 = vmatpush2.msra.mxu0 %v160
    %512 = vmatprep.subr.mxu0 %v157
    %513 = vmatpush2.msra.mxu0 %v156
    %514 = vmatprep.subr.mxu0 %v153
    %515 = vmatpush2.msra.mxu0 %v152
    %516 = vmatprep.mubr.f32.mxu0 0.0
    %517 = vmatmul.mubr.f32.gmra.mxu0 %v430
    %v518 = vpop.f32.mrf.mxu0
    %v519 = vadd.f32 %v435, %v518
    %v520 = vpop.f32.mrf.mxu0
    %v521 = vadd.f32 %v439, %v520
    %522 = vdwg.mxu0
    %523 = vmatprep.subr.mxu0 %v151
    %524 = vmatpush1.msra.mxu0 %v150
    %525 = vmatprep.subr.mxu0 %v147
    %526 = vmatpush1.msra.mxu0 %v146
    %527 = vmatprep.subr.mxu0 %v143
    %528 = vmatpush1.msra.mxu0 %v142
    %529 = vmatprep.subr.mxu0 %v139
    %530 = vmatpush1.msra.mxu0 %v138
    %531 = vmatprep.subr.mxu0 %v135
    %532 = vmatpush1.msra.mxu0 %v134
    %533 = vmatprep.subr.mxu0 %v131
    %534 = vmatpush1.msra.mxu0 %v130
    %535 = vmatprep.subr.mxu0 %v127
    %536 = vmatpush1.msra.mxu0 %v126
    %537 = vmatprep.subr.mxu0 %v123
    %538 = vmatpush1.msra.mxu0 %v122
    %539 = vmatprep.subr.mxu0 %v119
    %540 = vmatpush1.msra.mxu0 %v118
    %541 = vmatprep.subr.mxu0 %v115
    %542 = vmatpush1.msra.mxu0 %v114
    %543 = vmatprep.subr.mxu0 %v111
    %544 = vmatpush1.msra.mxu0 %v110
    %545 = vmatprep.subr.mxu0 %v107
    %546 = vmatpush1.msra.mxu0 %v106
    %547 = vmatprep.subr.mxu0 %v103
    %548 = vmatpush1.msra.mxu0 %v102
    %549 = vmatprep.subr.mxu0 %v99
    %550 = vmatpush1.msra.mxu0 %v98
    %551 = vmatprep.subr.mxu0 %v95
    %552 = vmatpush1.msra.mxu0 %v94
    %553 = vmatprep.subr.mxu0 %v91
    %554 = vmatpush1.msra.mxu0 %v90
    %555 = vmatprep.subr.mxu0 %v215
    %556 = vmatpush2.msra.mxu0 %v214
    %557 = vmatprep.subr.mxu0 %v211
    %558 = vmatpush2.msra.mxu0 %v210
    %559 = vmatprep.subr.mxu0 %v207
    %560 = vmatpush2.msra.mxu0 %v206
    %561 = vmatprep.subr.mxu0 %v203
    %562 = vmatpush2.msra.mxu0 %v202
    %563 = vmatprep.subr.mxu0 %v199
    %564 = vmatpush2.msra.mxu0 %v198
    %565 = vmatprep.subr.mxu0 %v195
    %566 = vmatpush2.msra.mxu0 %v194
    %567 = vmatprep.subr.mxu0 %v191
    %568 = vmatpush2.msra.mxu0 %v190
    %569 = vmatprep.subr.mxu0 %v187
    %570 = vmatpush2.msra.mxu0 %v186
    %571 = vmatprep.subr.mxu0 %v183
    %572 = vmatpush2.msra.mxu0 %v182
    %573 = vmatprep.subr.mxu0 %v179
    %574 = vmatpush2.msra.mxu0 %v178
    %575 = vmatprep.subr.mxu0 %v175
    %576 = vmatpush2.msra.mxu0 %v174
    %577 = vmatprep.subr.mxu0 %v171
    %578 = vmatpush2.msra.mxu0 %v170
    %579 = vmatprep.subr.mxu0 %v167
    %580 = vmatpush2.msra.mxu0 %v166
    %581 = vmatprep.subr.mxu0 %v163
    %582 = vmatpush2.msra.mxu0 %v162
    %583 = vmatprep.subr.mxu0 %v159
    %584 = vmatpush2.msra.mxu0 %v158
    %585 = vmatprep.subr.mxu0 %v155
    %586 = vmatpush2.msra.mxu0 %v154
    %587 = vmatprep.mubr.f32.mxu0 0.0
    %588 = vmatmul.mubr.f32.gmra.mxu0 %v430
    %v589 = vpop.f32.mrf.mxu0
    %v590 = vadd.f32 %v443, %v589
    %v591 = vpop.f32.mrf.mxu0
    %v592 = vadd.f32 %v447, %v591
    %593 = vdwg.mxu0
    %v594 = vxor.u32 %v519, 2147483648
    %v595 = vmul.f32 %v594, 1.442695
    %v596 = vpow.pop %v595
    %v597 = vadd.f32 %v596, 1.0
    %v598 = vrcp.pop %v597
    %v599 = vmul.f32 1.0, %v598
    %v600 = vxor.u32 %v521, 2147483648
    %v601 = vmul.f32 %v600, 1.442695
    %v602 = vpow.pop %v601
    %v603 = vadd.f32 %v602, 1.0
    %v604 = vrcp.pop %v603
    %v605 = vmul.f32 1.0, %v604
    %v606 = vtanh.pop %v590
    %v607 = vxor.u32 %v592, 2147483648
    %v608 = vmul.f32 %v607, 1.442695
    %v609 = vpow.pop %v608
    %v610 = vadd.f32 %v609, 1.0
    %v611 = vrcp.pop %v610
    %v612 = vmul.f32 1.0, %v611
    %v613 = vmul.f32 %v605, 0.0
    %v614 = vmul.f32 %v599, %v606
    %v615 = vadd.f32 %v613, %v614
    %v616 = vtanh.pop %v615
    %v617 = vmul.f32 %v612, %v616
    %v619 = vlaneseq
    %v620 = vshrl.u32 %v619, 7
    %v621 = vsub.s32 0, %v620
    %v622 = vrot.slane %v233, %v621
    %624 = vmatprep.subr.mxu0 0.0
    %625 = vmatpush1.msra.mxu0 %v232
    %626 = vmatprep.subr.mxu0 0.0
    %627 = vmatpush1.msra.mxu0 %v231
    %628 = vmatprep.subr.mxu0 0.0
    %629 = vmatpush1.msra.mxu0 %v230
    %630 = vmatprep.subr.mxu0 0.0
    %631 = vmatpush1.msra.mxu0 %v229
    %632 = vmatprep.subr.mxu0 0.0
    %633 = vmatpush1.msra.mxu0 %v228
    %634 = vmatprep.subr.mxu0 0.0
    %635 = vmatpush1.msra.mxu0 %v227
    %636 = vmatprep.subr.mxu0 0.0
    %637 = vmatpush1.msra.mxu0 %v226
    %638 = vmatprep.subr.mxu0 0.0
    %639 = vmatpush1.msra.mxu0 %v225
    %640 = vmatprep.subr.mxu0 0.0
    %641 = vmatpush1.msra.mxu0 %v224
    %642 = vmatprep.subr.mxu0 0.0
    %643 = vmatpush1.msra.mxu0 %v223
    %644 = vmatprep.subr.mxu0 0.0
    %645 = vmatpush1.msra.mxu0 %v222
    %646 = vmatprep.subr.mxu0 0.0
    %647 = vmatpush1.msra.mxu0 %v221
    %648 = vmatprep.subr.mxu0 0.0
    %649 = vmatpush1.msra.mxu0 %v220
    %650 = vmatprep.subr.mxu0 0.0
    %651 = vmatpush1.msra.mxu0 %v219
    %652 = vmatprep.subr.mxu0 0.0
    %653 = vmatpush1.msra.mxu0 %v218
    %654 = vmatprep.subr.mxu0 0.0
    %655 = vmatpush1.msra.mxu0 %v217
    %656 = vmatprep.subr.mxu0 0.0
    %657 = vmatpush2.msra.mxu0 0.0
    %658 = vmatprep.subr.mxu0 0.0
    %659 = vmatpush2.msra.mxu0 0.0
    %660 = vmatprep.subr.mxu0 0.0
    %661 = vmatpush2.msra.mxu0 0.0
    %662 = vmatprep.subr.mxu0 0.0
    %663 = vmatpush2.msra.mxu0 0.0
    %664 = vmatprep.subr.mxu0 0.0
    %665 = vmatpush2.msra.mxu0 0.0
    %666 = vmatprep.subr.mxu0 0.0
    %667 = vmatpush2.msra.mxu0 0.0
    %668 = vmatprep.subr.mxu0 0.0
    %669 = vmatpush2.msra.mxu0 0.0
    %670 = vmatprep.subr.mxu0 0.0
    %671 = vmatpush2.msra.mxu0 0.0
    %672 = vmatprep.subr.mxu0 0.0
    %673 = vmatpush2.msra.mxu0 0.0
    %674 = vmatprep.subr.mxu0 0.0
    %675 = vmatpush2.msra.mxu0 0.0
    %676 = vmatprep.subr.mxu0 0.0
    %677 = vmatpush2.msra.mxu0 0.0
    %678 = vmatprep.subr.mxu0 0.0
    %679 = vmatpush2.msra.mxu0 0.0
    %680 = vmatprep.subr.mxu0 0.0
    %681 = vmatpush2.msra.mxu0 0.0
    %682 = vmatprep.subr.mxu0 0.0
    %683 = vmatpush2.msra.mxu0 0.0
    %684 = vmatprep.subr.mxu0 0.0
    %685 = vmatpush2.msra.mxu0 0.0
    %686 = vmatprep.subr.mxu0 0.0
    %687 = vmatpush2.msra.mxu0 0.0
    %688 = vmatprep.mubr.f32.mxu0 0.0
    %689 = vmatmul.mubr.f32.gmra.mxu0 %v617
    %v690 = vpop.f32.mrf.mxu0
    %v691 = vadd.f32 %v622, %v690
    %v692 = vpop.f32.mrf.mxu0
    %693 = vdwg.mxu0
    %vm694 = vcmask 1041408
    %v695 = vsel %vm694, %v691, -inf
    %696 = vmax.xlane.f32.xlu0 %v695
    %v697 = vpop.xlane.xlu0 %696
    %v698 = vsub.f32 %v691, %v697
    %v699 = vmul.f32 %v698, 1.442695
    %v700 = vpow.pop %v699
    %v701 = vsel %vm694, %v700, 0.0
    %702 = vadd.xlane.f32.xlu0 %v701
    %v703 = vpop.xlane.xlu0 %702
    %v704 = vrcp.pop %v703
    %v705 = vmul.f32 %v700, %v704
    %706 = vst [vmem:[#allocation2] sm:$0x3] %v705
    %s707 = scalar_lea.vmem %s0, 8
    %v708 = vld [vmem:[%s707] sm:$0xff]
    %709 = vmatprep.subr.mxu0 %v85
    %710 = vmatpush1.msra.mxu0 %v84
    %711 = vmatprep.subr.mxu0 %v81
    %712 = vmatpush1.msra.mxu0 %v80
    %713 = vmatprep.subr.mxu0 %v77
    %714 = vmatpush1.msra.mxu0 %v76
    %715 = vmatprep.subr.mxu0 %v73
    %716 = vmatpush1.msra.mxu0 %v72
    %717 = vmatprep.subr.mxu0 %v69
    %718 = vmatpush1.msra.mxu0 %v68
    %719 = vmatprep.subr.mxu0 %v65
    %720 = vmatpush1.msra.mxu0 %v64
    %721 = vmatprep.subr.mxu0 %v61
    %722 = vmatpush1.msra.mxu0 %v60
    %723 = vmatprep.subr.mxu0 %v57
    %724 = vmatpush1.msra.mxu0 %v56
    %725 = vmatprep.subr.mxu0 %v53
    %726 = vmatpush1.msra.mxu0 %v52
    %727 = vmatprep.subr.mxu0 %v49
    %728 = vmatpush1.msra.mxu0 %v48
    %729 = vmatprep.subr.mxu0 %v45
    %730 = vmatpush1.msra.mxu0 %v44
    %731 = vmatprep.subr.mxu0 %v41
    %732 = vmatpush1.msra.mxu0 %v40
    %733 = vmatprep.subr.mxu0 %v37
    %734 = vmatpush1.msra.mxu0 %v36
    %735 = vmatprep.subr.mxu0 %v33
    %736 = vmatpush1.msra.mxu0 %v32
    %737 = vmatprep.subr.mxu0 %v29
    %738 = vmatpush1.msra.mxu0 %v28
    %739 = vmatprep.subr.mxu0 %v25
    %740 = vmatpush1.msra.mxu0 %v24
    %741 = vmatprep.subr.mxu0 0.0
    %742 = vmatpush2.msra.mxu0 0.0
    %743 = vmatprep.subr.mxu0 0.0
    %744 = vmatpush2.msra.mxu0 0.0
    %745 = vmatprep.subr.mxu0 0.0
    %746 = vmatpush2.msra.mxu0 0.0
    %747 = vmatprep.subr.mxu0 0.0
    %748 = vmatpush2.msra.mxu0 0.0
    %749 = vmatprep.subr.mxu0 0.0
    %750 = vmatpush2.msra.mxu0 0.0
    %751 = vmatprep.subr.mxu0 0.0
    %752 = vmatpush2.msra.mxu0 0.0
    %753 = vmatprep.subr.mxu0 0.0
    %754 = vmatpush2.msra.mxu0 0.0
    %755 = vmatprep.subr.mxu0 0.0
    %756 = vmatpush2.msra.mxu0 0.0
    %757 = vmatprep.subr.mxu0 0.0
    %758 = vmatpush2.msra.mxu0 0.0
    %759 = vmatprep.subr.mxu0 0.0
    %760 = vmatpush2.msra.mxu0 0.0
    %761 = vmatprep.subr.mxu0 0.0
    %762 = vmatpush2.msra.mxu0 0.0
    %763 = vmatprep.subr.mxu0 0.0
    %764 = vmatpush2.msra.mxu0 0.0
    %765 = vmatprep.subr.mxu0 0.0
    %766 = vmatpush2.msra.mxu0 0.0
    %767 = vmatprep.subr.mxu0 0.0
    %768 = vmatpush2.msra.mxu0 0.0
    %769 = vmatprep.subr.mxu0 0.0
    %770 = vmatpush2.msra.mxu0 0.0
    %771 = vmatprep.subr.mxu0 0.0
    %772 = vmatpush2.msra.mxu0 0.0
    %773 = vmatprep.mubr.f32.mxu0 0.0
    %774 = vmatmul.mubr.f32.gmra.mxu0 %v430
    %v775 = vpop.f32.mrf.mxu0
    %v776 = vadd.f32 0.0, %v775
    %v777 = vpop.f32.mrf.mxu0
    %v778 = vadd.f32 0.0, %v777
    %779 = vdwg.mxu0
    %780 = vmatprep.subr.mxu0 %v87
    %781 = vmatpush1.msra.mxu0 %v86
    %782 = vmatprep.subr.mxu0 %v83
    %783 = vmatpush1.msra.mxu0 %v82
    %784 = vmatprep.subr.mxu0 %v79
    %785 = vmatpush1.msra.mxu0 %v78
    %786 = vmatprep.subr.mxu0 %v75
    %787 = vmatpush1.msra.mxu0 %v74
    %788 = vmatprep.subr.mxu0 %v71
    %789 = vmatpush1.msra.mxu0 %v70
    %790 = vmatprep.subr.mxu0 %v67
    %791 = vmatpush1.msra.mxu0 %v66
    %792 = vmatprep.subr.mxu0 %v63
    %793 = vmatpush1.msra.mxu0 %v62
    %794 = vmatprep.subr.mxu0 %v59
    %795 = vmatpush1.msra.mxu0 %v58
    %796 = vmatprep.subr.mxu0 %v55
    %797 = vmatpush1.msra.mxu0 %v54
    %798 = vmatprep.subr.mxu0 %v51
    %799 = vmatpush1.msra.mxu0 %v50
    %800 = vmatprep.subr.mxu0 %v47
    %801 = vmatpush1.msra.mxu0 %v46
    %802 = vmatprep.subr.mxu0 %v43
    %803 = vmatpush1.msra.mxu0 %v42
    %804 = vmatprep.subr.mxu0 %v39
    %805 = vmatpush1.msra.mxu0 %v38
    %806 = vmatprep.subr.mxu0 %v35
    %807 = vmatpush1.msra.mxu0 %v34
    %808 = vmatprep.subr.mxu0 %v31
    %809 = vmatpush1.msra.mxu0 %v30
    %810 = vmatprep.subr.mxu0 %v27
    %811 = vmatpush1.msra.mxu0 %v26
    %812 = vmatprep.subr.mxu0 0.0
    %813 = vmatpush2.msra.mxu0 0.0
    %814 = vmatprep.subr.mxu0 0.0
    %815 = vmatpush2.msra.mxu0 0.0
    %816 = vmatprep.subr.mxu0 0.0
    %817 = vmatpush2.msra.mxu0 0.0
    %818 = vmatprep.subr.mxu0 0.0
    %819 = vmatpush2.msra.mxu0 0.0
    %820 = vmatprep.subr.mxu0 0.0
    %821 = vmatpush2.msra.mxu0 0.0
    %822 = vmatprep.subr.mxu0 0.0
    %823 = vmatpush2.msra.mxu0 0.0
    %824 = vmatprep.subr.mxu0 0.0
    %825 = vmatpush2.msra.mxu0 0.0
    %826 = vmatprep.subr.mxu0 0.0
    %827 = vmatpush2.msra.mxu0 0.0
    %828 = vmatprep.subr.mxu0 0.0
    %829 = vmatpush2.msra.mxu0 0.0
    %830 = vmatprep.subr.mxu0 0.0
    %831 = vmatpush2.msra.mxu0 0.0
    %832 = vmatprep.subr.mxu0 0.0
    %833 = vmatpush2.msra.mxu0 0.0
    %834 = vmatprep.subr.mxu0 0.0
    %835 = vmatpush2.msra.mxu0 0.0
    %836 = vmatprep.subr.mxu0 0.0
    %837 = vmatpush2.msra.mxu0 0.0
    %838 = vmatprep.subr.mxu0 0.0
    %839 = vmatpush2.msra.mxu0 0.0
    %840 = vmatprep.subr.mxu0 0.0
    %841 = vmatpush2.msra.mxu0 0.0
    %842 = vmatprep.subr.mxu0 0.0
    %843 = vmatpush2.msra.mxu0 0.0
    %844 = vmatprep.mubr.f32.mxu0 0.0
    %845 = vmatmul.mubr.f32.gmra.mxu0 %v430
    %v846 = vpop.f32.mrf.mxu0
    %v847 = vadd.f32 0.0, %v846
    %v848 = vpop.f32.mrf.mxu0
    %v849 = vadd.f32 0.0, %v848
    %850 = vdwg.mxu0
    %v855 = vcombine.low %v776, %v778
    %v856 = vcombine.low %v847, %v849
    %v858 = vunpack.c.l.s4 1983009808
    %v859 = vunpack.c.0.s8 %v858
    %v860 = vlaneseq
    %v861 = vshrl.u32 %v860, 7
    %v862 = vsub.s32 %v859, %v861
    %v863 = vrot.slane %v855, %v862
    %v865 = vunpack.c.l.s4 1983009808
    %v866 = vunpack.c.0.s8 %v865
    %v867 = vlaneseq
    %v868 = vshrl.u32 %v867, 7
    %v869 = vsub.s32 %v866, %v868
    %v870 = vrot.slane %v856, %v869
    %v871 = vcombine.low %v863, %v870
    %v873 = vadd.f32 %v708, %v871
    %v874 = vxor.u32 %v873, 2147483648
    %v875 = vmul.f32 %v874, 1.442695
    %v876 = vpow.pop %v875
    %v877 = vadd.f32 %v876, 1.0
    %v878 = vrcp.pop %v877
    %v879 = vmul.f32 1.0, %v878
    %v881 = vrot.slane %v873, 2
    %v883 = vxor.u32 %v881, 2147483648
    %v884 = vmul.f32 %v883, 1.442695
    %v885 = vpow.pop %v884
    %v886 = vadd.f32 %v885, 1.0
    %v887 = vrcp.pop %v886
    %v888 = vmul.f32 1.0, %v887
    %v889 = vrot.slane %v873, 4
    %v891 = vtanh.pop %v889
    %v892 = vrot.slane %v873, 6
    %v894 = vxor.u32 %v892, 2147483648
    %v895 = vmul.f32 %v894, 1.442695
    %v896 = vpow.pop %v895
    %v897 = vadd.f32 %v896, 1.0
    %v898 = vrcp.pop %v897
    %v899 = vmul.f32 1.0, %v898
    %v900 = vmul.f32 %v888, %v428
    %v901 = vmul.f32 %v879, %v891
    %v902 = vadd.f32 %v900, %v901
    %v903 = vtanh.pop %v902
    %v904 = vmul.f32 %v899, %v903
    %905 = vmatprep.subr.mxu0 %v149
    %906 = vmatpush1.msra.mxu0 %v148
    %907 = vmatprep.subr.mxu0 %v145
    %908 = vmatpush1.msra.mxu0 %v144
    %909 = vmatprep.subr.mxu0 %v141
    %910 = vmatpush1.msra.mxu0 %v140
    %911 = vmatprep.subr.mxu0 %v137
    %912 = vmatpush1.msra.mxu0 %v136
    %913 = vmatprep.subr.mxu0 %v133
    %914 = vmatpush1.msra.mxu0 %v132
    %915 = vmatprep.subr.mxu0 %v129
    %916 = vmatpush1.msra.mxu0 %v128
    %917 = vmatprep.subr.mxu0 %v125
    %918 = vmatpush1.msra.mxu0 %v124
    %919 = vmatprep.subr.mxu0 %v121
    %920 = vmatpush1.msra.mxu0 %v120
    %921 = vmatprep.subr.mxu0 %v117
    %922 = vmatpush1.msra.mxu0 %v116
    %923 = vmatprep.subr.mxu0 %v113
    %924 = vmatpush1.msra.mxu0 %v112
    %925 = vmatprep.subr.mxu0 %v109
    %926 = vmatpush1.msra.mxu0 %v108
    %927 = vmatprep.subr.mxu0 %v105
    %928 = vmatpush1.msra.mxu0 %v104
    %929 = vmatprep.subr.mxu0 %v101
    %930 = vmatpush1.msra.mxu0 %v100
    %931 = vmatprep.subr.mxu0 %v97
    %932 = vmatpush1.msra.mxu0 %v96
    %933 = vmatprep.subr.mxu0 %v93
    %934 = vmatpush1.msra.mxu0 %v92
    %935 = vmatprep.subr.mxu0 %v89
    %936 = vmatpush1.msra.mxu0 %v88
    %937 = vmatprep.subr.mxu0 %v213
    %938 = vmatpush2.msra.mxu0 %v212
    %939 = vmatprep.subr.mxu0 %v209
    %940 = vmatpush2.msra.mxu0 %v208
    %941 = vmatprep.subr.mxu0 %v205
    %942 = vmatpush2.msra.mxu0 %v204
    %943 = vmatprep.subr.mxu0 %v201
    %944 = vmatpush2.msra.mxu0 %v200
    %945 = vmatprep.subr.mxu0 %v197
    %946 = vmatpush2.msra.mxu0 %v196
    %947 = vmatprep.subr.mxu0 %v193
    %948 = vmatpush2.msra.mxu0 %v192
    %949 = vmatprep.subr.mxu0 %v189
    %950 = vmatpush2.msra.mxu0 %v188
    %951 = vmatprep.subr.mxu0 %v185
    %952 = vmatpush2.msra.mxu0 %v184
    %953 = vmatprep.subr.mxu0 %v181
    %954 = vmatpush2.msra.mxu0 %v180
    %955 = vmatprep.subr.mxu0 %v177
    %956 = vmatpush2.msra.mxu0 %v176
    %957 = vmatprep.subr.mxu0 %v173
    %958 = vmatpush2.msra.mxu0 %v172
    %959 = vmatprep.subr.mxu0 %v169
    %960 = vmatpush2.msra.mxu0 %v168
    %961 = vmatprep.subr.mxu0 %v165
    %962 = vmatpush2.msra.mxu0 %v164
    %963 = vmatprep.subr.mxu0 %v161
    %964 = vmatpush2.msra.mxu0 %v160
    %965 = vmatprep.subr.mxu0 %v157
    %966 = vmatpush2.msra.mxu0 %v156
    %967 = vmatprep.subr.mxu0 %v153
    %968 = vmatpush2.msra.mxu0 %v152
    %969 = vmatprep.mubr.f32.mxu0 %v617
    %970 = vmatmul.mubr.f32.gmra.mxu0 %v904
    %v971 = vpop.f32.mrf.mxu0
    %v972 = vadd.f32 %v435, %v971
    %v973 = vpop.f32.mrf.mxu0
    %v974 = vadd.f32 %v439, %v973
    %975 = vdwg.mxu0
    %976 = vmatprep.subr.mxu0 %v151
    %977 = vmatpush1.msra.mxu0 %v150
    %978 = vmatprep.subr.mxu0 %v147
    %979 = vmatpush1.msra.mxu0 %v146
    %980 = vmatprep.subr.mxu0 %v143
    %981 = vmatpush1.msra.mxu0 %v142
    %982 = vmatprep.subr.mxu0 %v139
    %983 = vmatpush1.msra.mxu0 %v138
    %984 = vmatprep.subr.mxu0 %v135
    %985 = vmatpush1.msra.mxu0 %v134
    %986 = vmatprep.subr.mxu0 %v131
    %987 = vmatpush1.msra.mxu0 %v130
    %988 = vmatprep.subr.mxu0 %v127
    %989 = vmatpush1.msra.mxu0 %v126
    %990 = vmatprep.subr.mxu0 %v123
    %991 = vmatpush1.msra.mxu0 %v122
    %992 = vmatprep.subr.mxu0 %v119
    %993 = vmatpush1.msra.mxu0 %v118
    %994 = vmatprep.subr.mxu0 %v115
    %995 = vmatpush1.msra.mxu0 %v114
    %996 = vmatprep.subr.mxu0 %v111
    %997 = vmatpush1.msra.mxu0 %v110
    %998 = vmatprep.subr.mxu0 %v107
    %999 = vmatpush1.msra.mxu0 %v106
    %1000 = vmatprep.subr.mxu0 %v103
    %1001 = vmatpush1.msra.mxu0 %v102
    %1002 = vmatprep.subr.mxu0 %v99
    %1003 = vmatpush1.msra.mxu0 %v98
    %1004 = vmatprep.subr.mxu0 %v95
    %1005 = vmatpush1.msra.mxu0 %v94
    %1006 = vmatprep.subr.mxu0 %v91
    %1007 = vmatpush1.msra.mxu0 %v90
    %1008 = vmatprep.subr.mxu0 %v215
    %1009 = vmatpush2.msra.mxu0 %v214
    %1010 = vmatprep.subr.mxu0 %v211
    %1011 = vmatpush2.msra.mxu0 %v210
    %1012 = vmatprep.subr.mxu0 %v207
    %1013 = vmatpush2.msra.mxu0 %v206
    %1014 = vmatprep.subr.mxu0 %v203
    %1015 = vmatpush2.msra.mxu0 %v202
    %1016 = vmatprep.subr.mxu0 %v199
    %1017 = vmatpush2.msra.mxu0 %v198
    %1018 = vmatprep.subr.mxu0 %v195
    %1019 = vmatpush2.msra.mxu0 %v194
    %1020 = vmatprep.subr.mxu0 %v191
    %1021 = vmatpush2.msra.mxu0 %v190
    %1022 = vmatprep.subr.mxu0 %v187
    %1023 = vmatpush2.msra.mxu0 %v186
    %1024 = vmatprep.subr.mxu0 %v183
    %1025 = vmatpush2.msra.mxu0 %v182
    %1026 = vmatprep.subr.mxu0 %v179
    %1027 = vmatpush2.msra.mxu0 %v178
    %1028 = vmatprep.subr.mxu0 %v175
    %1029 = vmatpush2.msra.mxu0 %v174
    %1030 = vmatprep.subr.mxu0 %v171
    %1031 = vmatpush2.msra.mxu0 %v170
    %1032 = vmatprep.subr.mxu0 %v167
    %1033 = vmatpush2.msra.mxu0 %v166
    %1034 = vmatprep.subr.mxu0 %v163
    %1035 = vmatpush2.msra.mxu0 %v162
    %1036 = vmatprep.subr.mxu0 %v159
    %1037 = vmatpush2.msra.mxu0 %v158
    %1038 = vmatprep.subr.mxu0 %v155
    %1039 = vmatpush2.msra.mxu0 %v154
    %1040 = vmatprep.mubr.f32.mxu0 %v617
    %1041 = vmatmul.mubr.f32.gmra.mxu0 %v904
    %v1042 = vpop.f32.mrf.mxu0
    %v1043 = vadd.f32 %v443, %v1042
    %v1044 = vpop.f32.mrf.mxu0
    %v1045 = vadd.f32 %v447, %v1044
    %1046 = vdwg.mxu0
    %v1047 = vxor.u32 %v972, 2147483648
    %v1048 = vmul.f32 %v1047, 1.442695
    %v1049 = vpow.pop %v1048
    %v1050 = vadd.f32 %v1049, 1.0
    %v1051 = vrcp.pop %v1050
    %v1052 = vmul.f32 1.0, %v1051
    %v1053 = vxor.u32 %v974, 2147483648
    %v1054 = vmul.f32 %v1053, 1.442695
    %v1055 = vpow.pop %v1054
    %v1056 = vadd.f32 %v1055, 1.0
    %v1057 = vrcp.pop %v1056
    %v1058 = vmul.f32 1.0, %v1057
    %v1059 = vtanh.pop %v1043
    %v1060 = vxor.u32 %v1045, 2147483648
    %v1061 = vmul.f32 %v1060, 1.442695
    %v1062 = vpow.pop %v1061
    %v1063 = vadd.f32 %v1062, 1.0
    %v1064 = vrcp.pop %v1063
    %v1065 = vmul.f32 1.0, %v1064
    %v1066 = vmul.f32 %v1058, %v615
    %v1067 = vmul.f32 %v1052, %v1059
    %v1068 = vadd.f32 %v1066, %v1067
    %v1069 = vtanh.pop %v1068
    %v1070 = vmul.f32 %v1065, %v1069
    %1071 = vmatprep.subr.mxu0 0.0
    %1072 = vmatpush1.msra.mxu0 %v232
    %1073 = vmatprep.subr.mxu0 0.0
    %1074 = vmatpush1.msra.mxu0 %v231
    %1075 = vmatprep.subr.mxu0 0.0
    %1076 = vmatpush1.msra.mxu0 %v230
    %1077 = vmatprep.subr.mxu0 0.0
    %1078 = vmatpush1.msra.mxu0 %v229
    %1079 = vmatprep.subr.mxu0 0.0
    %1080 = vmatpush1.msra.mxu0 %v228
    %1081 = vmatprep.subr.mxu0 0.0
    %1082 = vmatpush1.msra.mxu0 %v227
    %1083 = vmatprep.subr.mxu0 0.0
    %1084 = vmatpush1.msra.mxu0 %v226
    %1085 = vmatprep.subr.mxu0 0.0
    %1086 = vmatpush1.msra.mxu0 %v225
    %1087 = vmatprep.subr.mxu0 0.0
    %1088 = vmatpush1.msra.mxu0 %v224
    %1089 = vmatprep.subr.mxu0 0.0
    %1090 = vmatpush1.msra.mxu0 %v223
    %1091 = vmatprep.subr.mxu0 0.0
    %1092 = vmatpush1.msra.mxu0 %v222
    %1093 = vmatprep.subr.mxu0 0.0
    %1094 = vmatpush1.msra.mxu0 %v221
    %1095 = vmatprep.subr.mxu0 0.0
    %1096 = vmatpush1.msra.mxu0 %v220
    %1097 = vmatprep.subr.mxu0 0.0
    %1098 = vmatpush1.msra.mxu0 %v219
    %1099 = vmatprep.subr.mxu0 0.0
    %1100 = vmatpush1.msra.mxu0 %v218
    %1101 = vmatprep.subr.mxu0 0.0
    %1102 = vmatpush1.msra.mxu0 %v217
    %1103 = vmatprep.subr.mxu0 0.0
    %1104 = vmatpush2.msra.mxu0 0.0
    %1105 = vmatprep.subr.mxu0 0.0
    %1106 = vmatpush2.msra.mxu0 0.0
    %1107 = vmatprep.subr.mxu0 0.0
    %1108 = vmatpush2.msra.mxu0 0.0
    %1109 = vmatprep.subr.mxu0 0.0
    %1110 = vmatpush2.msra.mxu0 0.0
    %1111 = vmatprep.subr.mxu0 0.0
    %1112 = vmatpush2.msra.mxu0 0.0
    %1113 = vmatprep.subr.mxu0 0.0
    %1114 = vmatpush2.msra.mxu0 0.0
    %1115 = vmatprep.subr.mxu0 0.0
    %1116 = vmatpush2.msra.mxu0 0.0
    %1117 = vmatprep.subr.mxu0 0.0
    %1118 = vmatpush2.msra.mxu0 0.0
    %1119 = vmatprep.subr.mxu0 0.0
    %1120 = vmatpush2.msra.mxu0 0.0
    %1121 = vmatprep.subr.mxu0 0.0
    %1122 = vmatpush2.msra.mxu0 0.0
    %1123 = vmatprep.subr.mxu0 0.0
    %1124 = vmatpush2.msra.mxu0 0.0
    %1125 = vmatprep.subr.mxu0 0.0
    %1126 = vmatpush2.msra.mxu0 0.0
    %1127 = vmatprep.subr.mxu0 0.0
    %1128 = vmatpush2.msra.mxu0 0.0
    %1129 = vmatprep.subr.mxu0 0.0
    %1130 = vmatpush2.msra.mxu0 0.0
    %1131 = vmatprep.subr.mxu0 0.0
    %1132 = vmatpush2.msra.mxu0 0.0
    %1133 = vmatprep.subr.mxu0 0.0
    %1134 = vmatpush2.msra.mxu0 0.0
    %1135 = vmatprep.mubr.f32.mxu0 0.0
    %1136 = vmatmul.mubr.f32.gmra.mxu0 %v1070
    %v1137 = vpop.f32.mrf.mxu0
    %v1138 = vadd.f32 %v622, %v1137
    %v1139 = vpop.f32.mrf.mxu0
    %1140 = vdwg.mxu0
    %v1141 = vsel %vm694, %v1138, -inf
    %1142 = vmax.xlane.f32.xlu0 %v1141
    %v1143 = vpop.xlane.xlu0 %1142
    %v1144 = vsub.f32 %v1138, %v1143
    %v1145 = vmul.f32 %v1144, 1.442695
    %v1146 = vpow.pop %v1145
    %v1147 = vsel %vm694, %v1146, 0.0
    %1148 = vadd.xlane.f32.xlu0 %v1147
    %v1149 = vpop.xlane.xlu0 %1148
    %v1150 = vrcp.pop %v1149
    %v1151 = vmul.f32 %v1146, %v1150
    %s1152 = scalar_lea.vmem [#allocation2], 2
    %1153 = vst [vmem:[%s1152] sm:$0x3] %v1151
    %s1154 = scalar_lea.vmem %s0, 16
    %v1155 = vld [vmem:[%s1154] sm:$0xff]
    %1156 = vmatprep.subr.mxu0 %v85
    %1157 = vmatpush1.msra.mxu0 %v84
    %1158 = vmatprep.subr.mxu0 %v81
    %1159 = vmatpush1.msra.mxu0 %v80
    %1160 = vmatprep.subr.mxu0 %v77
    %1161 = vmatpush1.msra.mxu0 %v76
    %1162 = vmatprep.subr.mxu0 %v73
    %1163 = vmatpush1.msra.mxu0 %v72
    %1164 = vmatprep.subr.mxu0 %v69
    %1165 = vmatpush1.msra.mxu0 %v68
    %1166 = vmatprep.subr.mxu0 %v65
    %1167 = vmatpush1.msra.mxu0 %v64
    %1168 = vmatprep.subr.mxu0 %v61
    %1169 = vmatpush1.msra.mxu0 %v60
    %1170 = vmatprep.subr.mxu0 %v57
    %1171 = vmatpush1.msra.mxu0 %v56
    %1172 = vmatprep.subr.mxu0 %v53
    %1173 = vmatpush1.msra.mxu0 %v52
    %1174 = vmatprep.subr.mxu0 %v49
    %1175 = vmatpush1.msra.mxu0 %v48
    %1176 = vmatprep.subr.mxu0 %v45
    %1177 = vmatpush1.msra.mxu0 %v44
    %1178 = vmatprep.subr.mxu0 %v41
    %1179 = vmatpush1.msra.mxu0 %v40
    %1180 = vmatprep.subr.mxu0 %v37
    %1181 = vmatpush1.msra.mxu0 %v36
    %1182 = vmatprep.subr.mxu0 %v33
    %1183 = vmatpush1.msra.mxu0 %v32
    %1184 = vmatprep.subr.mxu0 %v29
    %1185 = vmatpush1.msra.mxu0 %v28
    %1186 = vmatprep.subr.mxu0 %v25
    %1187 = vmatpush1.msra.mxu0 %v24
    %1188 = vmatprep.subr.mxu0 0.0
    %1189 = vmatpush2.msra.mxu0 0.0
    %1190 = vmatprep.subr.mxu0 0.0
    %1191 = vmatpush2.msra.mxu0 0.0
    %1192 = vmatprep.subr.mxu0 0.0
    %1193 = vmatpush2.msra.mxu0 0.0
    %1194 = vmatprep.subr.mxu0 0.0
    %1195 = vmatpush2.msra.mxu0 0.0
    %1196 = vmatprep.subr.mxu0 0.0
    %1197 = vmatpush2.msra.mxu0 0.0
    %1198 = vmatprep.subr.mxu0 0.0
    %1199 = vmatpush2.msra.mxu0 0.0
    %1200 = vmatprep.subr.mxu0 0.0
    %1201 = vmatpush2.msra.mxu0 0.0
    %1202 = vmatprep.subr.mxu0 0.0
    %1203 = vmatpush2.msra.mxu0 0.0
    %1204 = vmatprep.subr.mxu0 0.0
    %1205 = vmatpush2.msra.mxu0 0.0
    %1206 = vmatprep.subr.mxu0 0.0
    %1207 = vmatpush2.msra.mxu0 0.0
    %1208 = vmatprep.subr.mxu0 0.0
    %1209 = vmatpush2.msra.mxu0 0.0
    %1210 = vmatprep.subr.mxu0 0.0
    %1211 = vmatpush2.msra.mxu0 0.0
    %1212 = vmatprep.subr.mxu0 0.0
    %1213 = vmatpush2.msra.mxu0 0.0
    %1214 = vmatprep.subr.mxu0 0.0
    %1215 = vmatpush2.msra.mxu0 0.0
    %1216 = vmatprep.subr.mxu0 0.0
    %1217 = vmatpush2.msra.mxu0 0.0
    %1218 = vmatprep.subr.mxu0 0.0
    %1219 = vmatpush2.msra.mxu0 0.0
    %1220 = vmatprep.mubr.f32.mxu0 0.0
    %1221 = vmatmul.mubr.f32.gmra.mxu0 %v904
    %v1222 = vpop.f32.mrf.mxu0
    %v1223 = vadd.f32 0.0, %v1222
    %v1224 = vpop.f32.mrf.mxu0
    %v1225 = vadd.f32 0.0, %v1224
    %1226 = vdwg.mxu0
    %1227 = vmatprep.subr.mxu0 %v87
    %1228 = vmatpush1.msra.mxu0 %v86
    %1229 = vmatprep.subr.mxu0 %v83
    %1230 = vmatpush1.msra.mxu0 %v82
    %1231 = vmatprep.subr.mxu0 %v79
    %1232 = vmatpush1.msra.mxu0 %v78
    %1233 = vmatprep.subr.mxu0 %v75
    %1234 = vmatpush1.msra.mxu0 %v74
    %1235 = vmatprep.subr.mxu0 %v71
    %1236 = vmatpush1.msra.mxu0 %v70
    %1237 = vmatprep.subr.mxu0 %v67
    %1238 = vmatpush1.msra.mxu0 %v66
    %1239 = vmatprep.subr.mxu0 %v63
    %1240 = vmatpush1.msra.mxu0 %v62
    %1241 = vmatprep.subr.mxu0 %v59
    %1242 = vmatpush1.msra.mxu0 %v58
    %1243 = vmatprep.subr.mxu0 %v55
    %1244 = vmatpush1.msra.mxu0 %v54
    %1245 = vmatprep.subr.mxu0 %v51
    %1246 = vmatpush1.msra.mxu0 %v50
    %1247 = vmatprep.subr.mxu0 %v47
    %1248 = vmatpush1.msra.mxu0 %v46
    %1249 = vmatprep.subr.mxu0 %v43
    %1250 = vmatpush1.msra.mxu0 %v42
    %1251 = vmatprep.subr.mxu0 %v39
    %1252 = vmatpush1.msra.mxu0 %v38
    %1253 = vmatprep.subr.mxu0 %v35
    %1254 = vmatpush1.msra.mxu0 %v34
    %1255 = vmatprep.subr.mxu0 %v31
    %1256 = vmatpush1.msra.mxu0 %v30
    %1257 = vmatprep.subr.mxu0 %v27
    %1258 = vmatpush1.msra.mxu0 %v26
    %1259 = vmatprep.subr.mxu0 0.0
    %1260 = vmatpush2.msra.mxu0 0.0
    %1261 = vmatprep.subr.mxu0 0.0
    %1262 = vmatpush2.msra.mxu0 0.0
    %1263 = vmatprep.subr.mxu0 0.0
    %1264 = vmatpush2.msra.mxu0 0.0
    %1265 = vmatprep.subr.mxu0 0.0
    %1266 = vmatpush2.msra.mxu0 0.0
    %1267 = vmatprep.subr.mxu0 0.0
    %1268 = vmatpush2.msra.mxu0 0.0
    %1269 = vmatprep.subr.mxu0 0.0
    %1270 = vmatpush2.msra.mxu0 0.0
    %1271 = vmatprep.subr.mxu0 0.0
    %1272 = vmatpush2.msra.mxu0 0.0
    %1273 = vmatprep.subr.mxu0 0.0
    %1274 = vmatpush2.msra.mxu0 0.0
    %1275 = vmatprep.subr.mxu0 0.0
    %1276 = vmatpush2.msra.mxu0 0.0
    %1277 = vmatprep.subr.mxu0 0.0
    %1278 = vmatpush2.msra.mxu0 0.0
    %1279 = vmatprep.subr.mxu0 0.0
    %1280 = vmatpush2.msra.mxu0 0.0
    %1281 = vmatprep.subr.mxu0 0.0
    %1282 = vmatpush2.msra.mxu0 0.0
    %1283 = vmatprep.subr.mxu0 0.0
    %1284 = vmatpush2.msra.mxu0 0.0
    %1285 = vmatprep.subr.mxu0 0.0
    %1286 = vmatpush2.msra.mxu0 0.0
    %1287 = vmatprep.subr.mxu0 0.0
    %1288 = vmatpush2.msra.mxu0 0.0
    %1289 = vmatprep.subr.mxu0 0.0
    %1290 = vmatpush2.msra.mxu0 0.0
    %1291 = vmatprep.mubr.f32.mxu0 0.0
    %1292 = vmatmul.mubr.f32.gmra.mxu0 %v904
    %v1293 = vpop.f32.mrf.mxu0
    %v1294 = vadd.f32 0.0, %v1293
    %v1295 = vpop.f32.mrf.mxu0
    %v1296 = vadd.f32 0.0, %v1295
    %1297 = vdwg.mxu0
    %v1302 = vcombine.low %v1223, %v1225
    %v1303 = vcombine.low %v1294, %v1296
    %v1305 = vunpack.c.l.s4 1983009808
    %v1306 = vunpack.c.0.s8 %v1305
    %v1307 = vlaneseq
    %v1308 = vshrl.u32 %v1307, 7
    %v1309 = vsub.s32 %v1306, %v1308
    %v1310 = vrot.slane %v1302, %v1309
    %v1312 = vunpack.c.l.s4 1983009808
    %v1313 = vunpack.c.0.s8 %v1312
    %v1314 = vlaneseq
    %v1315 = vshrl.u32 %v1314, 7
    %v1316 = vsub.s32 %v1313, %v1315
    %v1317 = vrot.slane %v1303, %v1316
    %v1318 = vcombine.low %v1310, %v1317
    %v1320 = vadd.f32 %v1155, %v1318
    %v1321 = vxor.u32 %v1320, 2147483648
    %v1322 = vmul.f32 %v1321, 1.442695
    %v1323 = vpow.pop %v1322
    %v1324 = vadd.f32 %v1323, 1.0
    %v1325 = vrcp.pop %v1324
    %v1326 = vmul.f32 1.0, %v1325
    %v1328 = vrot.slane %v1320, 2
    %v1330 = vxor.u32 %v1328, 2147483648
    %v1331 = vmul.f32 %v1330, 1.442695
    %v1332 = vpow.pop %v1331
    %v1333 = vadd.f32 %v1332, 1.0
    %v1334 = vrcp.pop %v1333
    %v1335 = vmul.f32 1.0, %v1334
    %v1336 = vrot.slane %v1320, 4
    %v1338 = vtanh.pop %v1336
    %v1339 = vrot.slane %v1320, 6
    %v1341 = vxor.u32 %v1339, 2147483648
    %v1342 = vmul.f32 %v1341, 1.442695
    %v1343 = vpow.pop %v1342
    %v1344 = vadd.f32 %v1343, 1.0
    %v1345 = vrcp.pop %v1344
    %v1346 = vmul.f32 1.0, %v1345
    %v1347 = vmul.f32 %v1335, %v902
    %v1348 = vmul.f32 %v1326, %v1338
    %v1349 = vadd.f32 %v1347, %v1348
    %v1350 = vtanh.pop %v1349
    %v1351 = vmul.f32 %v1346, %v1350
    %1352 = vmatprep.subr.mxu0 %v149
    %1353 = vmatpush1.msra.mxu0 %v148
    %1354 = vmatprep.subr.mxu0 %v145
    %1355 = vmatpush1.msra.mxu0 %v144
    %1356 = vmatprep.subr.mxu0 %v141
    %1357 = vmatpush1.msra.mxu0 %v140
    %1358 = vmatprep.subr.mxu0 %v137
    %1359 = vmatpush1.msra.mxu0 %v136
    %1360 = vmatprep.subr.mxu0 %v133
    %1361 = vmatpush1.msra.mxu0 %v132
    %1362 = vmatprep.subr.mxu0 %v129
    %1363 = vmatpush1.msra.mxu0 %v128
    %1364 = vmatprep.subr.mxu0 %v125
    %1365 = vmatpush1.msra.mxu0 %v124
    %1366 = vmatprep.subr.mxu0 %v121
    %1367 = vmatpush1.msra.mxu0 %v120
    %1368 = vmatprep.subr.mxu0 %v117
    %1369 = vmatpush1.msra.mxu0 %v116
    %1370 = vmatprep.subr.mxu0 %v113
    %1371 = vmatpush1.msra.mxu0 %v112
    %1372 = vmatprep.subr.mxu0 %v109
    %1373 = vmatpush1.msra.mxu0 %v108
    %1374 = vmatprep.subr.mxu0 %v105
    %1375 = vmatpush1.msra.mxu0 %v104
    %1376 = vmatprep.subr.mxu0 %v101
    %1377 = vmatpush1.msra.mxu0 %v100
    %1378 = vmatprep.subr.mxu0 %v97
    %1379 = vmatpush1.msra.mxu0 %v96
    %1380 = vmatprep.subr.mxu0 %v93
    %1381 = vmatpush1.msra.mxu0 %v92
    %1382 = vmatprep.subr.mxu0 %v89
    %1383 = vmatpush1.msra.mxu0 %v88
    %1384 = vmatprep.subr.mxu0 %v213
    %1385 = vmatpush2.msra.mxu0 %v212
    %1386 = vmatprep.subr.mxu0 %v209
    %1387 = vmatpush2.msra.mxu0 %v208
    %1388 = vmatprep.subr.mxu0 %v205
    %1389 = vmatpush2.msra.mxu0 %v204
    %1390 = vmatprep.subr.mxu0 %v201
    %1391 = vmatpush2.msra.mxu0 %v200
    %1392 = vmatprep.subr.mxu0 %v197
    %1393 = vmatpush2.msra.mxu0 %v196
    %1394 = vmatprep.subr.mxu0 %v193
    %1395 = vmatpush2.msra.mxu0 %v192
    %1396 = vmatprep.subr.mxu0 %v189
    %1397 = vmatpush2.msra.mxu0 %v188
    %1398 = vmatprep.subr.mxu0 %v185
    %1399 = vmatpush2.msra.mxu0 %v184
    %1400 = vmatprep.subr.mxu0 %v181
    %1401 = vmatpush2.msra.mxu0 %v180
    %1402 = vmatprep.subr.mxu0 %v177
    %1403 = vmatpush2.msra.mxu0 %v176
    %1404 = vmatprep.subr.mxu0 %v173
    %1405 = vmatpush2.msra.mxu0 %v172
    %1406 = vmatprep.subr.mxu0 %v169
    %1407 = vmatpush2.msra.mxu0 %v168
    %1408 = vmatprep.subr.mxu0 %v165
    %1409 = vmatpush2.msra.mxu0 %v164
    %1410 = vmatprep.subr.mxu0 %v161
    %1411 = vmatpush2.msra.mxu0 %v160
    %1412 = vmatprep.subr.mxu0 %v157
    %1413 = vmatpush2.msra.mxu0 %v156
    %1414 = vmatprep.subr.mxu0 %v153
    %1415 = vmatpush2.msra.mxu0 %v152
    %1416 = vmatprep.mubr.f32.mxu0 %v1070
    %1417 = vmatmul.mubr.f32.gmra.mxu0 %v1351
    %v1418 = vpop.f32.mrf.mxu0
    %v1419 = vadd.f32 %v435, %v1418
    %v1420 = vpop.f32.mrf.mxu0
    %v1421 = vadd.f32 %v439, %v1420
    %1422 = vdwg.mxu0
    %1423 = vmatprep.subr.mxu0 %v151
    %1424 = vmatpush1.msra.mxu0 %v150
    %1425 = vmatprep.subr.mxu0 %v147
    %1426 = vmatpush1.msra.mxu0 %v146
    %1427 = vmatprep.subr.mxu0 %v143
    %1428 = vmatpush1.msra.mxu0 %v142
    %1429 = vmatprep.subr.mxu0 %v139
    %1430 = vmatpush1.msra.mxu0 %v138
    %1431 = vmatprep.subr.mxu0 %v135
    %1432 = vmatpush1.msra.mxu0 %v134
    %1433 = vmatprep.subr.mxu0 %v131
    %1434 = vmatpush1.msra.mxu0 %v130
    %1435 = vmatprep.subr.mxu0 %v127
    %1436 = vmatpush1.msra.mxu0 %v126
    %1437 = vmatprep.subr.mxu0 %v123
    %1438 = vmatpush1.msra.mxu0 %v122
    %1439 = vmatprep.subr.mxu0 %v119
    %1440 = vmatpush1.msra.mxu0 %v118
    %1441 = vmatprep.subr.mxu0 %v115
    %1442 = vmatpush1.msra.mxu0 %v114
    %1443 = vmatprep.subr.mxu0 %v111
    %1444 = vmatpush1.msra.mxu0 %v110
    %1445 = vmatprep.subr.mxu0 %v107
    %1446 = vmatpush1.msra.mxu0 %v106
    %1447 = vmatprep.subr.mxu0 %v103
    %1448 = vmatpush1.msra.mxu0 %v102
    %1449 = vmatprep.subr.mxu0 %v99
    %1450 = vmatpush1.msra.mxu0 %v98
    %1451 = vmatprep.subr.mxu0 %v95
    %1452 = vmatpush1.msra.mxu0 %v94
    %1453 = vmatprep.subr.mxu0 %v91
    %1454 = vmatpush1.msra.mxu0 %v90
    %1455 = vmatprep.subr.mxu0 %v215
    %1456 = vmatpush2.msra.mxu0 %v214
    %1457 = vmatprep.subr.mxu0 %v211
    %1458 = vmatpush2.msra.mxu0 %v210
    %1459 = vmatprep.subr.mxu0 %v207
    %1460 = vmatpush2.msra.mxu0 %v206
    %1461 = vmatprep.subr.mxu0 %v203
    %1462 = vmatpush2.msra.mxu0 %v202
    %1463 = vmatprep.subr.mxu0 %v199
    %1464 = vmatpush2.msra.mxu0 %v198
    %1465 = vmatprep.subr.mxu0 %v195
    %1466 = vmatpush2.msra.mxu0 %v194
    %1467 = vmatprep.subr.mxu0 %v191
    %1468 = vmatpush2.msra.mxu0 %v190
    %1469 = vmatprep.subr.mxu0 %v187
    %1470 = vmatpush2.msra.mxu0 %v186
    %1471 = vmatprep.subr.mxu0 %v183
    %1472 = vmatpush2.msra.mxu0 %v182
    %1473 = vmatprep.subr.mxu0 %v179
    %1474 = vmatpush2.msra.mxu0 %v178
    %1475 = vmatprep.subr.mxu0 %v175
    %1476 = vmatpush2.msra.mxu0 %v174
    %1477 = vmatprep.subr.mxu0 %v171
    %1478 = vmatpush2.msra.mxu0 %v170
    %1479 = vmatprep.subr.mxu0 %v167
    %1480 = vmatpush2.msra.mxu0 %v166
    %1481 = vmatprep.subr.mxu0 %v163
    %1482 = vmatpush2.msra.mxu0 %v162
    %1483 = vmatprep.subr.mxu0 %v159
    %1484 = vmatpush2.msra.mxu0 %v158
    %1485 = vmatprep.subr.mxu0 %v155
    %1486 = vmatpush2.msra.mxu0 %v154
    %1487 = vmatprep.mubr.f32.mxu0 %v1070
    %1488 = vmatmul.mubr.f32.gmra.mxu0 %v1351
    %v1489 = vpop.f32.mrf.mxu0
    %v1490 = vadd.f32 %v443, %v1489
    %v1491 = vpop.f32.mrf.mxu0
    %v1492 = vadd.f32 %v447, %v1491
    %1493 = vdwg.mxu0
    %v1494 = vxor.u32 %v1419, 2147483648
    %v1495 = vmul.f32 %v1494, 1.442695
    %v1496 = vpow.pop %v1495
    %v1497 = vadd.f32 %v1496, 1.0
    %v1498 = vrcp.pop %v1497
    %v1499 = vmul.f32 1.0, %v1498
    %v1500 = vxor.u32 %v1421, 2147483648
    %v1501 = vmul.f32 %v1500, 1.442695
    %v1502 = vpow.pop %v1501
    %v1503 = vadd.f32 %v1502, 1.0
    %v1504 = vrcp.pop %v1503
    %v1505 = vmul.f32 1.0, %v1504
    %v1506 = vtanh.pop %v1490
    %v1507 = vxor.u32 %v1492, 2147483648
    %v1508 = vmul.f32 %v1507, 1.442695
    %v1509 = vpow.pop %v1508
    %v1510 = vadd.f32 %v1509, 1.0
    %v1511 = vrcp.pop %v1510
    %v1512 = vmul.f32 1.0, %v1511
    %v1513 = vmul.f32 %v1505, %v1068
    %v1514 = vmul.f32 %v1499, %v1506
    %v1515 = vadd.f32 %v1513, %v1514
    %v1516 = vtanh.pop %v1515
    %v1517 = vmul.f32 %v1512, %v1516
    %1518 = vmatprep.subr.mxu0 0.0
    %1519 = vmatpush1.msra.mxu0 %v232
    %1520 = vmatprep.subr.mxu0 0.0
    %1521 = vmatpush1.msra.mxu0 %v231
    %1522 = vmatprep.subr.mxu0 0.0
    %1523 = vmatpush1.msra.mxu0 %v230
    %1524 = vmatprep.subr.mxu0 0.0
    %1525 = vmatpush1.msra.mxu0 %v229
    %1526 = vmatprep.subr.mxu0 0.0
    %1527 = vmatpush1.msra.mxu0 %v228
    %1528 = vmatprep.subr.mxu0 0.0
    %1529 = vmatpush1.msra.mxu0 %v227
    %1530 = vmatprep.subr.mxu0 0.0
    %1531 = vmatpush1.msra.mxu0 %v226
    %1532 = vmatprep.subr.mxu0 0.0
    %1533 = vmatpush1.msra.mxu0 %v225
    %1534 = vmatprep.subr.mxu0 0.0
    %1535 = vmatpush1.msra.mxu0 %v224
    %1536 = vmatprep.subr.mxu0 0.0
    %1537 = vmatpush1.msra.mxu0 %v223
    %1538 = vmatprep.subr.mxu0 0.0
    %1539 = vmatpush1.msra.mxu0 %v222
    %1540 = vmatprep.subr.mxu0 0.0
    %1541 = vmatpush1.msra.mxu0 %v221
    %1542 = vmatprep.subr.mxu0 0.0
    %1543 = vmatpush1.msra.mxu0 %v220
    %1544 = vmatprep.subr.mxu0 0.0
    %1545 = vmatpush1.msra.mxu0 %v219
    %1546 = vmatprep.subr.mxu0 0.0
    %1547 = vmatpush1.msra.mxu0 %v218
    %1548 = vmatprep.subr.mxu0 0.0
    %1549 = vmatpush1.msra.mxu0 %v217
    %1550 = vmatprep.subr.mxu0 0.0
    %1551 = vmatpush2.msra.mxu0 0.0
    %1552 = vmatprep.subr.mxu0 0.0
    %1553 = vmatpush2.msra.mxu0 0.0
    %1554 = vmatprep.subr.mxu0 0.0
    %1555 = vmatpush2.msra.mxu0 0.0
    %1556 = vmatprep.subr.mxu0 0.0
    %1557 = vmatpush2.msra.mxu0 0.0
    %1558 = vmatprep.subr.mxu0 0.0
    %1559 = vmatpush2.msra.mxu0 0.0
    %1560 = vmatprep.subr.mxu0 0.0
    %1561 = vmatpush2.msra.mxu0 0.0
    %1562 = vmatprep.subr.mxu0 0.0
    %1563 = vmatpush2.msra.mxu0 0.0
    %1564 = vmatprep.subr.mxu0 0.0
    %1565 = vmatpush2.msra.mxu0 0.0
    %1566 = vmatprep.subr.mxu0 0.0
    %1567 = vmatpush2.msra.mxu0 0.0
    %1568 = vmatprep.subr.mxu0 0.0
    %1569 = vmatpush2.msra.mxu0 0.0
    %1570 = vmatprep.subr.mxu0 0.0
    %1571 = vmatpush2.msra.mxu0 0.0
    %1572 = vmatprep.subr.mxu0 0.0
    %1573 = vmatpush2.msra.mxu0 0.0
    %1574 = vmatprep.subr.mxu0 0.0
    %1575 = vmatpush2.msra.mxu0 0.0
    %1576 = vmatprep.subr.mxu0 0.0
    %1577 = vmatpush2.msra.mxu0 0.0
    %1578 = vmatprep.subr.mxu0 0.0
    %1579 = vmatpush2.msra.mxu0 0.0
    %1580 = vmatprep.subr.mxu0 0.0
    %1581 = vmatpush2.msra.mxu0 0.0
    %1582 = vmatprep.mubr.f32.mxu0 0.0
    %1583 = vmatmul.mubr.f32.gmra.mxu0 %v1517
    %v1584 = vpop.f32.mrf.mxu0
    %v1585 = vadd.f32 %v622, %v1584
    %v1586 = vpop.f32.mrf.mxu0
    %1587 = vdwg.mxu0
    %v1588 = vsel %vm694, %v1585, -inf
    %1589 = vmax.xlane.f32.xlu0 %v1588
    %v1590 = vpop.xlane.xlu0 %1589
    %v1591 = vsub.f32 %v1585, %v1590
    %v1592 = vmul.f32 %v1591, 1.442695
    %v1593 = vpow.pop %v1592
    %v1594 = vsel %vm694, %v1593, 0.0
    %1595 = vadd.xlane.f32.xlu0 %v1594
    %v1596 = vpop.xlane.xlu0 %1595
    %v1597 = vrcp.pop %v1596
    %v1598 = vmul.f32 %v1593, %v1597
    %s1599 = scalar_lea.vmem [#allocation2], 4
    %1600 = vst [vmem:[%s1599] sm:$0x3] %v1598
    %s1601 = scalar_lea.vmem %s0, 24
    %v1602 = vld [vmem:[%s1601] sm:$0xff]
    %1603 = vmatprep.subr.mxu0 %v85
    %1604 = vmatpush1.msra.mxu0 %v84
    %1605 = vmatprep.subr.mxu0 %v81
    %1606 = vmatpush1.msra.mxu0 %v80
    %1607 = vmatprep.subr.mxu0 %v77
    %1608 = vmatpush1.msra.mxu0 %v76
    %1609 = vmatprep.subr.mxu0 %v73
    %1610 = vmatpush1.msra.mxu0 %v72
    %1611 = vmatprep.subr.mxu0 %v69
    %1612 = vmatpush1.msra.mxu0 %v68
    %1613 = vmatprep.subr.mxu0 %v65
    %1614 = vmatpush1.msra.mxu0 %v64
    %1615 = vmatprep.subr.mxu0 %v61
    %1616 = vmatpush1.msra.mxu0 %v60
    %1617 = vmatprep.subr.mxu0 %v57
    %1618 = vmatpush1.msra.mxu0 %v56
    %1619 = vmatprep.subr.mxu0 %v53
    %1620 = vmatpush1.msra.mxu0 %v52
    %1621 = vmatprep.subr.mxu0 %v49
    %1622 = vmatpush1.msra.mxu0 %v48
    %1623 = vmatprep.subr.mxu0 %v45
    %1624 = vmatpush1.msra.mxu0 %v44
    %1625 = vmatprep.subr.mxu0 %v41
    %1626 = vmatpush1.msra.mxu0 %v40
    %1627 = vmatprep.subr.mxu0 %v37
    %1628 = vmatpush1.msra.mxu0 %v36
    %1629 = vmatprep.subr.mxu0 %v33
    %1630 = vmatpush1.msra.mxu0 %v32
    %1631 = vmatprep.subr.mxu0 %v29
    %1632 = vmatpush1.msra.mxu0 %v28
    %1633 = vmatprep.subr.mxu0 %v25
    %1634 = vmatpush1.msra.mxu0 %v24
    %1635 = vmatprep.subr.mxu0 0.0
    %1636 = vmatpush2.msra.mxu0 0.0
    %1637 = vmatprep.subr.mxu0 0.0
    %1638 = vmatpush2.msra.mxu0 0.0
    %1639 = vmatprep.subr.mxu0 0.0
    %1640 = vmatpush2.msra.mxu0 0.0
    %1641 = vmatprep.subr.mxu0 0.0
    %1642 = vmatpush2.msra.mxu0 0.0
    %1643 = vmatprep.subr.mxu0 0.0
    %1644 = vmatpush2.msra.mxu0 0.0
    %1645 = vmatprep.subr.mxu0 0.0
    %1646 = vmatpush2.msra.mxu0 0.0
    %1647 = vmatprep.subr.mxu0 0.0
    %1648 = vmatpush2.msra.mxu0 0.0
    %1649 = vmatprep.subr.mxu0 0.0
    %1650 = vmatpush2.msra.mxu0 0.0
    %1651 = vmatprep.subr.mxu0 0.0
    %1652 = vmatpush2.msra.mxu0 0.0
    %1653 = vmatprep.subr.mxu0 0.0
    %1654 = vmatpush2.msra.mxu0 0.0
    %1655 = vmatprep.subr.mxu0 0.0
    %1656 = vmatpush2.msra.mxu0 0.0
    %1657 = vmatprep.subr.mxu0 0.0
    %1658 = vmatpush2.msra.mxu0 0.0
    %1659 = vmatprep.subr.mxu0 0.0
    %1660 = vmatpush2.msra.mxu0 0.0
    %1661 = vmatprep.subr.mxu0 0.0
    %1662 = vmatpush2.msra.mxu0 0.0
    %1663 = vmatprep.subr.mxu0 0.0
    %1664 = vmatpush2.msra.mxu0 0.0
    %1665 = vmatprep.subr.mxu0 0.0
    %1666 = vmatpush2.msra.mxu0 0.0
    %1667 = vmatprep.mubr.f32.mxu0 0.0
    %1668 = vmatmul.mubr.f32.gmra.mxu0 %v1351
    %v1669 = vpop.f32.mrf.mxu0
    %v1670 = vadd.f32 0.0, %v1669
    %v1671 = vpop.f32.mrf.mxu0
    %v1672 = vadd.f32 0.0, %v1671
    %1673 = vdwg.mxu0
    %1674 = vmatprep.subr.mxu0 %v87
    %1675 = vmatpush1.msra.mxu0 %v86
    %1676 = vmatprep.subr.mxu0 %v83
    %1677 = vmatpush1.msra.mxu0 %v82
    %1678 = vmatprep.subr.mxu0 %v79
    %1679 = vmatpush1.msra.mxu0 %v78
    %1680 = vmatprep.subr.mxu0 %v75
    %1681 = vmatpush1.msra.mxu0 %v74
    %1682 = vmatprep.subr.mxu0 %v71
    %1683 = vmatpush1.msra.mxu0 %v70
    %1684 = vmatprep.subr.mxu0 %v67
    %1685 = vmatpush1.msra.mxu0 %v66
    %1686 = vmatprep.subr.mxu0 %v63
    %1687 = vmatpush1.msra.mxu0 %v62
    %1688 = vmatprep.subr.mxu0 %v59
    %1689 = vmatpush1.msra.mxu0 %v58
    %1690 = vmatprep.subr.mxu0 %v55
    %1691 = vmatpush1.msra.mxu0 %v54
    %1692 = vmatprep.subr.mxu0 %v51
    %1693 = vmatpush1.msra.mxu0 %v50
    %1694 = vmatprep.subr.mxu0 %v47
    %1695 = vmatpush1.msra.mxu0 %v46
    %1696 = vmatprep.subr.mxu0 %v43
    %1697 = vmatpush1.msra.mxu0 %v42
    %1698 = vmatprep.subr.mxu0 %v39
    %1699 = vmatpush1.msra.mxu0 %v38
    %1700 = vmatprep.subr.mxu0 %v35
    %1701 = vmatpush1.msra.mxu0 %v34
    %1702 = vmatprep.subr.mxu0 %v31
    %1703 = vmatpush1.msra.mxu0 %v30
    %1704 = vmatprep.subr.mxu0 %v27
    %1705 = vmatpush1.msra.mxu0 %v26
    %1706 = vmatprep.subr.mxu0 0.0
    %1707 = vmatpush2.msra.mxu0 0.0
    %1708 = vmatprep.subr.mxu0 0.0
    %1709 = vmatpush2.msra.mxu0 0.0
    %1710 = vmatprep.subr.mxu0 0.0
    %1711 = vmatpush2.msra.mxu0 0.0
    %1712 = vmatprep.subr.mxu0 0.0
    %1713 = vmatpush2.msra.mxu0 0.0
    %1714 = vmatprep.subr.mxu0 0.0
    %1715 = vmatpush2.msra.mxu0 0.0
    %1716 = vmatprep.subr.mxu0 0.0
    %1717 = vmatpush2.msra.mxu0 0.0
    %1718 = vmatprep.subr.mxu0 0.0
    %1719 = vmatpush2.msra.mxu0 0.0
    %1720 = vmatprep.subr.mxu0 0.0
    %1721 = vmatpush2.msra.mxu0 0.0
    %1722 = vmatprep.subr.mxu0 0.0
    %1723 = vmatpush2.msra.mxu0 0.0
    %1724 = vmatprep.subr.mxu0 0.0
    %1725 = vmatpush2.msra.mxu0 0.0
    %1726 = vmatprep.subr.mxu0 0.0
    %1727 = vmatpush2.msra.mxu0 0.0
    %1728 = vmatprep.subr.mxu0 0.0
    %1729 = vmatpush2.msra.mxu0 0.0
    %1730 = vmatprep.subr.mxu0 0.0
    %1731 = vmatpush2.msra.mxu0 0.0
    %1732 = vmatprep.subr.mxu0 0.0
    %1733 = vmatpush2.msra.mxu0 0.0
    %1734 = vmatprep.subr.mxu0 0.0
    %1735 = vmatpush2.msra.mxu0 0.0
    %1736 = vmatprep.subr.mxu0 0.0
    %1737 = vmatpush2.msra.mxu0 0.0
    %1738 = vmatprep.mubr.f32.mxu0 0.0
    %1739 = vmatmul.mubr.f32.gmra.mxu0 %v1351
    %v1740 = vpop.f32.mrf.mxu0
    %v1741 = vadd.f32 0.0, %v1740
    %v1742 = vpop.f32.mrf.mxu0
    %v1743 = vadd.f32 0.0, %v1742
    %1744 = vdwg.mxu0
    %v1749 = vcombine.low %v1670, %v1672
    %v1750 = vcombine.low %v1741, %v1743
    %v1752 = vunpack.c.l.s4 1983009808
    %v1753 = vunpack.c.0.s8 %v1752
    %v1754 = vlaneseq
    %v1755 = vshrl.u32 %v1754, 7
    %v1756 = vsub.s32 %v1753, %v1755
    %v1757 = vrot.slane %v1749, %v1756
    %v1759 = vunpack.c.l.s4 1983009808
    %v1760 = vunpack.c.0.s8 %v1759
    %v1761 = vlaneseq
    %v1762 = vshrl.u32 %v1761, 7
    %v1763 = vsub.s32 %v1760, %v1762
    %v1764 = vrot.slane %v1750, %v1763
    %v1765 = vcombine.low %v1757, %v1764
    %v1767 = vadd.f32 %v1602, %v1765
    %v1768 = vxor.u32 %v1767, 2147483648
    %v1769 = vmul.f32 %v1768, 1.442695
    %v1770 = vpow.pop %v1769
    %v1771 = vadd.f32 %v1770, 1.0
    %v1772 = vrcp.pop %v1771
    %v1773 = vmul.f32 1.0, %v1772
    %v1775 = vrot.slane %v1767, 2
    %v1777 = vxor.u32 %v1775, 2147483648
    %v1778 = vmul.f32 %v1777, 1.442695
    %v1779 = vpow.pop %v1778
    %v1780 = vadd.f32 %v1779, 1.0
    %v1781 = vrcp.pop %v1780
    %v1782 = vmul.f32 1.0, %v1781
    %v1783 = vrot.slane %v1767, 4
    %v1785 = vtanh.pop %v1783
    %v1786 = vrot.slane %v1767, 6
    %v1788 = vxor.u32 %v1786, 2147483648
    %v1789 = vmul.f32 %v1788, 1.442695
    %v1790 = vpow.pop %v1789
    %v1791 = vadd.f32 %v1790, 1.0
    %v1792 = vrcp.pop %v1791
    %v1793 = vmul.f32 1.0, %v1792
    %v1794 = vmul.f32 %v1782, %v1349
    %v1795 = vmul.f32 %v1773, %v1785
    %v1796 = vadd.f32 %v1794, %v1795
    %v1797 = vtanh.pop %v1796
    %v1798 = vmul.f32 %v1793, %v1797
    %1799 = vmatprep.subr.mxu0 %v149
    %1800 = vmatpush1.msra.mxu0 %v148
    %1801 = vmatprep.subr.mxu0 %v145
    %1802 = vmatpush1.msra.mxu0 %v144
    %1803 = vmatprep.subr.mxu0 %v141
    %1804 = vmatpush1.msra.mxu0 %v140
    %1805 = vmatprep.subr.mxu0 %v137
    %1806 = vmatpush1.msra.mxu0 %v136
    %1807 = vmatprep.subr.mxu0 %v133
    %1808 = vmatpush1.msra.mxu0 %v132
    %1809 = vmatprep.subr.mxu0 %v129
    %1810 = vmatpush1.msra.mxu0 %v128
    %1811 = vmatprep.subr.mxu0 %v125
    %1812 = vmatpush1.msra.mxu0 %v124
    %1813 = vmatprep.subr.mxu0 %v121
    %1814 = vmatpush1.msra.mxu0 %v120
    %1815 = vmatprep.subr.mxu0 %v117
    %1816 = vmatpush1.msra.mxu0 %v116
    %1817 = vmatprep.subr.mxu0 %v113
    %1818 = vmatpush1.msra.mxu0 %v112
    %1819 = vmatprep.subr.mxu0 %v109
    %1820 = vmatpush1.msra.mxu0 %v108
    %1821 = vmatprep.subr.mxu0 %v105
    %1822 = vmatpush1.msra.mxu0 %v104
    %1823 = vmatprep.subr.mxu0 %v101
    %1824 = vmatpush1.msra.mxu0 %v100
    %1825 = vmatprep.subr.mxu0 %v97
    %1826 = vmatpush1.msra.mxu0 %v96
    %1827 = vmatprep.subr.mxu0 %v93
    %1828 = vmatpush1.msra.mxu0 %v92
    %1829 = vmatprep.subr.mxu0 %v89
    %1830 = vmatpush1.msra.mxu0 %v88
    %1831 = vmatprep.subr.mxu0 %v213
    %1832 = vmatpush2.msra.mxu0 %v212
    %1833 = vmatprep.subr.mxu0 %v209
    %1834 = vmatpush2.msra.mxu0 %v208
    %1835 = vmatprep.subr.mxu0 %v205
    %1836 = vmatpush2.msra.mxu0 %v204
    %1837 = vmatprep.subr.mxu0 %v201
    %1838 = vmatpush2.msra.mxu0 %v200
    %1839 = vmatprep.subr.mxu0 %v197
    %1840 = vmatpush2.msra.mxu0 %v196
    %1841 = vmatprep.subr.mxu0 %v193
    %1842 = vmatpush2.msra.mxu0 %v192
    %1843 = vmatprep.subr.mxu0 %v189
    %1844 = vmatpush2.msra.mxu0 %v188
    %1845 = vmatprep.subr.mxu0 %v185
    %1846 = vmatpush2.msra.mxu0 %v184
    %1847 = vmatprep.subr.mxu0 %v181
    %1848 = vmatpush2.msra.mxu0 %v180
    %1849 = vmatprep.subr.mxu0 %v177
    %1850 = vmatpush2.msra.mxu0 %v176
    %1851 = vmatprep.subr.mxu0 %v173
    %1852 = vmatpush2.msra.mxu0 %v172
    %1853 = vmatprep.subr.mxu0 %v169
    %1854 = vmatpush2.msra.mxu0 %v168
    %1855 = vmatprep.subr.mxu0 %v165
    %1856 = vmatpush2.msra.mxu0 %v164
    %1857 = vmatprep.subr.mxu0 %v161
    %1858 = vmatpush2.msra.mxu0 %v160
    %1859 = vmatprep.subr.mxu0 %v157
    %1860 = vmatpush2.msra.mxu0 %v156
    %1861 = vmatprep.subr.mxu0 %v153
    %1862 = vmatpush2.msra.mxu0 %v152
    %1863 = vmatprep.mubr.f32.mxu0 %v1517
    %1864 = vmatmul.mubr.f32.gmra.mxu0 %v1798
    %v1865 = vpop.f32.mrf.mxu0
    %v1866 = vadd.f32 %v435, %v1865
    %v1867 = vpop.f32.mrf.mxu0
    %v1868 = vadd.f32 %v439, %v1867
    %1869 = vdwg.mxu0
    %1870 = vmatprep.subr.mxu0 %v151
    %1871 = vmatpush1.msra.mxu0 %v150
    %1872 = vmatprep.subr.mxu0 %v147
    %1873 = vmatpush1.msra.mxu0 %v146
    %1874 = vmatprep.subr.mxu0 %v143
    %1875 = vmatpush1.msra.mxu0 %v142
    %1876 = vmatprep.subr.mxu0 %v139
    %1877 = vmatpush1.msra.mxu0 %v138
    %1878 = vmatprep.subr.mxu0 %v135
    %1879 = vmatpush1.msra.mxu0 %v134
    %1880 = vmatprep.subr.mxu0 %v131
    %1881 = vmatpush1.msra.mxu0 %v130
    %1882 = vmatprep.subr.mxu0 %v127
    %1883 = vmatpush1.msra.mxu0 %v126
    %1884 = vmatprep.subr.mxu0 %v123
    %1885 = vmatpush1.msra.mxu0 %v122
    %1886 = vmatprep.subr.mxu0 %v119
    %1887 = vmatpush1.msra.mxu0 %v118
    %1888 = vmatprep.subr.mxu0 %v115
    %1889 = vmatpush1.msra.mxu0 %v114
    %1890 = vmatprep.subr.mxu0 %v111
    %1891 = vmatpush1.msra.mxu0 %v110
    %1892 = vmatprep.subr.mxu0 %v107
    %1893 = vmatpush1.msra.mxu0 %v106
    %1894 = vmatprep.subr.mxu0 %v103
    %1895 = vmatpush1.msra.mxu0 %v102
    %1896 = vmatprep.subr.mxu0 %v99
    %1897 = vmatpush1.msra.mxu0 %v98
    %1898 = vmatprep.subr.mxu0 %v95
    %1899 = vmatpush1.msra.mxu0 %v94
    %1900 = vmatprep.subr.mxu0 %v91
    %1901 = vmatpush1.msra.mxu0 %v90
    %1902 = vmatprep.subr.mxu0 %v215
    %1903 = vmatpush2.msra.mxu0 %v214
    %1904 = vmatprep.subr.mxu0 %v211
    %1905 = vmatpush2.msra.mxu0 %v210
    %1906 = vmatprep.subr.mxu0 %v207
    %1907 = vmatpush2.msra.mxu0 %v206
    %1908 = vmatprep.subr.mxu0 %v203
    %1909 = vmatpush2.msra.mxu0 %v202
    %1910 = vmatprep.subr.mxu0 %v199
    %1911 = vmatpush2.msra.mxu0 %v198
    %1912 = vmatprep.subr.mxu0 %v195
    %1913 = vmatpush2.msra.mxu0 %v194
    %1914 = vmatprep.subr.mxu0 %v191
    %1915 = vmatpush2.msra.mxu0 %v190
    %1916 = vmatprep.subr.mxu0 %v187
    %1917 = vmatpush2.msra.mxu0 %v186
    %1918 = vmatprep.subr.mxu0 %v183
    %1919 = vmatpush2.msra.mxu0 %v182
    %1920 = vmatprep.subr.mxu0 %v179
    %1921 = vmatpush2.msra.mxu0 %v178
    %1922 = vmatprep.subr.mxu0 %v175
    %1923 = vmatpush2.msra.mxu0 %v174
    %1924 = vmatprep.subr.mxu0 %v171
    %1925 = vmatpush2.msra.mxu0 %v170
    %1926 = vmatprep.subr.mxu0 %v167
    %1927 = vmatpush2.msra.mxu0 %v166
    %1928 = vmatprep.subr.mxu0 %v163
    %1929 = vmatpush2.msra.mxu0 %v162
    %1930 = vmatprep.subr.mxu0 %v159
    %1931 = vmatpush2.msra.mxu0 %v158
    %1932 = vmatprep.subr.mxu0 %v155
    %1933 = vmatpush2.msra.mxu0 %v154
    %1934 = vmatprep.mubr.f32.mxu0 %v1517
    %1935 = vmatmul.mubr.f32.gmra.mxu0 %v1798
    %v1936 = vpop.f32.mrf.mxu0
    %v1937 = vadd.f32 %v443, %v1936
    %v1938 = vpop.f32.mrf.mxu0
    %v1939 = vadd.f32 %v447, %v1938
    %1940 = vdwg.mxu0
    %v1941 = vxor.u32 %v1866, 2147483648
    %v1942 = vmul.f32 %v1941, 1.442695
    %v1943 = vpow.pop %v1942
    %v1944 = vadd.f32 %v1943, 1.0
    %v1945 = vrcp.pop %v1944
    %v1946 = vmul.f32 1.0, %v1945
    %v1947 = vxor.u32 %v1868, 2147483648
    %v1948 = vmul.f32 %v1947, 1.442695
    %v1949 = vpow.pop %v1948
    %v1950 = vadd.f32 %v1949, 1.0
    %v1951 = vrcp.pop %v1950
    %v1952 = vmul.f32 1.0, %v1951
    %v1953 = vtanh.pop %v1937
    %v1954 = vxor.u32 %v1939, 2147483648
    %v1955 = vmul.f32 %v1954, 1.442695
    %v1956 = vpow.pop %v1955
    %v1957 = vadd.f32 %v1956, 1.0
    %v1958 = vrcp.pop %v1957
    %v1959 = vmul.f32 1.0, %v1958
    %v1960 = vmul.f32 %v1952, %v1515
    %v1961 = vmul.f32 %v1946, %v1953
    %v1962 = vadd.f32 %v1960, %v1961
    %v1963 = vtanh.pop %v1962
    %v1964 = vmul.f32 %v1959, %v1963
    %1965 = vmatprep.subr.mxu0 0.0
    %1966 = vmatpush1.msra.mxu0 %v232
    %1967 = vmatprep.subr.mxu0 0.0
    %1968 = vmatpush1.msra.mxu0 %v231
    %1969 = vmatprep.subr.mxu0 0.0
    %1970 = vmatpush1.msra.mxu0 %v230
    %1971 = vmatprep.subr.mxu0 0.0
    %1972 = vmatpush1.msra.mxu0 %v229
    %1973 = vmatprep.subr.mxu0 0.0
    %1974 = vmatpush1.msra.mxu0 %v228
    %1975 = vmatprep.subr.mxu0 0.0
    %1976 = vmatpush1.msra.mxu0 %v227
    %1977 = vmatprep.subr.mxu0 0.0
    %1978 = vmatpush1.msra.mxu0 %v226
    %1979 = vmatprep.subr.mxu0 0.0
    %1980 = vmatpush1.msra.mxu0 %v225
    %1981 = vmatprep.subr.mxu0 0.0
    %1982 = vmatpush1.msra.mxu0 %v224
    %1983 = vmatprep.subr.mxu0 0.0
    %1984 = vmatpush1.msra.mxu0 %v223
    %1985 = vmatprep.subr.mxu0 0.0
    %1986 = vmatpush1.msra.mxu0 %v222
    %1987 = vmatprep.subr.mxu0 0.0
    %1988 = vmatpush1.msra.mxu0 %v221
    %1989 = vmatprep.subr.mxu0 0.0
    %1990 = vmatpush1.msra.mxu0 %v220
    %1991 = vmatprep.subr.mxu0 0.0
    %1992 = vmatpush1.msra.mxu0 %v219
    %1993 = vmatprep.subr.mxu0 0.0
    %1994 = vmatpush1.msra.mxu0 %v218
    %1995 = vmatprep.subr.mxu0 0.0
    %1996 = vmatpush1.msra.mxu0 %v217
    %1997 = vmatprep.subr.mxu0 0.0
    %1998 = vmatpush2.msra.mxu0 0.0
    %1999 = vmatprep.subr.mxu0 0.0
    %2000 = vmatpush2.msra.mxu0 0.0
    %2001 = vmatprep.subr.mxu0 0.0
    %2002 = vmatpush2.msra.mxu0 0.0
    %2003 = vmatprep.subr.mxu0 0.0
    %2004 = vmatpush2.msra.mxu0 0.0
    %2005 = vmatprep.subr.mxu0 0.0
    %2006 = vmatpush2.msra.mxu0 0.0
    %2007 = vmatprep.subr.mxu0 0.0
    %2008 = vmatpush2.msra.mxu0 0.0
    %2009 = vmatprep.subr.mxu0 0.0
    %2010 = vmatpush2.msra.mxu0 0.0
    %2011 = vmatprep.subr.mxu0 0.0
    %2012 = vmatpush2.msra.mxu0 0.0
    %2013 = vmatprep.subr.mxu0 0.0
    %2014 = vmatpush2.msra.mxu0 0.0
    %2015 = vmatprep.subr.mxu0 0.0
    %2016 = vmatpush2.msra.mxu0 0.0
    %2017 = vmatprep.subr.mxu0 0.0
    %2018 = vmatpush2.msra.mxu0 0.0
    %2019 = vmatprep.subr.mxu0 0.0
    %2020 = vmatpush2.msra.mxu0 0.0
    %2021 = vmatprep.subr.mxu0 0.0
    %2022 = vmatpush2.msra.mxu0 0.0
    %2023 = vmatprep.subr.mxu0 0.0
    %2024 = vmatpush2.msra.mxu0 0.0
    %2025 = vmatprep.subr.mxu0 0.0
    %2026 = vmatpush2.msra.mxu0 0.0
    %2027 = vmatprep.subr.mxu0 0.0
    %2028 = vmatpush2.msra.mxu0 0.0
    %2029 = vmatprep.mubr.f32.mxu0 0.0
    %2030 = vmatmul.mubr.f32.gmra.mxu0 %v1964
    %v2031 = vpop.f32.mrf.mxu0
    %v2032 = vadd.f32 %v622, %v2031
    %v2033 = vpop.f32.mrf.mxu0
    %2034 = vdwg.mxu0
    %v2035 = vsel %vm694, %v2032, -inf
    %2036 = vmax.xlane.f32.xlu0 %v2035
    %v2037 = vpop.xlane.xlu0 %2036
    %v2038 = vsub.f32 %v2032, %v2037
    %v2039 = vmul.f32 %v2038, 1.442695
    %v2040 = vpow.pop %v2039
    %v2041 = vsel %vm694, %v2040, 0.0
    %2042 = vadd.xlane.f32.xlu0 %v2041
    %v2043 = vpop.xlane.xlu0 %2042
    %v2044 = vrcp.pop %v2043
    %v2045 = vmul.f32 %v2040, %v2044
    %s2046 = scalar_lea.vmem [#allocation2], 6
    %2047 = vst [vmem:[%s2046] sm:$0x3] %v2045
    %s2048 = scalar_lea.vmem %s0, 32
    %v2049 = vld [vmem:[%s2048] sm:$0xff]
    %2050 = vmatprep.subr.mxu0 %v85
    %2051 = vmatpush1.msra.mxu0 %v84
    %2052 = vmatprep.subr.mxu0 %v81
    %2053 = vmatpush1.msra.mxu0 %v80
    %2054 = vmatprep.subr.mxu0 %v77
    %2055 = vmatpush1.msra.mxu0 %v76
    %2056 = vmatprep.subr.mxu0 %v73
    %2057 = vmatpush1.msra.mxu0 %v72
    %2058 = vmatprep.subr.mxu0 %v69
    %2059 = vmatpush1.msra.mxu0 %v68
    %2060 = vmatprep.subr.mxu0 %v65
    %2061 = vmatpush1.msra.mxu0 %v64
    %2062 = vmatprep.subr.mxu0 %v61
    %2063 = vmatpush1.msra.mxu0 %v60
    %2064 = vmatprep.subr.mxu0 %v57
    %2065 = vmatpush1.msra.mxu0 %v56
    %2066 = vmatprep.subr.mxu0 %v53
    %2067 = vmatpush1.msra.mxu0 %v52
    %2068 = vmatprep.subr.mxu0 %v49
    %2069 = vmatpush1.msra.mxu0 %v48
    %2070 = vmatprep.subr.mxu0 %v45
    %2071 = vmatpush1.msra.mxu0 %v44
    %2072 = vmatprep.subr.mxu0 %v41
    %2073 = vmatpush1.msra.mxu0 %v40
    %2074 = vmatprep.subr.mxu0 %v37
    %2075 = vmatpush1.msra.mxu0 %v36
    %2076 = vmatprep.subr.mxu0 %v33
    %2077 = vmatpush1.msra.mxu0 %v32
    %2078 = vmatprep.subr.mxu0 %v29
    %2079 = vmatpush1.msra.mxu0 %v28
    %2080 = vmatprep.subr.mxu0 %v25
    %2081 = vmatpush1.msra.mxu0 %v24
    %2082 = vmatprep.subr.mxu0 0.0
    %2083 = vmatpush2.msra.mxu0 0.0
    %2084 = vmatprep.subr.mxu0 0.0
    %2085 = vmatpush2.msra.mxu0 0.0
    %2086 = vmatprep.subr.mxu0 0.0
    %2087 = vmatpush2.msra.mxu0 0.0
    %2088 = vmatprep.subr.mxu0 0.0
    %2089 = vmatpush2.msra.mxu0 0.0
    %2090 = vmatprep.subr.mxu0 0.0
    %2091 = vmatpush2.msra.mxu0 0.0
    %2092 = vmatprep.subr.mxu0 0.0
    %2093 = vmatpush2.msra.mxu0 0.0
    %2094 = vmatprep.subr.mxu0 0.0
    %2095 = vmatpush2.msra.mxu0 0.0
    %2096 = vmatprep.subr.mxu0 0.0
    %2097 = vmatpush2.msra.mxu0 0.0
    %2098 = vmatprep.subr.mxu0 0.0
    %2099 = vmatpush2.msra.mxu0 0.0
    %2100 = vmatprep.subr.mxu0 0.0
    %2101 = vmatpush2.msra.mxu0 0.0
    %2102 = vmatprep.subr.mxu0 0.0
    %2103 = vmatpush2.msra.mxu0 0.0
    %2104 = vmatprep.subr.mxu0 0.0
    %2105 = vmatpush2.msra.mxu0 0.0
    %2106 = vmatprep.subr.mxu0 0.0
    %2107 = vmatpush2.msra.mxu0 0.0
    %2108 = vmatprep.subr.mxu0 0.0
    %2109 = vmatpush2.msra.mxu0 0.0
    %2110 = vmatprep.subr.mxu0 0.0
    %2111 = vmatpush2.msra.mxu0 0.0
    %2112 = vmatprep.subr.mxu0 0.0
    %2113 = vmatpush2.msra.mxu0 0.0
    %2114 = vmatprep.mubr.f32.mxu0 0.0
    %2115 = vmatmul.mubr.f32.gmra.mxu0 %v1798
    %v2116 = vpop.f32.mrf.mxu0
    %v2117 = vadd.f32 0.0, %v2116
    %v2118 = vpop.f32.mrf.mxu0
    %v2119 = vadd.f32 0.0, %v2118
    %2120 = vdwg.mxu0
    %2121 = vmatprep.subr.mxu0 %v87
    %2122 = vmatpush1.msra.mxu0 %v86
    %2123 = vmatprep.subr.mxu0 %v83
    %2124 = vmatpush1.msra.mxu0 %v82
    %2125 = vmatprep.subr.mxu0 %v79
    %2126 = vmatpush1.msra.mxu0 %v78
    %2127 = vmatprep.subr.mxu0 %v75
    %2128 = vmatpush1.msra.mxu0 %v74
    %2129 = vmatprep.subr.mxu0 %v71
    %2130 = vmatpush1.msra.mxu0 %v70
    %2131 = vmatprep.subr.mxu0 %v67
    %2132 = vmatpush1.msra.mxu0 %v66
    %2133 = vmatprep.subr.mxu0 %v63
    %2134 = vmatpush1.msra.mxu0 %v62
    %2135 = vmatprep.subr.mxu0 %v59
    %2136 = vmatpush1.msra.mxu0 %v58
    %2137 = vmatprep.subr.mxu0 %v55
    %2138 = vmatpush1.msra.mxu0 %v54
    %2139 = vmatprep.subr.mxu0 %v51
    %2140 = vmatpush1.msra.mxu0 %v50
    %2141 = vmatprep.subr.mxu0 %v47
    %2142 = vmatpush1.msra.mxu0 %v46
    %2143 = vmatprep.subr.mxu0 %v43
    %2144 = vmatpush1.msra.mxu0 %v42
    %2145 = vmatprep.subr.mxu0 %v39
    %2146 = vmatpush1.msra.mxu0 %v38
    %2147 = vmatprep.subr.mxu0 %v35
    %2148 = vmatpush1.msra.mxu0 %v34
    %2149 = vmatprep.subr.mxu0 %v31
    %2150 = vmatpush1.msra.mxu0 %v30
    %2151 = vmatprep.subr.mxu0 %v27
    %2152 = vmatpush1.msra.mxu0 %v26
    %2153 = vmatprep.subr.mxu0 0.0
    %2154 = vmatpush2.msra.mxu0 0.0
    %2155 = vmatprep.subr.mxu0 0.0
    %2156 = vmatpush2.msra.mxu0 0.0
    %2157 = vmatprep.subr.mxu0 0.0
    %2158 = vmatpush2.msra.mxu0 0.0
    %2159 = vmatprep.subr.mxu0 0.0
    %2160 = vmatpush2.msra.mxu0 0.0
    %2161 = vmatprep.subr.mxu0 0.0
    %2162 = vmatpush2.msra.mxu0 0.0
    %2163 = vmatprep.subr.mxu0 0.0
    %2164 = vmatpush2.msra.mxu0 0.0
    %2165 = vmatprep.subr.mxu0 0.0
    %2166 = vmatpush2.msra.mxu0 0.0
    %2167 = vmatprep.subr.mxu0 0.0
    %2168 = vmatpush2.msra.mxu0 0.0
    %2169 = vmatprep.subr.mxu0 0.0
    %2170 = vmatpush2.msra.mxu0 0.0
    %2171 = vmatprep.subr.mxu0 0.0
    %2172 = vmatpush2.msra.mxu0 0.0
    %2173 = vmatprep.subr.mxu0 0.0
    %2174 = vmatpush2.msra.mxu0 0.0
    %2175 = vmatprep.subr.mxu0 0.0
    %2176 = vmatpush2.msra.mxu0 0.0
    %2177 = vmatprep.subr.mxu0 0.0
    %2178 = vmatpush2.msra.mxu0 0.0
    %2179 = vmatprep.subr.mxu0 0.0
    %2180 = vmatpush2.msra.mxu0 0.0
    %2181 = vmatprep.subr.mxu0 0.0
    %2182 = vmatpush2.msra.mxu0 0.0
    %2183 = vmatprep.subr.mxu0 0.0
    %2184 = vmatpush2.msra.mxu0 0.0
    %2185 = vmatprep.mubr.f32.mxu0 0.0
    %2186 = vmatmul.mubr.f32.gmra.mxu0 %v1798
    %v2187 = vpop.f32.mrf.mxu0
    %v2188 = vadd.f32 0.0, %v2187
    %v2189 = vpop.f32.mrf.mxu0
    %v2190 = vadd.f32 0.0, %v2189
    %2191 = vdwg.mxu0
    %v2196 = vcombine.low %v2117, %v2119
    %v2197 = vcombine.low %v2188, %v2190
    %v2199 = vunpack.c.l.s4 1983009808
    %v2200 = vunpack.c.0.s8 %v2199
    %v2201 = vlaneseq
    %v2202 = vshrl.u32 %v2201, 7
    %v2203 = vsub.s32 %v2200, %v2202
    %v2204 = vrot.slane %v2196, %v2203
    %v2206 = vunpack.c.l.s4 1983009808
    %v2207 = vunpack.c.0.s8 %v2206
    %v2208 = vlaneseq
    %v2209 = vshrl.u32 %v2208, 7
    %v2210 = vsub.s32 %v2207, %v2209
    %v2211 = vrot.slane %v2197, %v2210
    %v2212 = vcombine.low %v2204, %v2211
    %v2214 = vadd.f32 %v2049, %v2212
    %v2215 = vxor.u32 %v2214, 2147483648
    %v2216 = vmul.f32 %v2215, 1.442695
    %v2217 = vpow.pop %v2216
    %v2218 = vadd.f32 %v2217, 1.0
    %v2219 = vrcp.pop %v2218
    %v2220 = vmul.f32 1.0, %v2219
    %v2222 = vrot.slane %v2214, 2
    %v2224 = vxor.u32 %v2222, 2147483648
    %v2225 = vmul.f32 %v2224, 1.442695
    %v2226 = vpow.pop %v2225
    %v2227 = vadd.f32 %v2226, 1.0
    %v2228 = vrcp.pop %v2227
    %v2229 = vmul.f32 1.0, %v2228
    %v2230 = vrot.slane %v2214, 4
    %v2232 = vtanh.pop %v2230
    %v2233 = vrot.slane %v2214, 6
    %v2235 = vxor.u32 %v2233, 2147483648
    %v2236 = vmul.f32 %v2235, 1.442695
    %v2237 = vpow.pop %v2236
    %v2238 = vadd.f32 %v2237, 1.0
    %v2239 = vrcp.pop %v2238
    %v2240 = vmul.f32 1.0, %v2239
    %v2241 = vmul.f32 %v2229, %v1796
    %v2242 = vmul.f32 %v2220, %v2232
    %v2243 = vadd.f32 %v2241, %v2242
    %v2244 = vtanh.pop %v2243
    %v2245 = vmul.f32 %v2240, %v2244
    %2246 = vmatprep.subr.mxu0 %v149
    %2247 = vmatpush1.msra.mxu0 %v148
    %2248 = vmatprep.subr.mxu0 %v145
    %2249 = vmatpush1.msra.mxu0 %v144
    %2250 = vmatprep.subr.mxu0 %v141
    %2251 = vmatpush1.msra.mxu0 %v140
    %2252 = vmatprep.subr.mxu0 %v137
    %2253 = vmatpush1.msra.mxu0 %v136
    %2254 = vmatprep.subr.mxu0 %v133
    %2255 = vmatpush1.msra.mxu0 %v132
    %2256 = vmatprep.subr.mxu0 %v129
    %2257 = vmatpush1.msra.mxu0 %v128
    %2258 = vmatprep.subr.mxu0 %v125
    %2259 = vmatpush1.msra.mxu0 %v124
    %2260 = vmatprep.subr.mxu0 %v121
    %2261 = vmatpush1.msra.mxu0 %v120
    %2262 = vmatprep.subr.mxu0 %v117
    %2263 = vmatpush1.msra.mxu0 %v116
    %2264 = vmatprep.subr.mxu0 %v113
    %2265 = vmatpush1.msra.mxu0 %v112
    %2266 = vmatprep.subr.mxu0 %v109
    %2267 = vmatpush1.msra.mxu0 %v108
    %2268 = vmatprep.subr.mxu0 %v105
    %2269 = vmatpush1.msra.mxu0 %v104
    %2270 = vmatprep.subr.mxu0 %v101
    %2271 = vmatpush1.msra.mxu0 %v100
    %2272 = vmatprep.subr.mxu0 %v97
    %2273 = vmatpush1.msra.mxu0 %v96
    %2274 = vmatprep.subr.mxu0 %v93
    %2275 = vmatpush1.msra.mxu0 %v92
    %2276 = vmatprep.subr.mxu0 %v89
    %2277 = vmatpush1.msra.mxu0 %v88
    %2278 = vmatprep.subr.mxu0 %v213
    %2279 = vmatpush2.msra.mxu0 %v212
    %2280 = vmatprep.subr.mxu0 %v209
    %2281 = vmatpush2.msra.mxu0 %v208
    %2282 = vmatprep.subr.mxu0 %v205
    %2283 = vmatpush2.msra.mxu0 %v204
    %2284 = vmatprep.subr.mxu0 %v201
    %2285 = vmatpush2.msra.mxu0 %v200
    %2286 = vmatprep.subr.mxu0 %v197
    %2287 = vmatpush2.msra.mxu0 %v196
    %2288 = vmatprep.subr.mxu0 %v193
    %2289 = vmatpush2.msra.mxu0 %v192
    %2290 = vmatprep.subr.mxu0 %v189
    %2291 = vmatpush2.msra.mxu0 %v188
    %2292 = vmatprep.subr.mxu0 %v185
    %2293 = vmatpush2.msra.mxu0 %v184
    %2294 = vmatprep.subr.mxu0 %v181
    %2295 = vmatpush2.msra.mxu0 %v180
    %2296 = vmatprep.subr.mxu0 %v177
    %2297 = vmatpush2.msra.mxu0 %v176
    %2298 = vmatprep.subr.mxu0 %v173
    %2299 = vmatpush2.msra.mxu0 %v172
    %2300 = vmatprep.subr.mxu0 %v169
    %2301 = vmatpush2.msra.mxu0 %v168
    %2302 = vmatprep.subr.mxu0 %v165
    %2303 = vmatpush2.msra.mxu0 %v164
    %2304 = vmatprep.subr.mxu0 %v161
    %2305 = vmatpush2.msra.mxu0 %v160
    %2306 = vmatprep.subr.mxu0 %v157
    %2307 = vmatpush2.msra.mxu0 %v156
    %2308 = vmatprep.subr.mxu0 %v153
    %2309 = vmatpush2.msra.mxu0 %v152
    %2310 = vmatprep.mubr.f32.mxu0 %v1964
    %2311 = vmatmul.mubr.f32.gmra.mxu0 %v2245
    %v2312 = vpop.f32.mrf.mxu0
    %v2313 = vadd.f32 %v435, %v2312
    %v2314 = vpop.f32.mrf.mxu0
    %v2315 = vadd.f32 %v439, %v2314
    %2316 = vdwg.mxu0
    %2317 = vmatprep.subr.mxu0 %v151
    %2318 = vmatpush1.msra.mxu0 %v150
    %2319 = vmatprep.subr.mxu0 %v147
    %2320 = vmatpush1.msra.mxu0 %v146
    %2321 = vmatprep.subr.mxu0 %v143
    %2322 = vmatpush1.msra.mxu0 %v142
    %2323 = vmatprep.subr.mxu0 %v139
    %2324 = vmatpush1.msra.mxu0 %v138
    %2325 = vmatprep.subr.mxu0 %v135
    %2326 = vmatpush1.msra.mxu0 %v134
    %2327 = vmatprep.subr.mxu0 %v131
    %2328 = vmatpush1.msra.mxu0 %v130
    %2329 = vmatprep.subr.mxu0 %v127
    %2330 = vmatpush1.msra.mxu0 %v126
    %2331 = vmatprep.subr.mxu0 %v123
    %2332 = vmatpush1.msra.mxu0 %v122
    %2333 = vmatprep.subr.mxu0 %v119
    %2334 = vmatpush1.msra.mxu0 %v118
    %2335 = vmatprep.subr.mxu0 %v115
    %2336 = vmatpush1.msra.mxu0 %v114
    %2337 = vmatprep.subr.mxu0 %v111
    %2338 = vmatpush1.msra.mxu0 %v110
    %2339 = vmatprep.subr.mxu0 %v107
    %2340 = vmatpush1.msra.mxu0 %v106
    %2341 = vmatprep.subr.mxu0 %v103
    %2342 = vmatpush1.msra.mxu0 %v102
    %2343 = vmatprep.subr.mxu0 %v99
    %2344 = vmatpush1.msra.mxu0 %v98
    %2345 = vmatprep.subr.mxu0 %v95
    %2346 = vmatpush1.msra.mxu0 %v94
    %2347 = vmatprep.subr.mxu0 %v91
    %2348 = vmatpush1.msra.mxu0 %v90
    %2349 = vmatprep.subr.mxu0 %v215
    %2350 = vmatpush2.msra.mxu0 %v214
    %2351 = vmatprep.subr.mxu0 %v211
    %2352 = vmatpush2.msra.mxu0 %v210
    %2353 = vmatprep.subr.mxu0 %v207
    %2354 = vmatpush2.msra.mxu0 %v206
    %2355 = vmatprep.subr.mxu0 %v203
    %2356 = vmatpush2.msra.mxu0 %v202
    %2357 = vmatprep.subr.mxu0 %v199
    %2358 = vmatpush2.msra.mxu0 %v198
    %2359 = vmatprep.subr.mxu0 %v195
    %2360 = vmatpush2.msra.mxu0 %v194
    %2361 = vmatprep.subr.mxu0 %v191
    %2362 = vmatpush2.msra.mxu0 %v190
    %2363 = vmatprep.subr.mxu0 %v187
    %2364 = vmatpush2.msra.mxu0 %v186
    %2365 = vmatprep.subr.mxu0 %v183
    %2366 = vmatpush2.msra.mxu0 %v182
    %2367 = vmatprep.subr.mxu0 %v179
    %2368 = vmatpush2.msra.mxu0 %v178
    %2369 = vmatprep.subr.mxu0 %v175
    %2370 = vmatpush2.msra.mxu0 %v174
    %2371 = vmatprep.subr.mxu0 %v171
    %2372 = vmatpush2.msra.mxu0 %v170
    %2373 = vmatprep.subr.mxu0 %v167
    %2374 = vmatpush2.msra.mxu0 %v166
    %2375 = vmatprep.subr.mxu0 %v163
    %2376 = vmatpush2.msra.mxu0 %v162
    %2377 = vmatprep.subr.mxu0 %v159
    %2378 = vmatpush2.msra.mxu0 %v158
    %2379 = vmatprep.subr.mxu0 %v155
    %2380 = vmatpush2.msra.mxu0 %v154
    %2381 = vmatprep.mubr.f32.mxu0 %v1964
    %2382 = vmatmul.mubr.f32.gmra.mxu0 %v2245
    %v2383 = vpop.f32.mrf.mxu0
    %v2384 = vadd.f32 %v443, %v2383
    %v2385 = vpop.f32.mrf.mxu0
    %v2386 = vadd.f32 %v447, %v2385
    %2387 = vdwg.mxu0
    %v2388 = vxor.u32 %v2313, 2147483648
    %v2389 = vmul.f32 %v2388, 1.442695
    %v2390 = vpow.pop %v2389
    %v2391 = vadd.f32 %v2390, 1.0
    %v2392 = vrcp.pop %v2391
    %v2393 = vmul.f32 1.0, %v2392
    %v2394 = vxor.u32 %v2315, 2147483648
    %v2395 = vmul.f32 %v2394, 1.442695
    %v2396 = vpow.pop %v2395
    %v2397 = vadd.f32 %v2396, 1.0
    %v2398 = vrcp.pop %v2397
    %v2399 = vmul.f32 1.0, %v2398
    %v2400 = vtanh.pop %v2384
    %v2401 = vxor.u32 %v2386, 2147483648
    %v2402 = vmul.f32 %v2401, 1.442695
    %v2403 = vpow.pop %v2402
    %v2404 = vadd.f32 %v2403, 1.0
    %v2405 = vrcp.pop %v2404
    %v2406 = vmul.f32 1.0, %v2405
    %v2407 = vmul.f32 %v2399, %v1962
    %v2408 = vmul.f32 %v2393, %v2400
    %v2409 = vadd.f32 %v2407, %v2408
    %v2410 = vtanh.pop %v2409
    %v2411 = vmul.f32 %v2406, %v2410
    %2412 = vmatprep.subr.mxu0 0.0
    %2413 = vmatpush1.msra.mxu0 %v232
    %2414 = vmatprep.subr.mxu0 0.0
    %2415 = vmatpush1.msra.mxu0 %v231
    %2416 = vmatprep.subr.mxu0 0.0
    %2417 = vmatpush1.msra.mxu0 %v230
    %2418 = vmatprep.subr.mxu0 0.0
    %2419 = vmatpush1.msra.mxu0 %v229
    %2420 = vmatprep.subr.mxu0 0.0
    %2421 = vmatpush1.msra.mxu0 %v228
    %2422 = vmatprep.subr.mxu0 0.0
    %2423 = vmatpush1.msra.mxu0 %v227
    %2424 = vmatprep.subr.mxu0 0.0
    %2425 = vmatpush1.msra.mxu0 %v226
    %2426 = vmatprep.subr.mxu0 0.0
    %2427 = vmatpush1.msra.mxu0 %v225
    %2428 = vmatprep.subr.mxu0 0.0
    %2429 = vmatpush1.msra.mxu0 %v224
    %2430 = vmatprep.subr.mxu0 0.0
    %2431 = vmatpush1.msra.mxu0 %v223
    %2432 = vmatprep.subr.mxu0 0.0
    %2433 = vmatpush1.msra.mxu0 %v222
    %2434 = vmatprep.subr.mxu0 0.0
    %2435 = vmatpush1.msra.mxu0 %v221
    %2436 = vmatprep.subr.mxu0 0.0
    %2437 = vmatpush1.msra.mxu0 %v220
    %2438 = vmatprep.subr.mxu0 0.0
    %2439 = vmatpush1.msra.mxu0 %v219
    %2440 = vmatprep.subr.mxu0 0.0
    %2441 = vmatpush1.msra.mxu0 %v218
    %2442 = vmatprep.subr.mxu0 0.0
    %2443 = vmatpush1.msra.mxu0 %v217
    %2444 = vmatprep.subr.mxu0 0.0
    %2445 = vmatpush2.msra.mxu0 0.0
    %2446 = vmatprep.subr.mxu0 0.0
    %2447 = vmatpush2.msra.mxu0 0.0
    %2448 = vmatprep.subr.mxu0 0.0
    %2449 = vmatpush2.msra.mxu0 0.0
    %2450 = vmatprep.subr.mxu0 0.0
    %2451 = vmatpush2.msra.mxu0 0.0
    %2452 = vmatprep.subr.mxu0 0.0
    %2453 = vmatpush2.msra.mxu0 0.0
    %2454 = vmatprep.subr.mxu0 0.0
    %2455 = vmatpush2.msra.mxu0 0.0
    %2456 = vmatprep.subr.mxu0 0.0
    %2457 = vmatpush2.msra.mxu0 0.0
    %2458 = vmatprep.subr.mxu0 0.0
    %2459 = vmatpush2.msra.mxu0 0.0
    %2460 = vmatprep.subr.mxu0 0.0
    %2461 = vmatpush2.msra.mxu0 0.0
    %2462 = vmatprep.subr.mxu0 0.0
    %2463 = vmatpush2.msra.mxu0 0.0
    %2464 = vmatprep.subr.mxu0 0.0
    %2465 = vmatpush2.msra.mxu0 0.0
    %2466 = vmatprep.subr.mxu0 0.0
    %2467 = vmatpush2.msra.mxu0 0.0
    %2468 = vmatprep.subr.mxu0 0.0
    %2469 = vmatpush2.msra.mxu0 0.0
    %2470 = vmatprep.subr.mxu0 0.0
    %2471 = vmatpush2.msra.mxu0 0.0
    %2472 = vmatprep.subr.mxu0 0.0
    %2473 = vmatpush2.msra.mxu0 0.0
    %2474 = vmatprep.subr.mxu0 0.0
    %2475 = vmatpush2.msra.mxu0 0.0
    %2476 = vmatprep.mubr.f32.mxu0 0.0
    %2477 = vmatmul.mubr.f32.gmra.mxu0 %v2411
    %v2478 = vpop.f32.mrf.mxu0
    %v2479 = vadd.f32 %v622, %v2478
    %v2480 = vpop.f32.mrf.mxu0
    %2481 = vdwg.mxu0
    %v2482 = vsel %vm694, %v2479, -inf
    %2483 = vmax.xlane.f32.xlu0 %v2482
    %v2484 = vpop.xlane.xlu0 %2483
    %v2485 = vsub.f32 %v2479, %v2484
    %v2486 = vmul.f32 %v2485, 1.442695
    %v2487 = vpow.pop %v2486
    %v2488 = vsel %vm694, %v2487, 0.0
    %2489 = vadd.xlane.f32.xlu0 %v2488
    %v2490 = vpop.xlane.xlu0 %2489
    %v2491 = vrcp.pop %v2490
    %v2492 = vmul.f32 %v2487, %v2491
    %s2493 = scalar_lea.vmem [#allocation2], 8
    %2494 = vst [vmem:[%s2493] sm:$0x3] %v2492
    %s2495 = scalar_lea.vmem %s0, 40
    %v2496 = vld [vmem:[%s2495] sm:$0xff]
    %2497 = vmatprep.subr.mxu0 %v85
    %2498 = vmatpush1.msra.mxu0 %v84
    %2499 = vmatprep.subr.mxu0 %v81
    %2500 = vmatpush1.msra.mxu0 %v80
    %2501 = vmatprep.subr.mxu0 %v77
    %2502 = vmatpush1.msra.mxu0 %v76
    %2503 = vmatprep.subr.mxu0 %v73
    %2504 = vmatpush1.msra.mxu0 %v72
    %2505 = vmatprep.subr.mxu0 %v69
    %2506 = vmatpush1.msra.mxu0 %v68
    %2507 = vmatprep.subr.mxu0 %v65
    %2508 = vmatpush1.msra.mxu0 %v64
    %2509 = vmatprep.subr.mxu0 %v61
    %2510 = vmatpush1.msra.mxu0 %v60
    %2511 = vmatprep.subr.mxu0 %v57
    %2512 = vmatpush1.msra.mxu0 %v56
    %2513 = vmatprep.subr.mxu0 %v53
    %2514 = vmatpush1.msra.mxu0 %v52
    %2515 = vmatprep.subr.mxu0 %v49
    %2516 = vmatpush1.msra.mxu0 %v48
    %2517 = vmatprep.subr.mxu0 %v45
    %2518 = vmatpush1.msra.mxu0 %v44
    %2519 = vmatprep.subr.mxu0 %v41
    %2520 = vmatpush1.msra.mxu0 %v40
    %2521 = vmatprep.subr.mxu0 %v37
    %2522 = vmatpush1.msra.mxu0 %v36
    %2523 = vmatprep.subr.mxu0 %v33
    %2524 = vmatpush1.msra.mxu0 %v32
    %2525 = vmatprep.subr.mxu0 %v29
    %2526 = vmatpush1.msra.mxu0 %v28
    %2527 = vmatprep.subr.mxu0 %v25
    %2528 = vmatpush1.msra.mxu0 %v24
    %2529 = vmatprep.subr.mxu0 0.0
    %2530 = vmatpush2.msra.mxu0 0.0
    %2531 = vmatprep.subr.mxu0 0.0
    %2532 = vmatpush2.msra.mxu0 0.0
    %2533 = vmatprep.subr.mxu0 0.0
    %2534 = vmatpush2.msra.mxu0 0.0
    %2535 = vmatprep.subr.mxu0 0.0
    %2536 = vmatpush2.msra.mxu0 0.0
    %2537 = vmatprep.subr.mxu0 0.0
    %2538 = vmatpush2.msra.mxu0 0.0
    %2539 = vmatprep.subr.mxu0 0.0
    %2540 = vmatpush2.msra.mxu0 0.0
    %2541 = vmatprep.subr.mxu0 0.0
    %2542 = vmatpush2.msra.mxu0 0.0
    %2543 = vmatprep.subr.mxu0 0.0
    %2544 = vmatpush2.msra.mxu0 0.0
    %2545 = vmatprep.subr.mxu0 0.0
    %2546 = vmatpush2.msra.mxu0 0.0
    %2547 = vmatprep.subr.mxu0 0.0
    %2548 = vmatpush2.msra.mxu0 0.0
    %2549 = vmatprep.subr.mxu0 0.0
    %2550 = vmatpush2.msra.mxu0 0.0
    %2551 = vmatprep.subr.mxu0 0.0
    %2552 = vmatpush2.msra.mxu0 0.0
    %2553 = vmatprep.subr.mxu0 0.0
    %2554 = vmatpush2.msra.mxu0 0.0
    %2555 = vmatprep.subr.mxu0 0.0
    %2556 = vmatpush2.msra.mxu0 0.0
    %2557 = vmatprep.subr.mxu0 0.0
    %2558 = vmatpush2.msra.mxu0 0.0
    %2559 = vmatprep.subr.mxu0 0.0
    %2560 = vmatpush2.msra.mxu0 0.0
    %2561 = vmatprep.mubr.f32.mxu0 0.0
    %2562 = vmatmul.mubr.f32.gmra.mxu0 %v2245
    %v2563 = vpop.f32.mrf.mxu0
    %v2564 = vadd.f32 0.0, %v2563
    %v2565 = vpop.f32.mrf.mxu0
    %v2566 = vadd.f32 0.0, %v2565
    %2567 = vdwg.mxu0
    %2568 = vmatprep.subr.mxu0 %v87
    %2569 = vmatpush1.msra.mxu0 %v86
    %2570 = vmatprep.subr.mxu0 %v83
    %2571 = vmatpush1.msra.mxu0 %v82
    %2572 = vmatprep.subr.mxu0 %v79
    %2573 = vmatpush1.msra.mxu0 %v78
    %2574 = vmatprep.subr.mxu0 %v75
    %2575 = vmatpush1.msra.mxu0 %v74
    %2576 = vmatprep.subr.mxu0 %v71
    %2577 = vmatpush1.msra.mxu0 %v70
    %2578 = vmatprep.subr.mxu0 %v67
    %2579 = vmatpush1.msra.mxu0 %v66
    %2580 = vmatprep.subr.mxu0 %v63
    %2581 = vmatpush1.msra.mxu0 %v62
    %2582 = vmatprep.subr.mxu0 %v59
    %2583 = vmatpush1.msra.mxu0 %v58
    %2584 = vmatprep.subr.mxu0 %v55
    %2585 = vmatpush1.msra.mxu0 %v54
    %2586 = vmatprep.subr.mxu0 %v51
    %2587 = vmatpush1.msra.mxu0 %v50
    %2588 = vmatprep.subr.mxu0 %v47
    %2589 = vmatpush1.msra.mxu0 %v46
    %2590 = vmatprep.subr.mxu0 %v43
    %2591 = vmatpush1.msra.mxu0 %v42
    %2592 = vmatprep.subr.mxu0 %v39
    %2593 = vmatpush1.msra.mxu0 %v38
    %2594 = vmatprep.subr.mxu0 %v35
    %2595 = vmatpush1.msra.mxu0 %v34
    %2596 = vmatprep.subr.mxu0 %v31
    %2597 = vmatpush1.msra.mxu0 %v30
    %2598 = vmatprep.subr.mxu0 %v27
    %2599 = vmatpush1.msra.mxu0 %v26
    %2600 = vmatprep.subr.mxu0 0.0
    %2601 = vmatpush2.msra.mxu0 0.0
    %2602 = vmatprep.subr.mxu0 0.0
    %2603 = vmatpush2.msra.mxu0 0.0
    %2604 = vmatprep.subr.mxu0 0.0
    %2605 = vmatpush2.msra.mxu0 0.0
    %2606 = vmatprep.subr.mxu0 0.0
    %2607 = vmatpush2.msra.mxu0 0.0
    %2608 = vmatprep.subr.mxu0 0.0
    %2609 = vmatpush2.msra.mxu0 0.0
    %2610 = vmatprep.subr.mxu0 0.0
    %2611 = vmatpush2.msra.mxu0 0.0
    %2612 = vmatprep.subr.mxu0 0.0
    %2613 = vmatpush2.msra.mxu0 0.0
    %2614 = vmatprep.subr.mxu0 0.0
    %2615 = vmatpush2.msra.mxu0 0.0
    %2616 = vmatprep.subr.mxu0 0.0
    %2617 = vmatpush2.msra.mxu0 0.0
    %2618 = vmatprep.subr.mxu0 0.0
    %2619 = vmatpush2.msra.mxu0 0.0
    %2620 = vmatprep.subr.mxu0 0.0
    %2621 = vmatpush2.msra.mxu0 0.0
    %2622 = vmatprep.subr.mxu0 0.0
    %2623 = vmatpush2.msra.mxu0 0.0
    %2624 = vmatprep.subr.mxu0 0.0
    %2625 = vmatpush2.msra.mxu0 0.0
    %2626 = vmatprep.subr.mxu0 0.0
    %2627 = vmatpush2.msra.mxu0 0.0
    %2628 = vmatprep.subr.mxu0 0.0
    %2629 = vmatpush2.msra.mxu0 0.0
    %2630 = vmatprep.subr.mxu0 0.0
    %2631 = vmatpush2.msra.mxu0 0.0
    %2632 = vmatprep.mubr.f32.mxu0 0.0
    %2633 = vmatmul.mubr.f32.gmra.mxu0 %v2245
    %v2634 = vpop.f32.mrf.mxu0
    %v2635 = vadd.f32 0.0, %v2634
    %v2636 = vpop.f32.mrf.mxu0
    %v2637 = vadd.f32 0.0, %v2636
    %2638 = vdwg.mxu0
    %v2643 = vcombine.low %v2564, %v2566
    %v2644 = vcombine.low %v2635, %v2637
    %v2646 = vunpack.c.l.s4 1983009808
    %v2647 = vunpack.c.0.s8 %v2646
    %v2648 = vlaneseq
    %v2649 = vshrl.u32 %v2648, 7
    %v2650 = vsub.s32 %v2647, %v2649
    %v2651 = vrot.slane %v2643, %v2650
    %v2653 = vunpack.c.l.s4 1983009808
    %v2654 = vunpack.c.0.s8 %v2653
    %v2655 = vlaneseq
    %v2656 = vshrl.u32 %v2655, 7
    %v2657 = vsub.s32 %v2654, %v2656
    %v2658 = vrot.slane %v2644, %v2657
    %v2659 = vcombine.low %v2651, %v2658
    %v2661 = vadd.f32 %v2496, %v2659
    %v2662 = vxor.u32 %v2661, 2147483648
    %v2663 = vmul.f32 %v2662, 1.442695
    %v2664 = vpow.pop %v2663
    %v2665 = vadd.f32 %v2664, 1.0
    %v2666 = vrcp.pop %v2665
    %v2667 = vmul.f32 1.0, %v2666
    %v2669 = vrot.slane %v2661, 2
    %v2671 = vxor.u32 %v2669, 2147483648
    %v2672 = vmul.f32 %v2671, 1.442695
    %v2673 = vpow.pop %v2672
    %v2674 = vadd.f32 %v2673, 1.0
    %v2675 = vrcp.pop %v2674
    %v2676 = vmul.f32 1.0, %v2675
    %v2677 = vrot.slane %v2661, 4
    %v2679 = vtanh.pop %v2677
    %v2680 = vrot.slane %v2661, 6
    %v2682 = vxor.u32 %v2680, 2147483648
    %v2683 = vmul.f32 %v2682, 1.442695
    %v2684 = vpow.pop %v2683
    %v2685 = vadd.f32 %v2684, 1.0
    %v2686 = vrcp.pop %v2685
    %v2687 = vmul.f32 1.0, %v2686
    %v2688 = vmul.f32 %v2676, %v2243
    %v2689 = vmul.f32 %v2667, %v2679
    %v2690 = vadd.f32 %v2688, %v2689
    %v2691 = vtanh.pop %v2690
    %v2692 = vmul.f32 %v2687, %v2691
    %2693 = vmatprep.subr.mxu0 %v149
    %2694 = vmatpush1.msra.mxu0 %v148
    %2695 = vmatprep.subr.mxu0 %v145
    %2696 = vmatpush1.msra.mxu0 %v144
    %2697 = vmatprep.subr.mxu0 %v141
    %2698 = vmatpush1.msra.mxu0 %v140
    %2699 = vmatprep.subr.mxu0 %v137
    %2700 = vmatpush1.msra.mxu0 %v136
    %2701 = vmatprep.subr.mxu0 %v133
    %2702 = vmatpush1.msra.mxu0 %v132
    %2703 = vmatprep.subr.mxu0 %v129
    %2704 = vmatpush1.msra.mxu0 %v128
    %2705 = vmatprep.subr.mxu0 %v125
    %2706 = vmatpush1.msra.mxu0 %v124
    %2707 = vmatprep.subr.mxu0 %v121
    %2708 = vmatpush1.msra.mxu0 %v120
    %2709 = vmatprep.subr.mxu0 %v117
    %2710 = vmatpush1.msra.mxu0 %v116
    %2711 = vmatprep.subr.mxu0 %v113
    %2712 = vmatpush1.msra.mxu0 %v112
    %2713 = vmatprep.subr.mxu0 %v109
    %2714 = vmatpush1.msra.mxu0 %v108
    %2715 = vmatprep.subr.mxu0 %v105
    %2716 = vmatpush1.msra.mxu0 %v104
    %2717 = vmatprep.subr.mxu0 %v101
    %2718 = vmatpush1.msra.mxu0 %v100
    %2719 = vmatprep.subr.mxu0 %v97
    %2720 = vmatpush1.msra.mxu0 %v96
    %2721 = vmatprep.subr.mxu0 %v93
    %2722 = vmatpush1.msra.mxu0 %v92
    %2723 = vmatprep.subr.mxu0 %v89
    %2724 = vmatpush1.msra.mxu0 %v88
    %2725 = vmatprep.subr.mxu0 %v213
    %2726 = vmatpush2.msra.mxu0 %v212
    %2727 = vmatprep.subr.mxu0 %v209
    %2728 = vmatpush2.msra.mxu0 %v208
    %2729 = vmatprep.subr.mxu0 %v205
    %2730 = vmatpush2.msra.mxu0 %v204
    %2731 = vmatprep.subr.mxu0 %v201
    %2732 = vmatpush2.msra.mxu0 %v200
    %2733 = vmatprep.subr.mxu0 %v197
    %2734 = vmatpush2.msra.mxu0 %v196
    %2735 = vmatprep.subr.mxu0 %v193
    %2736 = vmatpush2.msra.mxu0 %v192
    %2737 = vmatprep.subr.mxu0 %v189
    %2738 = vmatpush2.msra.mxu0 %v188
    %2739 = vmatprep.subr.mxu0 %v185
    %2740 = vmatpush2.msra.mxu0 %v184
    %2741 = vmatprep.subr.mxu0 %v181
    %2742 = vmatpush2.msra.mxu0 %v180
    %2743 = vmatprep.subr.mxu0 %v177
    %2744 = vmatpush2.msra.mxu0 %v176
    %2745 = vmatprep.subr.mxu0 %v173
    %2746 = vmatpush2.msra.mxu0 %v172
    %2747 = vmatprep.subr.mxu0 %v169
    %2748 = vmatpush2.msra.mxu0 %v168
    %2749 = vmatprep.subr.mxu0 %v165
    %2750 = vmatpush2.msra.mxu0 %v164
    %2751 = vmatprep.subr.mxu0 %v161
    %2752 = vmatpush2.msra.mxu0 %v160
    %2753 = vmatprep.subr.mxu0 %v157
    %2754 = vmatpush2.msra.mxu0 %v156
    %2755 = vmatprep.subr.mxu0 %v153
    %2756 = vmatpush2.msra.mxu0 %v152
    %2757 = vmatprep.mubr.f32.mxu0 %v2411
    %2758 = vmatmul.mubr.f32.gmra.mxu0 %v2692
    %v2759 = vpop.f32.mrf.mxu0
    %v2760 = vadd.f32 %v435, %v2759
    %v2761 = vpop.f32.mrf.mxu0
    %v2762 = vadd.f32 %v439, %v2761
    %2763 = vdwg.mxu0
    %2764 = vmatprep.subr.mxu0 %v151
    %2765 = vmatpush1.msra.mxu0 %v150
    %2766 = vmatprep.subr.mxu0 %v147
    %2767 = vmatpush1.msra.mxu0 %v146
    %2768 = vmatprep.subr.mxu0 %v143
    %2769 = vmatpush1.msra.mxu0 %v142
    %2770 = vmatprep.subr.mxu0 %v139
    %2771 = vmatpush1.msra.mxu0 %v138
    %2772 = vmatprep.subr.mxu0 %v135
    %2773 = vmatpush1.msra.mxu0 %v134
    %2774 = vmatprep.subr.mxu0 %v131
    %2775 = vmatpush1.msra.mxu0 %v130
    %2776 = vmatprep.subr.mxu0 %v127
    %2777 = vmatpush1.msra.mxu0 %v126
    %2778 = vmatprep.subr.mxu0 %v123
    %2779 = vmatpush1.msra.mxu0 %v122
    %2780 = vmatprep.subr.mxu0 %v119
    %2781 = vmatpush1.msra.mxu0 %v118
    %2782 = vmatprep.subr.mxu0 %v115
    %2783 = vmatpush1.msra.mxu0 %v114
    %2784 = vmatprep.subr.mxu0 %v111
    %2785 = vmatpush1.msra.mxu0 %v110
    %2786 = vmatprep.subr.mxu0 %v107
    %2787 = vmatpush1.msra.mxu0 %v106
    %2788 = vmatprep.subr.mxu0 %v103
    %2789 = vmatpush1.msra.mxu0 %v102
    %2790 = vmatprep.subr.mxu0 %v99
    %2791 = vmatpush1.msra.mxu0 %v98
    %2792 = vmatprep.subr.mxu0 %v95
    %2793 = vmatpush1.msra.mxu0 %v94
    %2794 = vmatprep.subr.mxu0 %v91
    %2795 = vmatpush1.msra.mxu0 %v90
    %2796 = vmatprep.subr.mxu0 %v215
    %2797 = vmatpush2.msra.mxu0 %v214
    %2798 = vmatprep.subr.mxu0 %v211
    %2799 = vmatpush2.msra.mxu0 %v210
    %2800 = vmatprep.subr.mxu0 %v207
    %2801 = vmatpush2.msra.mxu0 %v206
    %2802 = vmatprep.subr.mxu0 %v203
    %2803 = vmatpush2.msra.mxu0 %v202
    %2804 = vmatprep.subr.mxu0 %v199
    %2805 = vmatpush2.msra.mxu0 %v198
    %2806 = vmatprep.subr.mxu0 %v195
    %2807 = vmatpush2.msra.mxu0 %v194
    %2808 = vmatprep.subr.mxu0 %v191
    %2809 = vmatpush2.msra.mxu0 %v190
    %2810 = vmatprep.subr.mxu0 %v187
    %2811 = vmatpush2.msra.mxu0 %v186
    %2812 = vmatprep.subr.mxu0 %v183
    %2813 = vmatpush2.msra.mxu0 %v182
    %2814 = vmatprep.subr.mxu0 %v179
    %2815 = vmatpush2.msra.mxu0 %v178
    %2816 = vmatprep.subr.mxu0 %v175
    %2817 = vmatpush2.msra.mxu0 %v174
    %2818 = vmatprep.subr.mxu0 %v171
    %2819 = vmatpush2.msra.mxu0 %v170
    %2820 = vmatprep.subr.mxu0 %v167
    %2821 = vmatpush2.msra.mxu0 %v166
    %2822 = vmatprep.subr.mxu0 %v163
    %2823 = vmatpush2.msra.mxu0 %v162
    %2824 = vmatprep.subr.mxu0 %v159
    %2825 = vmatpush2.msra.mxu0 %v158
    %2826 = vmatprep.subr.mxu0 %v155
    %2827 = vmatpush2.msra.mxu0 %v154
    %2828 = vmatprep.mubr.f32.mxu0 %v2411
    %2829 = vmatmul.mubr.f32.gmra.mxu0 %v2692
    %v2830 = vpop.f32.mrf.mxu0
    %v2831 = vadd.f32 %v443, %v2830
    %v2832 = vpop.f32.mrf.mxu0
    %v2833 = vadd.f32 %v447, %v2832
    %2834 = vdwg.mxu0
    %v2835 = vxor.u32 %v2760, 2147483648
    %v2836 = vmul.f32 %v2835, 1.442695
    %v2837 = vpow.pop %v2836
    %v2838 = vadd.f32 %v2837, 1.0
    %v2839 = vrcp.pop %v2838
    %v2840 = vmul.f32 1.0, %v2839
    %v2841 = vxor.u32 %v2762, 2147483648
    %v2842 = vmul.f32 %v2841, 1.442695
    %v2843 = vpow.pop %v2842
    %v2844 = vadd.f32 %v2843, 1.0
    %v2845 = vrcp.pop %v2844
    %v2846 = vmul.f32 1.0, %v2845
    %v2847 = vtanh.pop %v2831
    %v2848 = vxor.u32 %v2833, 2147483648
    %v2849 = vmul.f32 %v2848, 1.442695
    %v2850 = vpow.pop %v2849
    %v2851 = vadd.f32 %v2850, 1.0
    %v2852 = vrcp.pop %v2851
    %v2853 = vmul.f32 1.0, %v2852
    %v2854 = vmul.f32 %v2846, %v2409
    %v2855 = vmul.f32 %v2840, %v2847
    %v2856 = vadd.f32 %v2854, %v2855
    %v2857 = vtanh.pop %v2856
    %v2858 = vmul.f32 %v2853, %v2857
    %2859 = vmatprep.subr.mxu0 0.0
    %2860 = vmatpush1.msra.mxu0 %v232
    %2861 = vmatprep.subr.mxu0 0.0
    %2862 = vmatpush1.msra.mxu0 %v231
    %2863 = vmatprep.subr.mxu0 0.0
    %2864 = vmatpush1.msra.mxu0 %v230
    %2865 = vmatprep.subr.mxu0 0.0
    %2866 = vmatpush1.msra.mxu0 %v229
    %2867 = vmatprep.subr.mxu0 0.0
    %2868 = vmatpush1.msra.mxu0 %v228
    %2869 = vmatprep.subr.mxu0 0.0
    %2870 = vmatpush1.msra.mxu0 %v227
    %2871 = vmatprep.subr.mxu0 0.0
    %2872 = vmatpush1.msra.mxu0 %v226
    %2873 = vmatprep.subr.mxu0 0.0
    %2874 = vmatpush1.msra.mxu0 %v225
    %2875 = vmatprep.subr.mxu0 0.0
    %2876 = vmatpush1.msra.mxu0 %v224
    %2877 = vmatprep.subr.mxu0 0.0
    %2878 = vmatpush1.msra.mxu0 %v223
    %2879 = vmatprep.subr.mxu0 0.0
    %2880 = vmatpush1.msra.mxu0 %v222
    %2881 = vmatprep.subr.mxu0 0.0
    %2882 = vmatpush1.msra.mxu0 %v221
    %2883 = vmatprep.subr.mxu0 0.0
    %2884 = vmatpush1.msra.mxu0 %v220
    %2885 = vmatprep.subr.mxu0 0.0
    %2886 = vmatpush1.msra.mxu0 %v219
    %2887 = vmatprep.subr.mxu0 0.0
    %2888 = vmatpush1.msra.mxu0 %v218
    %2889 = vmatprep.subr.mxu0 0.0
    %2890 = vmatpush1.msra.mxu0 %v217
    %2891 = vmatprep.subr.mxu0 0.0
    %2892 = vmatpush2.msra.mxu0 0.0
    %2893 = vmatprep.subr.mxu0 0.0
    %2894 = vmatpush2.msra.mxu0 0.0
    %2895 = vmatprep.subr.mxu0 0.0
    %2896 = vmatpush2.msra.mxu0 0.0
    %2897 = vmatprep.subr.mxu0 0.0
    %2898 = vmatpush2.msra.mxu0 0.0
    %2899 = vmatprep.subr.mxu0 0.0
    %2900 = vmatpush2.msra.mxu0 0.0
    %2901 = vmatprep.subr.mxu0 0.0
    %2902 = vmatpush2.msra.mxu0 0.0
    %2903 = vmatprep.subr.mxu0 0.0
    %2904 = vmatpush2.msra.mxu0 0.0
    %2905 = vmatprep.subr.mxu0 0.0
    %2906 = vmatpush2.msra.mxu0 0.0
    %2907 = vmatprep.subr.mxu0 0.0
    %2908 = vmatpush2.msra.mxu0 0.0
    %2909 = vmatprep.subr.mxu0 0.0
    %2910 = vmatpush2.msra.mxu0 0.0
    %2911 = vmatprep.subr.mxu0 0.0
    %2912 = vmatpush2.msra.mxu0 0.0
    %2913 = vmatprep.subr.mxu0 0.0
    %2914 = vmatpush2.msra.mxu0 0.0
    %2915 = vmatprep.subr.mxu0 0.0
    %2916 = vmatpush2.msra.mxu0 0.0
    %2917 = vmatprep.subr.mxu0 0.0
    %2918 = vmatpush2.msra.mxu0 0.0
    %2919 = vmatprep.subr.mxu0 0.0
    %2920 = vmatpush2.msra.mxu0 0.0
    %2921 = vmatprep.subr.mxu0 0.0
    %2922 = vmatpush2.msra.mxu0 0.0
    %2923 = vmatprep.mubr.f32.mxu0 0.0
    %2924 = vmatmul.mubr.f32.gmra.mxu0 %v2858
    %v2925 = vpop.f32.mrf.mxu0
    %v2926 = vadd.f32 %v622, %v2925
    %v2927 = vpop.f32.mrf.mxu0
    %2928 = vdwg.mxu0
    %v2929 = vsel %vm694, %v2926, -inf
    %2930 = vmax.xlane.f32.xlu0 %v2929
    %v2931 = vpop.xlane.xlu0 %2930
    %v2932 = vsub.f32 %v2926, %v2931
    %v2933 = vmul.f32 %v2932, 1.442695
    %v2934 = vpow.pop %v2933
    %v2935 = vsel %vm694, %v2934, 0.0
    %2936 = vadd.xlane.f32.xlu0 %v2935
    %v2937 = vpop.xlane.xlu0 %2936
    %v2938 = vrcp.pop %v2937
    %v2939 = vmul.f32 %v2934, %v2938
    %s2940 = scalar_lea.vmem [#allocation2], 10
    %2941 = vst [vmem:[%s2940] sm:$0x3] %v2939
    %s2942 = scalar_lea.vmem %s0, 48
    %v2943 = vld [vmem:[%s2942] sm:$0xff]
    %2944 = vmatprep.subr.mxu0 %v85
    %2945 = vmatpush1.msra.mxu0 %v84
    %2946 = vmatprep.subr.mxu0 %v81
    %2947 = vmatpush1.msra.mxu0 %v80
    %2948 = vmatprep.subr.mxu0 %v77
    %2949 = vmatpush1.msra.mxu0 %v76
    %2950 = vmatprep.subr.mxu0 %v73
    %2951 = vmatpush1.msra.mxu0 %v72
    %2952 = vmatprep.subr.mxu0 %v69
    %2953 = vmatpush1.msra.mxu0 %v68
    %2954 = vmatprep.subr.mxu0 %v65
    %2955 = vmatpush1.msra.mxu0 %v64
    %2956 = vmatprep.subr.mxu0 %v61
    %2957 = vmatpush1.msra.mxu0 %v60
    %2958 = vmatprep.subr.mxu0 %v57
    %2959 = vmatpush1.msra.mxu0 %v56
    %2960 = vmatprep.subr.mxu0 %v53
    %2961 = vmatpush1.msra.mxu0 %v52
    %2962 = vmatprep.subr.mxu0 %v49
    %2963 = vmatpush1.msra.mxu0 %v48
    %2964 = vmatprep.subr.mxu0 %v45
    %2965 = vmatpush1.msra.mxu0 %v44
    %2966 = vmatprep.subr.mxu0 %v41
    %2967 = vmatpush1.msra.mxu0 %v40
    %2968 = vmatprep.subr.mxu0 %v37
    %2969 = vmatpush1.msra.mxu0 %v36
    %2970 = vmatprep.subr.mxu0 %v33
    %2971 = vmatpush1.msra.mxu0 %v32
    %2972 = vmatprep.subr.mxu0 %v29
    %2973 = vmatpush1.msra.mxu0 %v28
    %2974 = vmatprep.subr.mxu0 %v25
    %2975 = vmatpush1.msra.mxu0 %v24
    %2976 = vmatprep.subr.mxu0 0.0
    %2977 = vmatpush2.msra.mxu0 0.0
    %2978 = vmatprep.subr.mxu0 0.0
    %2979 = vmatpush2.msra.mxu0 0.0
    %2980 = vmatprep.subr.mxu0 0.0
    %2981 = vmatpush2.msra.mxu0 0.0
    %2982 = vmatprep.subr.mxu0 0.0
    %2983 = vmatpush2.msra.mxu0 0.0
    %2984 = vmatprep.subr.mxu0 0.0
    %2985 = vmatpush2.msra.mxu0 0.0
    %2986 = vmatprep.subr.mxu0 0.0
    %2987 = vmatpush2.msra.mxu0 0.0
    %2988 = vmatprep.subr.mxu0 0.0
    %2989 = vmatpush2.msra.mxu0 0.0
    %2990 = vmatprep.subr.mxu0 0.0
    %2991 = vmatpush2.msra.mxu0 0.0
    %2992 = vmatprep.subr.mxu0 0.0
    %2993 = vmatpush2.msra.mxu0 0.0
    %2994 = vmatprep.subr.mxu0 0.0
    %2995 = vmatpush2.msra.mxu0 0.0
    %2996 = vmatprep.subr.mxu0 0.0
    %2997 = vmatpush2.msra.mxu0 0.0
    %2998 = vmatprep.subr.mxu0 0.0
    %2999 = vmatpush2.msra.mxu0 0.0
    %3000 = vmatprep.subr.mxu0 0.0
    %3001 = vmatpush2.msra.mxu0 0.0
    %3002 = vmatprep.subr.mxu0 0.0
    %3003 = vmatpush2.msra.mxu0 0.0
    %3004 = vmatprep.subr.mxu0 0.0
    %3005 = vmatpush2.msra.mxu0 0.0
    %3006 = vmatprep.subr.mxu0 0.0
    %3007 = vmatpush2.msra.mxu0 0.0
    %3008 = vmatprep.mubr.f32.mxu0 0.0
    %3009 = vmatmul.mubr.f32.gmra.mxu0 %v2692
    %v3010 = vpop.f32.mrf.mxu0
    %v3011 = vadd.f32 0.0, %v3010
    %v3012 = vpop.f32.mrf.mxu0
    %v3013 = vadd.f32 0.0, %v3012
    %3014 = vdwg.mxu0
    %3015 = vmatprep.subr.mxu0 %v87
    %3016 = vmatpush1.msra.mxu0 %v86
    %3017 = vmatprep.subr.mxu0 %v83
    %3018 = vmatpush1.msra.mxu0 %v82
    %3019 = vmatprep.subr.mxu0 %v79
    %3020 = vmatpush1.msra.mxu0 %v78
    %3021 = vmatprep.subr.mxu0 %v75
    %3022 = vmatpush1.msra.mxu0 %v74
    %3023 = vmatprep.subr.mxu0 %v71
    %3024 = vmatpush1.msra.mxu0 %v70
    %3025 = vmatprep.subr.mxu0 %v67
    %3026 = vmatpush1.msra.mxu0 %v66
    %3027 = vmatprep.subr.mxu0 %v63
    %3028 = vmatpush1.msra.mxu0 %v62
    %3029 = vmatprep.subr.mxu0 %v59
    %3030 = vmatpush1.msra.mxu0 %v58
    %3031 = vmatprep.subr.mxu0 %v55
    %3032 = vmatpush1.msra.mxu0 %v54
    %3033 = vmatprep.subr.mxu0 %v51
    %3034 = vmatpush1.msra.mxu0 %v50
    %3035 = vmatprep.subr.mxu0 %v47
    %3036 = vmatpush1.msra.mxu0 %v46
    %3037 = vmatprep.subr.mxu0 %v43
    %3038 = vmatpush1.msra.mxu0 %v42
    %3039 = vmatprep.subr.mxu0 %v39
    %3040 = vmatpush1.msra.mxu0 %v38
    %3041 = vmatprep.subr.mxu0 %v35
    %3042 = vmatpush1.msra.mxu0 %v34
    %3043 = vmatprep.subr.mxu0 %v31
    %3044 = vmatpush1.msra.mxu0 %v30
    %3045 = vmatprep.subr.mxu0 %v27
    %3046 = vmatpush1.msra.mxu0 %v26
    %3047 = vmatprep.subr.mxu0 0.0
    %3048 = vmatpush2.msra.mxu0 0.0
    %3049 = vmatprep.subr.mxu0 0.0
    %3050 = vmatpush2.msra.mxu0 0.0
    %3051 = vmatprep.subr.mxu0 0.0
    %3052 = vmatpush2.msra.mxu0 0.0
    %3053 = vmatprep.subr.mxu0 0.0
    %3054 = vmatpush2.msra.mxu0 0.0
    %3055 = vmatprep.subr.mxu0 0.0
    %3056 = vmatpush2.msra.mxu0 0.0
    %3057 = vmatprep.subr.mxu0 0.0
    %3058 = vmatpush2.msra.mxu0 0.0
    %3059 = vmatprep.subr.mxu0 0.0
    %3060 = vmatpush2.msra.mxu0 0.0
    %3061 = vmatprep.subr.mxu0 0.0
    %3062 = vmatpush2.msra.mxu0 0.0
    %3063 = vmatprep.subr.mxu0 0.0
    %3064 = vmatpush2.msra.mxu0 0.0
    %3065 = vmatprep.subr.mxu0 0.0
    %3066 = vmatpush2.msra.mxu0 0.0
    %3067 = vmatprep.subr.mxu0 0.0
    %3068 = vmatpush2.msra.mxu0 0.0
    %3069 = vmatprep.subr.mxu0 0.0
    %3070 = vmatpush2.msra.mxu0 0.0
    %3071 = vmatprep.subr.mxu0 0.0
    %3072 = vmatpush2.msra.mxu0 0.0
    %3073 = vmatprep.subr.mxu0 0.0
    %3074 = vmatpush2.msra.mxu0 0.0
    %3075 = vmatprep.subr.mxu0 0.0
    %3076 = vmatpush2.msra.mxu0 0.0
    %3077 = vmatprep.subr.mxu0 0.0
    %3078 = vmatpush2.msra.mxu0 0.0
    %3079 = vmatprep.mubr.f32.mxu0 0.0
    %3080 = vmatmul.mubr.f32.gmra.mxu0 %v2692
    %v3081 = vpop.f32.mrf.mxu0
    %v3082 = vadd.f32 0.0, %v3081
    %v3083 = vpop.f32.mrf.mxu0
    %v3084 = vadd.f32 0.0, %v3083
    %3085 = vdwg.mxu0
    %v3090 = vcombine.low %v3011, %v3013
    %v3091 = vcombine.low %v3082, %v3084
    %v3093 = vunpack.c.l.s4 1983009808
    %v3094 = vunpack.c.0.s8 %v3093
    %v3095 = vlaneseq
    %v3096 = vshrl.u32 %v3095, 7
    %v3097 = vsub.s32 %v3094, %v3096
    %v3098 = vrot.slane %v3090, %v3097
    %v3100 = vunpack.c.l.s4 1983009808
    %v3101 = vunpack.c.0.s8 %v3100
    %v3102 = vlaneseq
    %v3103 = vshrl.u32 %v3102, 7
    %v3104 = vsub.s32 %v3101, %v3103
    %v3105 = vrot.slane %v3091, %v3104
    %v3106 = vcombine.low %v3098, %v3105
    %v3108 = vadd.f32 %v2943, %v3106
    %v3109 = vxor.u32 %v3108, 2147483648
    %v3110 = vmul.f32 %v3109, 1.442695
    %v3111 = vpow.pop %v3110
    %v3112 = vadd.f32 %v3111, 1.0
    %v3113 = vrcp.pop %v3112
    %v3114 = vmul.f32 1.0, %v3113
    %v3116 = vrot.slane %v3108, 2
    %v3118 = vxor.u32 %v3116, 2147483648
    %v3119 = vmul.f32 %v3118, 1.442695
    %v3120 = vpow.pop %v3119
    %v3121 = vadd.f32 %v3120, 1.0
    %v3122 = vrcp.pop %v3121
    %v3123 = vmul.f32 1.0, %v3122
    %v3124 = vrot.slane %v3108, 4
    %v3126 = vtanh.pop %v3124
    %v3127 = vrot.slane %v3108, 6
    %v3129 = vxor.u32 %v3127, 2147483648
    %v3130 = vmul.f32 %v3129, 1.442695
    %v3131 = vpow.pop %v3130
    %v3132 = vadd.f32 %v3131, 1.0
    %v3133 = vrcp.pop %v3132
    %v3134 = vmul.f32 1.0, %v3133
    %v3135 = vmul.f32 %v3123, %v2690
    %v3136 = vmul.f32 %v3114, %v3126
    %v3137 = vadd.f32 %v3135, %v3136
    %v3138 = vtanh.pop %v3137
    %v3139 = vmul.f32 %v3134, %v3138
    %3140 = vmatprep.subr.mxu0 %v149
    %3141 = vmatpush1.msra.mxu0 %v148
    %3142 = vmatprep.subr.mxu0 %v145
    %3143 = vmatpush1.msra.mxu0 %v144
    %3144 = vmatprep.subr.mxu0 %v141
    %3145 = vmatpush1.msra.mxu0 %v140
    %3146 = vmatprep.subr.mxu0 %v137
    %3147 = vmatpush1.msra.mxu0 %v136
    %3148 = vmatprep.subr.mxu0 %v133
    %3149 = vmatpush1.msra.mxu0 %v132
    %3150 = vmatprep.subr.mxu0 %v129
    %3151 = vmatpush1.msra.mxu0 %v128
    %3152 = vmatprep.subr.mxu0 %v125
    %3153 = vmatpush1.msra.mxu0 %v124
    %3154 = vmatprep.subr.mxu0 %v121
    %3155 = vmatpush1.msra.mxu0 %v120
    %3156 = vmatprep.subr.mxu0 %v117
    %3157 = vmatpush1.msra.mxu0 %v116
    %3158 = vmatprep.subr.mxu0 %v113
    %3159 = vmatpush1.msra.mxu0 %v112
    %3160 = vmatprep.subr.mxu0 %v109
    %3161 = vmatpush1.msra.mxu0 %v108
    %3162 = vmatprep.subr.mxu0 %v105
    %3163 = vmatpush1.msra.mxu0 %v104
    %3164 = vmatprep.subr.mxu0 %v101
    %3165 = vmatpush1.msra.mxu0 %v100
    %3166 = vmatprep.subr.mxu0 %v97
    %3167 = vmatpush1.msra.mxu0 %v96
    %3168 = vmatprep.subr.mxu0 %v93
    %3169 = vmatpush1.msra.mxu0 %v92
    %3170 = vmatprep.subr.mxu0 %v89
    %3171 = vmatpush1.msra.mxu0 %v88
    %3172 = vmatprep.subr.mxu0 %v213
    %3173 = vmatpush2.msra.mxu0 %v212
    %3174 = vmatprep.subr.mxu0 %v209
    %3175 = vmatpush2.msra.mxu0 %v208
    %3176 = vmatprep.subr.mxu0 %v205
    %3177 = vmatpush2.msra.mxu0 %v204
    %3178 = vmatprep.subr.mxu0 %v201
    %3179 = vmatpush2.msra.mxu0 %v200
    %3180 = vmatprep.subr.mxu0 %v197
    %3181 = vmatpush2.msra.mxu0 %v196
    %3182 = vmatprep.subr.mxu0 %v193
    %3183 = vmatpush2.msra.mxu0 %v192
    %3184 = vmatprep.subr.mxu0 %v189
    %3185 = vmatpush2.msra.mxu0 %v188
    %3186 = vmatprep.subr.mxu0 %v185
    %3187 = vmatpush2.msra.mxu0 %v184
    %3188 = vmatprep.subr.mxu0 %v181
    %3189 = vmatpush2.msra.mxu0 %v180
    %3190 = vmatprep.subr.mxu0 %v177
    %3191 = vmatpush2.msra.mxu0 %v176
    %3192 = vmatprep.subr.mxu0 %v173
    %3193 = vmatpush2.msra.mxu0 %v172
    %3194 = vmatprep.subr.mxu0 %v169
    %3195 = vmatpush2.msra.mxu0 %v168
    %3196 = vmatprep.subr.mxu0 %v165
    %3197 = vmatpush2.msra.mxu0 %v164
    %3198 = vmatprep.subr.mxu0 %v161
    %3199 = vmatpush2.msra.mxu0 %v160
    %3200 = vmatprep.subr.mxu0 %v157
    %3201 = vmatpush2.msra.mxu0 %v156
    %3202 = vmatprep.subr.mxu0 %v153
    %3203 = vmatpush2.msra.mxu0 %v152
    %3204 = vmatprep.mubr.f32.mxu0 %v2858
    %3205 = vmatmul.mubr.f32.gmra.mxu0 %v3139
    %v3206 = vpop.f32.mrf.mxu0
    %v3207 = vadd.f32 %v435, %v3206
    %v3208 = vpop.f32.mrf.mxu0
    %v3209 = vadd.f32 %v439, %v3208
    %3210 = vdwg.mxu0
    %3211 = vmatprep.subr.mxu0 %v151
    %3212 = vmatpush1.msra.mxu0 %v150
    %3213 = vmatprep.subr.mxu0 %v147
    %3214 = vmatpush1.msra.mxu0 %v146
    %3215 = vmatprep.subr.mxu0 %v143
    %3216 = vmatpush1.msra.mxu0 %v142
    %3217 = vmatprep.subr.mxu0 %v139
    %3218 = vmatpush1.msra.mxu0 %v138
    %3219 = vmatprep.subr.mxu0 %v135
    %3220 = vmatpush1.msra.mxu0 %v134
    %3221 = vmatprep.subr.mxu0 %v131
    %3222 = vmatpush1.msra.mxu0 %v130
    %3223 = vmatprep.subr.mxu0 %v127
    %3224 = vmatpush1.msra.mxu0 %v126
    %3225 = vmatprep.subr.mxu0 %v123
    %3226 = vmatpush1.msra.mxu0 %v122
    %3227 = vmatprep.subr.mxu0 %v119
    %3228 = vmatpush1.msra.mxu0 %v118
    %3229 = vmatprep.subr.mxu0 %v115
    %3230 = vmatpush1.msra.mxu0 %v114
    %3231 = vmatprep.subr.mxu0 %v111
    %3232 = vmatpush1.msra.mxu0 %v110
    %3233 = vmatprep.subr.mxu0 %v107
    %3234 = vmatpush1.msra.mxu0 %v106
    %3235 = vmatprep.subr.mxu0 %v103
    %3236 = vmatpush1.msra.mxu0 %v102
    %3237 = vmatprep.subr.mxu0 %v99
    %3238 = vmatpush1.msra.mxu0 %v98
    %3239 = vmatprep.subr.mxu0 %v95
    %3240 = vmatpush1.msra.mxu0 %v94
    %3241 = vmatprep.subr.mxu0 %v91
    %3242 = vmatpush1.msra.mxu0 %v90
    %3243 = vmatprep.subr.mxu0 %v215
    %3244 = vmatpush2.msra.mxu0 %v214
    %3245 = vmatprep.subr.mxu0 %v211
    %3246 = vmatpush2.msra.mxu0 %v210
    %3247 = vmatprep.subr.mxu0 %v207
    %3248 = vmatpush2.msra.mxu0 %v206
    %3249 = vmatprep.subr.mxu0 %v203
    %3250 = vmatpush2.msra.mxu0 %v202
    %3251 = vmatprep.subr.mxu0 %v199
    %3252 = vmatpush2.msra.mxu0 %v198
    %3253 = vmatprep.subr.mxu0 %v195
    %3254 = vmatpush2.msra.mxu0 %v194
    %3255 = vmatprep.subr.mxu0 %v191
    %3256 = vmatpush2.msra.mxu0 %v190
    %3257 = vmatprep.subr.mxu0 %v187
    %3258 = vmatpush2.msra.mxu0 %v186
    %3259 = vmatprep.subr.mxu0 %v183
    %3260 = vmatpush2.msra.mxu0 %v182
    %3261 = vmatprep.subr.mxu0 %v179
    %3262 = vmatpush2.msra.mxu0 %v178
    %3263 = vmatprep.subr.mxu0 %v175
    %3264 = vmatpush2.msra.mxu0 %v174
    %3265 = vmatprep.subr.mxu0 %v171
    %3266 = vmatpush2.msra.mxu0 %v170
    %3267 = vmatprep.subr.mxu0 %v167
    %3268 = vmatpush2.msra.mxu0 %v166
    %3269 = vmatprep.subr.mxu0 %v163
    %3270 = vmatpush2.msra.mxu0 %v162
    %3271 = vmatprep.subr.mxu0 %v159
    %3272 = vmatpush2.msra.mxu0 %v158
    %3273 = vmatprep.subr.mxu0 %v155
    %3274 = vmatpush2.msra.mxu0 %v154
    %3275 = vmatprep.mubr.f32.mxu0 %v2858
    %3276 = vmatmul.mubr.f32.gmra.mxu0 %v3139
    %v3277 = vpop.f32.mrf.mxu0
    %v3278 = vadd.f32 %v443, %v3277
    %v3279 = vpop.f32.mrf.mxu0
    %v3280 = vadd.f32 %v447, %v3279
    %3281 = vdwg.mxu0
    %v3282 = vxor.u32 %v3207, 2147483648
    %v3283 = vmul.f32 %v3282, 1.442695
    %v3284 = vpow.pop %v3283
    %v3285 = vadd.f32 %v3284, 1.0
    %v3286 = vrcp.pop %v3285
    %v3287 = vmul.f32 1.0, %v3286
    %v3288 = vxor.u32 %v3209, 2147483648
    %v3289 = vmul.f32 %v3288, 1.442695
    %v3290 = vpow.pop %v3289
    %v3291 = vadd.f32 %v3290, 1.0
    %v3292 = vrcp.pop %v3291
    %v3293 = vmul.f32 1.0, %v3292
    %v3294 = vtanh.pop %v3278
    %v3295 = vxor.u32 %v3280, 2147483648
    %v3296 = vmul.f32 %v3295, 1.442695
    %v3297 = vpow.pop %v3296
    %v3298 = vadd.f32 %v3297, 1.0
    %v3299 = vrcp.pop %v3298
    %v3300 = vmul.f32 1.0, %v3299
    %v3301 = vmul.f32 %v3293, %v2856
    %v3302 = vmul.f32 %v3287, %v3294
    %v3303 = vadd.f32 %v3301, %v3302
    %v3304 = vtanh.pop %v3303
    %v3305 = vmul.f32 %v3300, %v3304
    %3306 = vmatprep.subr.mxu0 0.0
    %3307 = vmatpush1.msra.mxu0 %v232
    %3308 = vmatprep.subr.mxu0 0.0
    %3309 = vmatpush1.msra.mxu0 %v231
    %3310 = vmatprep.subr.mxu0 0.0
    %3311 = vmatpush1.msra.mxu0 %v230
    %3312 = vmatprep.subr.mxu0 0.0
    %3313 = vmatpush1.msra.mxu0 %v229
    %3314 = vmatprep.subr.mxu0 0.0
    %3315 = vmatpush1.msra.mxu0 %v228
    %3316 = vmatprep.subr.mxu0 0.0
    %3317 = vmatpush1.msra.mxu0 %v227
    %3318 = vmatprep.subr.mxu0 0.0
    %3319 = vmatpush1.msra.mxu0 %v226
    %3320 = vmatprep.subr.mxu0 0.0
    %3321 = vmatpush1.msra.mxu0 %v225
    %3322 = vmatprep.subr.mxu0 0.0
    %3323 = vmatpush1.msra.mxu0 %v224
    %3324 = vmatprep.subr.mxu0 0.0
    %3325 = vmatpush1.msra.mxu0 %v223
    %3326 = vmatprep.subr.mxu0 0.0
    %3327 = vmatpush1.msra.mxu0 %v222
    %3328 = vmatprep.subr.mxu0 0.0
    %3329 = vmatpush1.msra.mxu0 %v221
    %3330 = vmatprep.subr.mxu0 0.0
    %3331 = vmatpush1.msra.mxu0 %v220
    %3332 = vmatprep.subr.mxu0 0.0
    %3333 = vmatpush1.msra.mxu0 %v219
    %3334 = vmatprep.subr.mxu0 0.0
    %3335 = vmatpush1.msra.mxu0 %v218
    %3336 = vmatprep.subr.mxu0 0.0
    %3337 = vmatpush1.msra.mxu0 %v217
    %3338 = vmatprep.subr.mxu0 0.0
    %3339 = vmatpush2.msra.mxu0 0.0
    %3340 = vmatprep.subr.mxu0 0.0
    %3341 = vmatpush2.msra.mxu0 0.0
    %3342 = vmatprep.subr.mxu0 0.0
    %3343 = vmatpush2.msra.mxu0 0.0
    %3344 = vmatprep.subr.mxu0 0.0
    %3345 = vmatpush2.msra.mxu0 0.0
    %3346 = vmatprep.subr.mxu0 0.0
    %3347 = vmatpush2.msra.mxu0 0.0
    %3348 = vmatprep.subr.mxu0 0.0
    %3349 = vmatpush2.msra.mxu0 0.0
    %3350 = vmatprep.subr.mxu0 0.0
    %3351 = vmatpush2.msra.mxu0 0.0
    %3352 = vmatprep.subr.mxu0 0.0
    %3353 = vmatpush2.msra.mxu0 0.0
    %3354 = vmatprep.subr.mxu0 0.0
    %3355 = vmatpush2.msra.mxu0 0.0
    %3356 = vmatprep.subr.mxu0 0.0
    %3357 = vmatpush2.msra.mxu0 0.0
    %3358 = vmatprep.subr.mxu0 0.0
    %3359 = vmatpush2.msra.mxu0 0.0
    %3360 = vmatprep.subr.mxu0 0.0
    %3361 = vmatpush2.msra.mxu0 0.0
    %3362 = vmatprep.subr.mxu0 0.0
    %3363 = vmatpush2.msra.mxu0 0.0
    %3364 = vmatprep.subr.mxu0 0.0
    %3365 = vmatpush2.msra.mxu0 0.0
    %3366 = vmatprep.subr.mxu0 0.0
    %3367 = vmatpush2.msra.mxu0 0.0
    %3368 = vmatprep.subr.mxu0 0.0
    %3369 = vmatpush2.msra.mxu0 0.0
    %3370 = vmatprep.mubr.f32.mxu0 0.0
    %3371 = vmatmul.mubr.f32.gmra.mxu0 %v3305
    %v3372 = vpop.f32.mrf.mxu0
    %v3373 = vadd.f32 %v622, %v3372
    %v3374 = vpop.f32.mrf.mxu0
    %3375 = vdwg.mxu0
    %v3376 = vsel %vm694, %v3373, -inf
    %3377 = vmax.xlane.f32.xlu0 %v3376
    %v3378 = vpop.xlane.xlu0 %3377
    %v3379 = vsub.f32 %v3373, %v3378
    %v3380 = vmul.f32 %v3379, 1.442695
    %v3381 = vpow.pop %v3380
    %v3382 = vsel %vm694, %v3381, 0.0
    %3383 = vadd.xlane.f32.xlu0 %v3382
    %v3384 = vpop.xlane.xlu0 %3383
    %v3385 = vrcp.pop %v3384
    %v3386 = vmul.f32 %v3381, %v3385
    %s3387 = scalar_lea.vmem [#allocation2], 12
    %3388 = vst [vmem:[%s3387] sm:$0x3] %v3386
    %s3389 = scalar_lea.vmem %s0, 56
    %v3390 = vld [vmem:[%s3389] sm:$0xff]
    %3391 = vmatprep.subr.mxu0 %v85
    %3392 = vmatpush1.msra.mxu0 %v84
    %3393 = vmatprep.subr.mxu0 %v81
    %3394 = vmatpush1.msra.mxu0 %v80
    %3395 = vmatprep.subr.mxu0 %v77
    %3396 = vmatpush1.msra.mxu0 %v76
    %3397 = vmatprep.subr.mxu0 %v73
    %3398 = vmatpush1.msra.mxu0 %v72
    %3399 = vmatprep.subr.mxu0 %v69
    %3400 = vmatpush1.msra.mxu0 %v68
    %3401 = vmatprep.subr.mxu0 %v65
    %3402 = vmatpush1.msra.mxu0 %v64
    %3403 = vmatprep.subr.mxu0 %v61
    %3404 = vmatpush1.msra.mxu0 %v60
    %3405 = vmatprep.subr.mxu0 %v57
    %3406 = vmatpush1.msra.mxu0 %v56
    %3407 = vmatprep.subr.mxu0 %v53
    %3408 = vmatpush1.msra.mxu0 %v52
    %3409 = vmatprep.subr.mxu0 %v49
    %3410 = vmatpush1.msra.mxu0 %v48
    %3411 = vmatprep.subr.mxu0 %v45
    %3412 = vmatpush1.msra.mxu0 %v44
    %3413 = vmatprep.subr.mxu0 %v41
    %3414 = vmatpush1.msra.mxu0 %v40
    %3415 = vmatprep.subr.mxu0 %v37
    %3416 = vmatpush1.msra.mxu0 %v36
    %3417 = vmatprep.subr.mxu0 %v33
    %3418 = vmatpush1.msra.mxu0 %v32
    %3419 = vmatprep.subr.mxu0 %v29
    %3420 = vmatpush1.msra.mxu0 %v28
    %3421 = vmatprep.subr.mxu0 %v25
    %3422 = vmatpush1.msra.mxu0 %v24
    %3423 = vmatprep.subr.mxu0 0.0
    %3424 = vmatpush2.msra.mxu0 0.0
    %3425 = vmatprep.subr.mxu0 0.0
    %3426 = vmatpush2.msra.mxu0 0.0
    %3427 = vmatprep.subr.mxu0 0.0
    %3428 = vmatpush2.msra.mxu0 0.0
    %3429 = vmatprep.subr.mxu0 0.0
    %3430 = vmatpush2.msra.mxu0 0.0
    %3431 = vmatprep.subr.mxu0 0.0
    %3432 = vmatpush2.msra.mxu0 0.0
    %3433 = vmatprep.subr.mxu0 0.0
    %3434 = vmatpush2.msra.mxu0 0.0
    %3435 = vmatprep.subr.mxu0 0.0
    %3436 = vmatpush2.msra.mxu0 0.0
    %3437 = vmatprep.subr.mxu0 0.0
    %3438 = vmatpush2.msra.mxu0 0.0
    %3439 = vmatprep.subr.mxu0 0.0
    %3440 = vmatpush2.msra.mxu0 0.0
    %3441 = vmatprep.subr.mxu0 0.0
    %3442 = vmatpush2.msra.mxu0 0.0
    %3443 = vmatprep.subr.mxu0 0.0
    %3444 = vmatpush2.msra.mxu0 0.0
    %3445 = vmatprep.subr.mxu0 0.0
    %3446 = vmatpush2.msra.mxu0 0.0
    %3447 = vmatprep.subr.mxu0 0.0
    %3448 = vmatpush2.msra.mxu0 0.0
    %3449 = vmatprep.subr.mxu0 0.0
    %3450 = vmatpush2.msra.mxu0 0.0
    %3451 = vmatprep.subr.mxu0 0.0
    %3452 = vmatpush2.msra.mxu0 0.0
    %3453 = vmatprep.subr.mxu0 0.0
    %3454 = vmatpush2.msra.mxu0 0.0
    %3455 = vmatprep.mubr.f32.mxu0 0.0
    %3456 = vmatmul.mubr.f32.gmra.mxu0 %v3139
    %v3457 = vpop.f32.mrf.mxu0
    %v3458 = vadd.f32 0.0, %v3457
    %v3459 = vpop.f32.mrf.mxu0
    %v3460 = vadd.f32 0.0, %v3459
    %3461 = vdwg.mxu0
    %3462 = vmatprep.subr.mxu0 %v87
    %3463 = vmatpush1.msra.mxu0 %v86
    %3464 = vmatprep.subr.mxu0 %v83
    %3465 = vmatpush1.msra.mxu0 %v82
    %3466 = vmatprep.subr.mxu0 %v79
    %3467 = vmatpush1.msra.mxu0 %v78
    %3468 = vmatprep.subr.mxu0 %v75
    %3469 = vmatpush1.msra.mxu0 %v74
    %3470 = vmatprep.subr.mxu0 %v71
    %3471 = vmatpush1.msra.mxu0 %v70
    %3472 = vmatprep.subr.mxu0 %v67
    %3473 = vmatpush1.msra.mxu0 %v66
    %3474 = vmatprep.subr.mxu0 %v63
    %3475 = vmatpush1.msra.mxu0 %v62
    %3476 = vmatprep.subr.mxu0 %v59
    %3477 = vmatpush1.msra.mxu0 %v58
    %3478 = vmatprep.subr.mxu0 %v55
    %3479 = vmatpush1.msra.mxu0 %v54
    %3480 = vmatprep.subr.mxu0 %v51
    %3481 = vmatpush1.msra.mxu0 %v50
    %3482 = vmatprep.subr.mxu0 %v47
    %3483 = vmatpush1.msra.mxu0 %v46
    %3484 = vmatprep.subr.mxu0 %v43
    %3485 = vmatpush1.msra.mxu0 %v42
    %3486 = vmatprep.subr.mxu0 %v39
    %3487 = vmatpush1.msra.mxu0 %v38
    %3488 = vmatprep.subr.mxu0 %v35
    %3489 = vmatpush1.msra.mxu0 %v34
    %3490 = vmatprep.subr.mxu0 %v31
    %3491 = vmatpush1.msra.mxu0 %v30
    %3492 = vmatprep.subr.mxu0 %v27
    %3493 = vmatpush1.msra.mxu0 %v26
    %3494 = vmatprep.subr.mxu0 0.0
    %3495 = vmatpush2.msra.mxu0 0.0
    %3496 = vmatprep.subr.mxu0 0.0
    %3497 = vmatpush2.msra.mxu0 0.0
    %3498 = vmatprep.subr.mxu0 0.0
    %3499 = vmatpush2.msra.mxu0 0.0
    %3500 = vmatprep.subr.mxu0 0.0
    %3501 = vmatpush2.msra.mxu0 0.0
    %3502 = vmatprep.subr.mxu0 0.0
    %3503 = vmatpush2.msra.mxu0 0.0
    %3504 = vmatprep.subr.mxu0 0.0
    %3505 = vmatpush2.msra.mxu0 0.0
    %3506 = vmatprep.subr.mxu0 0.0
    %3507 = vmatpush2.msra.mxu0 0.0
    %3508 = vmatprep.subr.mxu0 0.0
    %3509 = vmatpush2.msra.mxu0 0.0
    %3510 = vmatprep.subr.mxu0 0.0
    %3511 = vmatpush2.msra.mxu0 0.0
    %3512 = vmatprep.subr.mxu0 0.0
    %3513 = vmatpush2.msra.mxu0 0.0
    %3514 = vmatprep.subr.mxu0 0.0
    %3515 = vmatpush2.msra.mxu0 0.0
    %3516 = vmatprep.subr.mxu0 0.0
    %3517 = vmatpush2.msra.mxu0 0.0
    %3518 = vmatprep.subr.mxu0 0.0
    %3519 = vmatpush2.msra.mxu0 0.0
    %3520 = vmatprep.subr.mxu0 0.0
    %3521 = vmatpush2.msra.mxu0 0.0
    %3522 = vmatprep.subr.mxu0 0.0
    %3523 = vmatpush2.msra.mxu0 0.0
    %3524 = vmatprep.subr.mxu0 0.0
    %3525 = vmatpush2.msra.mxu0 0.0
    %3526 = vmatprep.mubr.f32.mxu0 0.0
    %3527 = vmatmul.mubr.f32.gmra.mxu0 %v3139
    %v3528 = vpop.f32.mrf.mxu0
    %v3529 = vadd.f32 0.0, %v3528
    %v3530 = vpop.f32.mrf.mxu0
    %v3531 = vadd.f32 0.0, %v3530
    %3532 = vdwg.mxu0
    %v3537 = vcombine.low %v3458, %v3460
    %v3538 = vcombine.low %v3529, %v3531
    %v3540 = vunpack.c.l.s4 1983009808
    %v3541 = vunpack.c.0.s8 %v3540
    %v3542 = vlaneseq
    %v3543 = vshrl.u32 %v3542, 7
    %v3544 = vsub.s32 %v3541, %v3543
    %v3545 = vrot.slane %v3537, %v3544
    %v3547 = vunpack.c.l.s4 1983009808
    %v3548 = vunpack.c.0.s8 %v3547
    %v3549 = vlaneseq
    %v3550 = vshrl.u32 %v3549, 7
    %v3551 = vsub.s32 %v3548, %v3550
    %v3552 = vrot.slane %v3538, %v3551
    %v3553 = vcombine.low %v3545, %v3552
    %v3555 = vadd.f32 %v3390, %v3553
    %v3556 = vxor.u32 %v3555, 2147483648
    %v3557 = vmul.f32 %v3556, 1.442695
    %v3558 = vpow.pop %v3557
    %v3559 = vadd.f32 %v3558, 1.0
    %v3560 = vrcp.pop %v3559
    %v3561 = vmul.f32 1.0, %v3560
    %v3563 = vrot.slane %v3555, 2
    %v3565 = vxor.u32 %v3563, 2147483648
    %v3566 = vmul.f32 %v3565, 1.442695
    %v3567 = vpow.pop %v3566
    %v3568 = vadd.f32 %v3567, 1.0
    %v3569 = vrcp.pop %v3568
    %v3570 = vmul.f32 1.0, %v3569
    %v3571 = vrot.slane %v3555, 4
    %v3573 = vtanh.pop %v3571
    %v3574 = vrot.slane %v3555, 6
    %v3576 = vxor.u32 %v3574, 2147483648
    %v3577 = vmul.f32 %v3576, 1.442695
    %v3578 = vpow.pop %v3577
    %v3579 = vadd.f32 %v3578, 1.0
    %v3580 = vrcp.pop %v3579
    %v3581 = vmul.f32 1.0, %v3580
    %v3582 = vmul.f32 %v3570, %v3137
    %v3583 = vmul.f32 %v3561, %v3573
    %v3584 = vadd.f32 %v3582, %v3583
    %v3585 = vtanh.pop %v3584
    %v3586 = vmul.f32 %v3581, %v3585
    %3587 = vmatprep.subr.mxu0 %v149
    %3588 = vmatpush1.msra.mxu0 %v148
    %3589 = vmatprep.subr.mxu0 %v145
    %3590 = vmatpush1.msra.mxu0 %v144
    %3591 = vmatprep.subr.mxu0 %v141
    %3592 = vmatpush1.msra.mxu0 %v140
    %3593 = vmatprep.subr.mxu0 %v137
    %3594 = vmatpush1.msra.mxu0 %v136
    %3595 = vmatprep.subr.mxu0 %v133
    %3596 = vmatpush1.msra.mxu0 %v132
    %3597 = vmatprep.subr.mxu0 %v129
    %3598 = vmatpush1.msra.mxu0 %v128
    %3599 = vmatprep.subr.mxu0 %v125
    %3600 = vmatpush1.msra.mxu0 %v124
    %3601 = vmatprep.subr.mxu0 %v121
    %3602 = vmatpush1.msra.mxu0 %v120
    %3603 = vmatprep.subr.mxu0 %v117
    %3604 = vmatpush1.msra.mxu0 %v116
    %3605 = vmatprep.subr.mxu0 %v113
    %3606 = vmatpush1.msra.mxu0 %v112
    %3607 = vmatprep.subr.mxu0 %v109
    %3608 = vmatpush1.msra.mxu0 %v108
    %3609 = vmatprep.subr.mxu0 %v105
    %3610 = vmatpush1.msra.mxu0 %v104
    %3611 = vmatprep.subr.mxu0 %v101
    %3612 = vmatpush1.msra.mxu0 %v100
    %3613 = vmatprep.subr.mxu0 %v97
    %3614 = vmatpush1.msra.mxu0 %v96
    %3615 = vmatprep.subr.mxu0 %v93
    %3616 = vmatpush1.msra.mxu0 %v92
    %3617 = vmatprep.subr.mxu0 %v89
    %3618 = vmatpush1.msra.mxu0 %v88
    %3619 = vmatprep.subr.mxu0 %v213
    %3620 = vmatpush2.msra.mxu0 %v212
    %3621 = vmatprep.subr.mxu0 %v209
    %3622 = vmatpush2.msra.mxu0 %v208
    %3623 = vmatprep.subr.mxu0 %v205
    %3624 = vmatpush2.msra.mxu0 %v204
    %3625 = vmatprep.subr.mxu0 %v201
    %3626 = vmatpush2.msra.mxu0 %v200
    %3627 = vmatprep.subr.mxu0 %v197
    %3628 = vmatpush2.msra.mxu0 %v196
    %3629 = vmatprep.subr.mxu0 %v193
    %3630 = vmatpush2.msra.mxu0 %v192
    %3631 = vmatprep.subr.mxu0 %v189
    %3632 = vmatpush2.msra.mxu0 %v188
    %3633 = vmatprep.subr.mxu0 %v185
    %3634 = vmatpush2.msra.mxu0 %v184
    %3635 = vmatprep.subr.mxu0 %v181
    %3636 = vmatpush2.msra.mxu0 %v180
    %3637 = vmatprep.subr.mxu0 %v177
    %3638 = vmatpush2.msra.mxu0 %v176
    %3639 = vmatprep.subr.mxu0 %v173
    %3640 = vmatpush2.msra.mxu0 %v172
    %3641 = vmatprep.subr.mxu0 %v169
    %3642 = vmatpush2.msra.mxu0 %v168
    %3643 = vmatprep.subr.mxu0 %v165
    %3644 = vmatpush2.msra.mxu0 %v164
    %3645 = vmatprep.subr.mxu0 %v161
    %3646 = vmatpush2.msra.mxu0 %v160
    %3647 = vmatprep.subr.mxu0 %v157
    %3648 = vmatpush2.msra.mxu0 %v156
    %3649 = vmatprep.subr.mxu0 %v153
    %3650 = vmatpush2.msra.mxu0 %v152
    %3651 = vmatprep.mubr.f32.mxu0 %v3305
    %3652 = vmatmul.mubr.f32.gmra.mxu0 %v3586
    %v3653 = vpop.f32.mrf.mxu0
    %v3654 = vadd.f32 %v435, %v3653
    %v3655 = vpop.f32.mrf.mxu0
    %v3656 = vadd.f32 %v439, %v3655
    %3657 = vdwg.mxu0
    %3658 = vmatprep.subr.mxu0 %v151
    %3659 = vmatpush1.msra.mxu0 %v150
    %3660 = vmatprep.subr.mxu0 %v147
    %3661 = vmatpush1.msra.mxu0 %v146
    %3662 = vmatprep.subr.mxu0 %v143
    %3663 = vmatpush1.msra.mxu0 %v142
    %3664 = vmatprep.subr.mxu0 %v139
    %3665 = vmatpush1.msra.mxu0 %v138
    %3666 = vmatprep.subr.mxu0 %v135
    %3667 = vmatpush1.msra.mxu0 %v134
    %3668 = vmatprep.subr.mxu0 %v131
    %3669 = vmatpush1.msra.mxu0 %v130
    %3670 = vmatprep.subr.mxu0 %v127
    %3671 = vmatpush1.msra.mxu0 %v126
    %3672 = vmatprep.subr.mxu0 %v123
    %3673 = vmatpush1.msra.mxu0 %v122
    %3674 = vmatprep.subr.mxu0 %v119
    %3675 = vmatpush1.msra.mxu0 %v118
    %3676 = vmatprep.subr.mxu0 %v115
    %3677 = vmatpush1.msra.mxu0 %v114
    %3678 = vmatprep.subr.mxu0 %v111
    %3679 = vmatpush1.msra.mxu0 %v110
    %3680 = vmatprep.subr.mxu0 %v107
    %3681 = vmatpush1.msra.mxu0 %v106
    %3682 = vmatprep.subr.mxu0 %v103
    %3683 = vmatpush1.msra.mxu0 %v102
    %3684 = vmatprep.subr.mxu0 %v99
    %3685 = vmatpush1.msra.mxu0 %v98
    %3686 = vmatprep.subr.mxu0 %v95
    %3687 = vmatpush1.msra.mxu0 %v94
    %3688 = vmatprep.subr.mxu0 %v91
    %3689 = vmatpush1.msra.mxu0 %v90
    %3690 = vmatprep.subr.mxu0 %v215
    %3691 = vmatpush2.msra.mxu0 %v214
    %3692 = vmatprep.subr.mxu0 %v211
    %3693 = vmatpush2.msra.mxu0 %v210
    %3694 = vmatprep.subr.mxu0 %v207
    %3695 = vmatpush2.msra.mxu0 %v206
    %3696 = vmatprep.subr.mxu0 %v203
    %3697 = vmatpush2.msra.mxu0 %v202
    %3698 = vmatprep.subr.mxu0 %v199
    %3699 = vmatpush2.msra.mxu0 %v198
    %3700 = vmatprep.subr.mxu0 %v195
    %3701 = vmatpush2.msra.mxu0 %v194
    %3702 = vmatprep.subr.mxu0 %v191
    %3703 = vmatpush2.msra.mxu0 %v190
    %3704 = vmatprep.subr.mxu0 %v187
    %3705 = vmatpush2.msra.mxu0 %v186
    %3706 = vmatprep.subr.mxu0 %v183
    %3707 = vmatpush2.msra.mxu0 %v182
    %3708 = vmatprep.subr.mxu0 %v179
    %3709 = vmatpush2.msra.mxu0 %v178
    %3710 = vmatprep.subr.mxu0 %v175
    %3711 = vmatpush2.msra.mxu0 %v174
    %3712 = vmatprep.subr.mxu0 %v171
    %3713 = vmatpush2.msra.mxu0 %v170
    %3714 = vmatprep.subr.mxu0 %v167
    %3715 = vmatpush2.msra.mxu0 %v166
    %3716 = vmatprep.subr.mxu0 %v163
    %3717 = vmatpush2.msra.mxu0 %v162
    %3718 = vmatprep.subr.mxu0 %v159
    %3719 = vmatpush2.msra.mxu0 %v158
    %3720 = vmatprep.subr.mxu0 %v155
    %3721 = vmatpush2.msra.mxu0 %v154
    %3722 = vmatprep.mubr.f32.mxu0 %v3305
    %3723 = vmatmul.mubr.f32.gmra.mxu0 %v3586
    %v3724 = vpop.f32.mrf.mxu0
    %v3725 = vadd.f32 %v443, %v3724
    %v3726 = vpop.f32.mrf.mxu0
    %v3727 = vadd.f32 %v447, %v3726
    %3728 = vdwg.mxu0
    %v3729 = vxor.u32 %v3654, 2147483648
    %v3730 = vmul.f32 %v3729, 1.442695
    %v3731 = vpow.pop %v3730
    %v3732 = vadd.f32 %v3731, 1.0
    %v3733 = vrcp.pop %v3732
    %v3734 = vmul.f32 1.0, %v3733
    %v3735 = vxor.u32 %v3656, 2147483648
    %v3736 = vmul.f32 %v3735, 1.442695
    %v3737 = vpow.pop %v3736
    %v3738 = vadd.f32 %v3737, 1.0
    %v3739 = vrcp.pop %v3738
    %v3740 = vmul.f32 1.0, %v3739
    %v3741 = vtanh.pop %v3725
    %v3742 = vxor.u32 %v3727, 2147483648
    %v3743 = vmul.f32 %v3742, 1.442695
    %v3744 = vpow.pop %v3743
    %v3745 = vadd.f32 %v3744, 1.0
    %v3746 = vrcp.pop %v3745
    %v3747 = vmul.f32 1.0, %v3746
    %v3748 = vmul.f32 %v3740, %v3303
    %v3749 = vmul.f32 %v3734, %v3741
    %v3750 = vadd.f32 %v3748, %v3749
    %v3751 = vtanh.pop %v3750
    %v3752 = vmul.f32 %v3747, %v3751
    %3753 = vmatprep.subr.mxu0 0.0
    %3754 = vmatpush1.msra.mxu0 %v232
    %3755 = vmatprep.subr.mxu0 0.0
    %3756 = vmatpush1.msra.mxu0 %v231
    %3757 = vmatprep.subr.mxu0 0.0
    %3758 = vmatpush1.msra.mxu0 %v230
    %3759 = vmatprep.subr.mxu0 0.0
    %3760 = vmatpush1.msra.mxu0 %v229
    %3761 = vmatprep.subr.mxu0 0.0
    %3762 = vmatpush1.msra.mxu0 %v228
    %3763 = vmatprep.subr.mxu0 0.0
    %3764 = vmatpush1.msra.mxu0 %v227
    %3765 = vmatprep.subr.mxu0 0.0
    %3766 = vmatpush1.msra.mxu0 %v226
    %3767 = vmatprep.subr.mxu0 0.0
    %3768 = vmatpush1.msra.mxu0 %v225
    %3769 = vmatprep.subr.mxu0 0.0
    %3770 = vmatpush1.msra.mxu0 %v224
    %3771 = vmatprep.subr.mxu0 0.0
    %3772 = vmatpush1.msra.mxu0 %v223
    %3773 = vmatprep.subr.mxu0 0.0
    %3774 = vmatpush1.msra.mxu0 %v222
    %3775 = vmatprep.subr.mxu0 0.0
    %3776 = vmatpush1.msra.mxu0 %v221
    %3777 = vmatprep.subr.mxu0 0.0
    %3778 = vmatpush1.msra.mxu0 %v220
    %3779 = vmatprep.subr.mxu0 0.0
    %3780 = vmatpush1.msra.mxu0 %v219
    %3781 = vmatprep.subr.mxu0 0.0
    %3782 = vmatpush1.msra.mxu0 %v218
    %3783 = vmatprep.subr.mxu0 0.0
    %3784 = vmatpush1.msra.mxu0 %v217
    %3785 = vmatprep.subr.mxu0 0.0
    %3786 = vmatpush2.msra.mxu0 0.0
    %3787 = vmatprep.subr.mxu0 0.0
    %3788 = vmatpush2.msra.mxu0 0.0
    %3789 = vmatprep.subr.mxu0 0.0
    %3790 = vmatpush2.msra.mxu0 0.0
    %3791 = vmatprep.subr.mxu0 0.0
    %3792 = vmatpush2.msra.mxu0 0.0
    %3793 = vmatprep.subr.mxu0 0.0
    %3794 = vmatpush2.msra.mxu0 0.0
    %3795 = vmatprep.subr.mxu0 0.0
    %3796 = vmatpush2.msra.mxu0 0.0
    %3797 = vmatprep.subr.mxu0 0.0
    %3798 = vmatpush2.msra.mxu0 0.0
    %3799 = vmatprep.subr.mxu0 0.0
    %3800 = vmatpush2.msra.mxu0 0.0
    %3801 = vmatprep.subr.mxu0 0.0
    %3802 = vmatpush2.msra.mxu0 0.0
    %3803 = vmatprep.subr.mxu0 0.0
    %3804 = vmatpush2.msra.mxu0 0.0
    %3805 = vmatprep.subr.mxu0 0.0
    %3806 = vmatpush2.msra.mxu0 0.0
    %3807 = vmatprep.subr.mxu0 0.0
    %3808 = vmatpush2.msra.mxu0 0.0
    %3809 = vmatprep.subr.mxu0 0.0
    %3810 = vmatpush2.msra.mxu0 0.0
    %3811 = vmatprep.subr.mxu0 0.0
    %3812 = vmatpush2.msra.mxu0 0.0
    %3813 = vmatprep.subr.mxu0 0.0
    %3814 = vmatpush2.msra.mxu0 0.0
    %3815 = vmatprep.subr.mxu0 0.0
    %3816 = vmatpush2.msra.mxu0 0.0
    %3817 = vmatprep.mubr.f32.mxu0 0.0
    %3818 = vmatmul.mubr.f32.gmra.mxu0 %v3752
    %v3819 = vpop.f32.mrf.mxu0
    %v3820 = vadd.f32 %v622, %v3819
    %v3821 = vpop.f32.mrf.mxu0
    %3822 = vdwg.mxu0
    %v3823 = vsel %vm694, %v3820, -inf
    %3824 = vmax.xlane.f32.xlu0 %v3823
    %v3825 = vpop.xlane.xlu0 %3824
    %v3826 = vsub.f32 %v3820, %v3825
    %v3827 = vmul.f32 %v3826, 1.442695
    %v3828 = vpow.pop %v3827
    %v3829 = vsel %vm694, %v3828, 0.0
    %3830 = vadd.xlane.f32.xlu0 %v3829
    %v3831 = vpop.xlane.xlu0 %3830
    %v3832 = vrcp.pop %v3831
    %v3833 = vmul.f32 %v3828, %v3832
    %s3834 = scalar_lea.vmem [#allocation2], 14
    %3835 = vst [vmem:[%s3834] sm:$0x3] %v3833
    // Predicated region
    $region26: #{rnn_forward.1} parent=1 // pred_check
      _
    $region27: #{rnn_forward.1} parent=1 // pred_check_branch
      %3837 = sbr.rel (0) target = $region29
    $region28: #{rnn_forward.1} parent=1 // pred_region
      %s3839 = ssub.s32 256, 256
      %3840 = vsyncadd [#allocation3], %s3839
      %s3841 = sshll.u32 [#allocation2], 4
      %s3842 = int_to_ptr.vmem [resolvable:$true] %s3841
      %3847 = dma.vmem_to_hbm [thread:$0]  %s3842, 256, %s6, [#allocation3], 32, 32, 2
    $region29: #{rnn_forward.1} parent=1 // pred_fallthru
      _
    // Predicated region
    $region30: #{rnn_forward.1} parent=1 // pred_check
      _
    $region31: #{rnn_forward.1} parent=1 // pred_check_branch
      %3849 = sbr.rel (0) target = $region33
    $region32: #{rnn_forward.1} parent=1 // pred_region
      %3850 = dma.done [#allocation3], 256
    $region33: #{rnn_forward.1} parent=1 // pred_fallthru
      _
    %3851 = vsyncpa [#allocation3], 1

</llo_original>
